<compile_context>
chip_gen: v5e
topology: v5e:2x2
jax: 0.10.0
libtpu: 0.0.40
codegen_flags: <defaults>
</compile_context>

<pallas_src>
import functools

import numpy as np

import jax
import jax.numpy as jnp
from jax import lax
from jax.experimental import pallas as pl
from jax.experimental.pallas import tpu as pltpu


# -----------------------------------------------------------------------------
# Fused forward kernel (one grid step == Bt images, rows stacked along M)
# -----------------------------------------------------------------------------
def _fused_forward_kernel(x_ref,
                          w1_ref, b1_ref, sr1_ref, sc1_ref,
                          w2_ref, b2_ref, sr2_ref, sc2_ref,
                          w3_ref, b3_ref, sr3_ref,
                          wfc_ref, bfc_ref,
                          o_ref, *, channels):
    c1, c2, c3 = channels

    def conv3x3_relu(act, w_ref, b_ref):
        """act: (M, w_in*cin) f32, batch-stacked rows.
        w_ref: (3, w_in*cin, w_out*cout) bf16 dj-folded row-tap weights.
        Returns relu(conv + b): (M-2, w_out*cout) f32.  Rows that straddle an
        image boundary are garbage and are dropped later by the sr matmul."""
        m_out = act.shape[0] - 2
        a16 = act.astype(jnp.bfloat16)                       # one cast per layer (hoisted)
        acc = jnp.dot(a16[0:m_out, :], w_ref[0],
                      preferred_element_type=jnp.float32)     # init with first tap
        acc = acc + jnp.dot(a16[1:1 + m_out, :], w_ref[1],
                            preferred_element_type=jnp.float32)
        acc = acc + jnp.dot(a16[2:2 + m_out, :], w_ref[2],
                            preferred_element_type=jnp.float32)
        return jnp.maximum(acc + b_ref[...], 0.0)

    def maxpool2x2(act, c, sr_ref, sc_ref):
        """2x2/2 max-pool (floor semantics) of a batch-stacked (rows, w_out*c) map.
        sr (bf16, 0/1) keeps the valid even rows of every image (and drops the
        cross-image garbage rows); sc (bf16, 0/1) keeps even column pairs."""
        rmax = jnp.maximum(act[:-1, :], act[1:, :])           # vertical pairs
        m = jnp.maximum(rmax[:, :-c], rmax[:, c:])            # horizontal pairs
        m = jnp.dot(sr_ref[...], m.astype(jnp.bfloat16),
                    preferred_element_type=jnp.float32)
        m = jnp.dot(m.astype(jnp.bfloat16), sc_ref[...],
                    preferred_element_type=jnp.float32)
        return m

    def maxpool_final(act, c, sr_ref):
        """Final pool where the per-image spatial output is 1x1: -> (Bt, c)."""
        rmax = jnp.maximum(act[:-1, :], act[1:, :])
        m = jnp.maximum(rmax[:, 0:c], rmax[:, c:2 * c])
        return jnp.dot(sr_ref[...], m.astype(jnp.bfloat16),
                       preferred_element_type=jnp.float32)

    x = x_ref[...]                                            # (Bt*H, W*c_in) f32

    a1 = conv3x3_relu(x, w1_ref, b1_ref)                      # (Bt*H-2, (W-2)*c1)
    p1 = maxpool2x2(a1, c1, sr1_ref, sc1_ref)                 # (Bt*13, 13*c1)
    a2 = conv3x3_relu(p1, w2_ref, b2_ref)                     # (Bt*13-2, 11*c2)
    p2 = maxpool2x2(a2, c2, sr2_ref, sc2_ref)                 # (Bt*5, 5*c2)
    a3 = conv3x3_relu(p2, w3_ref, b3_ref)                     # (Bt*5-2, 3*c3)
    p3 = maxpool_final(a3, c3, sr3_ref)                       # (Bt, c3) == flatten

    # dropout: identity (eval mode); fc1
    logits = jnp.dot(p3.astype(jnp.bfloat16), wfc_ref[...],
                     preferred_element_type=jnp.float32) + bfc_ref[...]
    o_ref[...] = logits.astype(o_ref.dtype)                   # (Bt, f1) dense store


# -----------------------------------------------------------------------------
# Host-side, one-time weight packing (transposes / im2col / dj-folding hoisted)
# -----------------------------------------------------------------------------
def init_params(key, c1, c2, c3, f1, c_in=1, dtype=jnp.float32):
    ks = jax.random.split(key, 8)
    return {
        "conv1_w": jax.random.normal(ks[0], (c1, c_in, 3, 3), dtype) * 0.1,
        "conv1_b": jax.random.normal(ks[1], (c1,), dtype) * 0.1,
        "conv2_w": jax.random.normal(ks[2], (c2, c1, 3, 3), dtype) * 0.1,
        "conv2_b": jax.random.normal(ks[3], (c2,), dtype) * 0.1,
        "conv3_w": jax.random.normal(ks[4], (c3, c2, 3, 3), dtype) * 0.1,
        "conv3_b": jax.random.normal(ks[5], (c3,), dtype) * 0.1,
        "fc1_w": jax.random.normal(ks[6], (f1, c3), dtype) * 0.1,   # PyTorch (out, in)
        "fc1_b": jax.random.normal(ks[7], (f1,), dtype) * 0.1,
    }


def pack_params(params, input_hw=(28, 28), block_batch=8):
    """Pack PyTorch-layout params into kernel-friendly matrices (once, host-side).
    `block_batch` (Bt) is baked into the pooling row-selection matrices."""
    H, W = input_hw
    Bt = int(block_batch)

    def folded_tap_weights(w_oihw, w_in):
        """OIHW (cout,cin,3,3) -> (3, w_in*cin, w_out*cout) bf16.
        One im2col-folded 'shifted-block' matrix per kernel ROW; the 3 column
        taps are pre-summed (their nonzeros never overlap => exact fold)."""
        cout, cin, kh, kw = w_oihw.shape
        w_out = w_in - (kw - 1)
        w_np = np.asarray(w_oihw, np.float32)
        taps = []
        for di in range(kh):
            mat = np.zeros((w_in * cin, w_out * cout), np.float32)
            for dj in range(kw):
                small = w_np[:, :, di, dj].T                      # (cin, cout)
                shift = np.zeros((w_in, w_out), np.float32)       # selects col j+dj -> j
                shift[np.arange(w_out) + dj, np.arange(w_out)] = 1.0
                mat += np.kron(shift, small)
            taps.append(mat)
        return jnp.asarray(np.stack(taps, 0), jnp.bfloat16)

    def row_select(h_in, h_conv):
        """From the stacked vertical-pair max (Bt*h_in - 3 rows), keep the valid
        even conv rows of every image: row b*h_in + 2p -> output b*hp + p.
        This also drops the cross-image boundary garbage rows."""
        hp = h_conv // 2
        s = np.zeros((Bt * hp, Bt * h_in - 3), np.float32)
        for b in range(Bt):
            for p in range(hp):
                s[b * hp + p, b * h_in + 2 * p] = 1.0
        return jnp.asarray(s, jnp.bfloat16)

    def col_select(w_conv, c):
        wp = w_conv // 2
        s = np.zeros(((w_conv - 1) * c, wp * c), np.float32)
        for q in range(wp):
            s[2 * q * c + np.arange(c), q * c + np.arange(c)] = 1.0
        return jnp.asarray(s, jnp.bfloat16)

    conv_ws = [params["conv1_w"], params["conv2_w"], params["conv3_w"]]
    conv_bs = [params["conv1_b"], params["conv2_b"], params["conv3_b"]]

    packed = {}
    h, w = H, W
    for idx, (wgt, b) in enumerate(zip(conv_ws, conv_bs), start=1):
        cout = wgt.shape[0]
        h_out, w_out = h - 2, w - 2
        packed[f"w{idx}"] = folded_tap_weights(wgt, w)
        packed[f"b{idx}"] = jnp.asarray(
            np.tile(np.asarray(b, np.float32), w_out)[None, :])
        packed[f"sr{idx}"] = row_select(h, h_out)
        if idx < 3:
            packed[f"sc{idx}"] = col_select(w_out, cout)
        h, w = h_out // 2, w_out // 2
    assert h == 1 and w == 1, "model requires 1x1 spatial after the third pool (use 28x28 input)"

    packed["fc_w"] = jnp.asarray(np.asarray(params["fc1_w"], np.float32).T,
                                 jnp.bfloat16)                   # (c3, f1)
    packed["fc_b"] = jnp.asarray(np.asarray(params["fc1_b"], np.float32)[None, :])
    return packed


# -----------------------------------------------------------------------------
# Forward wrapper (single fused pallas_call, grid over batch blocks of Bt images)
# -----------------------------------------------------------------------------
def _const_index_map(ndim):
    return lambda b: (0,) * ndim


def my_awesome_model_forward(packed, x_nchw):
    """Matches MyAwesomeModel.forward (eval mode). x: NCHW float32."""
    n, c_in, H, W = x_nchw.shape
    Bt = packed["sr3"].shape[0]                       # batch tile baked into sr matrices
    c1 = packed["b1"].shape[1] // (W - 2)
    c2 = packed["b2"].shape[1] // ((W - 2) // 2 - 2)
    c3 = packed["fc_w"].shape[0]
    f1 = packed["fc_w"].shape[1]

    n_pad = pl.cdiv(n, Bt) * Bt                       # pad batch to a multiple of Bt
    # NCHW -> (N, H, W*C) channel-minor, then stack all rows: (N*H, W*C).
    x_hwc = jnp.transpose(x_nchw, (0, 2, 3, 1)).reshape(n, H, W * c_in)
    if n_pad != n:
        x_hwc = jnp.pad(x_hwc, ((0, n_pad - n), (0, 0), (0, 0)))
    x_stacked = x_hwc.reshape(n_pad * H, W * c_in)

    weight_args = (
        packed["w1"], packed["b1"], packed["sr1"], packed["sc1"],
        packed["w2"], packed["b2"], packed["sr2"], packed["sc2"],
        packed["w3"], packed["b3"], packed["sr3"],
        packed["fc_w"], packed["fc_b"],
    )
    in_specs = [pl.BlockSpec((Bt * H, W * c_in), lambda b: (b, 0))]
    for a in weight_args:
        # Full-array, grid-invariant blocks: DMA'd into VMEM once and kept resident.
        in_specs.append(pl.BlockSpec(a.shape, _const_index_map(a.ndim)))

    out = pl.pallas_call(
        functools.partial(_fused_forward_kernel, channels=(c1, c2, c3)),
        grid=(n_pad // Bt,),
        out_shape=jax.ShapeDtypeStruct((n_pad, f1), jnp.float32),
        in_specs=in_specs,
        out_specs=pl.BlockSpec((Bt, f1), lambda b: (b, 0)),
        compiler_params=pltpu.CompilerParams(
            dimension_semantics=("parallel",)),
    )(x_stacked, *weight_args)
    return out[:n]


# -----------------------------------------------------------------------------
# Pure-JAX reference (no Pallas) for a correctness check.
# -----------------------------------------------------------------------------
def _reference_forward(params, x_nchw):
    def conv(x, w, b):
        y = lax.conv_general_dilated(
            x, w, window_strides=(1, 1), padding="VALID",
            dimension_numbers=("NCHW", "OIHW", "NCHW"))
        return jax.nn.relu(y + b[None, :, None, None])

    def pool(x):
        return lax.reduce_window(
            x, -jnp.inf, lax.max, (1, 1, 2, 2), (1, 1, 2, 2), "VALID")

    x = conv(x_nchw, params["conv1_w"], params["conv1_b"]); x = pool(x)
    x = conv(x, params["conv2_w"], params["conv2_b"]); x = pool(x)
    x = conv(x, params["conv3_w"], params["conv3_b"]); x = pool(x)
    x = x.reshape(x.shape[0], -1)
    return x @ params["fc1_w"].T + params["fc1_b"]


if __name__ == "__main__":
    key = jax.random.PRNGKey(0)
    k_param, k_x = jax.random.split(key)

    # MNIST-consistent shapes (28x28 so the third pool leaves 1x1 for fc1).
    C1, C2, C3, F1, C_IN = 8, 16, 32, 10, 1
    N, H, W = 16, 28, 28
    BT = 8   # batch tile: N/BT = 2 even grid steps -> both v7x TensorCores busy

    params = init_params(k_param, C1, C2, C3, F1, C_IN)
    packed = pack_params(params, (H, W), block_batch=BT)
    x = jax.random.normal(k_x, (N, C_IN, H, W), jnp.float32)

    fwd = jax.jit(my_awesome_model_forward)
    out = jax.block_until_ready(fwd(packed, x))
    assert out.shape == (N, F1), out.shape

    ref = jax.block_until_ready(_reference_forward(params, x))
    max_err = float(jnp.max(jnp.abs(out - ref)))
    # bf16 matmul operands (f32 accumulation) vs f32 reference -> small numeric delta.
    assert jnp.allclose(out, ref, atol=3e-2, rtol=3e-2), max_err

    print("KERNEL_OK")
</pallas_src>

<mosaic_0001>
module attributes {stable_mosaic.version = 11 : i64} {
  func.func @_fused_forward_kernel(%arg0: i32, %arg1: memref<224x28xf32, #tpu.memory_space<vmem>>, %arg2: memref<3x28x208xbf16, #tpu.memory_space<vmem>>, %arg3: memref<1x208xf32, #tpu.memory_space<vmem>>, %arg4: memref<104x221xbf16, #tpu.memory_space<vmem>>, %arg5: memref<200x104xbf16, #tpu.memory_space<vmem>>, %arg6: memref<3x104x176xbf16, #tpu.memory_space<vmem>>, %arg7: memref<1x176xf32, #tpu.memory_space<vmem>>, %arg8: memref<40x101xbf16, #tpu.memory_space<vmem>>, %arg9: memref<160x80xbf16, #tpu.memory_space<vmem>>, %arg10: memref<3x80x96xbf16, #tpu.memory_space<vmem>>, %arg11: memref<1x96xf32, #tpu.memory_space<vmem>>, %arg12: memref<8x37xbf16, #tpu.memory_space<vmem>>, %arg13: memref<32x10xbf16, #tpu.memory_space<vmem>>, %arg14: memref<1x10xf32, #tpu.memory_space<vmem>>, %arg15: memref<8x10xf32, #tpu.memory_space<vmem>>) attributes {dimension_semantics = [#tpu.dimension_semantics<parallel>], iteration_bounds = array<i64: 2>, scalar_prefetch = 0 : i64, scratch_operands = 0 : i64, tpu.core_type = #tpu.core_type<tc>, window_params = [{transform_indices = @transform_0, window_bounds = array<i64: 224, 28>}, {pipeline_mode = #tpu.pipeline_mode<synchronous>, transform_indices = @transform_1, window_bounds = array<i64: 3, 28, 208>}, {pipeline_mode = #tpu.pipeline_mode<synchronous>, transform_indices = @transform_2, window_bounds = array<i64: 1, 208>}, {pipeline_mode = #tpu.pipeline_mode<synchronous>, transform_indices = @transform_3, window_bounds = array<i64: 104, 221>}, {pipeline_mode = #tpu.pipeline_mode<synchronous>, transform_indices = @transform_4, window_bounds = array<i64: 200, 104>}, {pipeline_mode = #tpu.pipeline_mode<synchronous>, transform_indices = @transform_5, window_bounds = array<i64: 3, 104, 176>}, {pipeline_mode = #tpu.pipeline_mode<synchronous>, transform_indices = @transform_6, window_bounds = array<i64: 1, 176>}, {pipeline_mode = #tpu.pipeline_mode<synchronous>, transform_indices = @transform_7, window_bounds = array<i64: 40, 101>}, {pipeline_mode = #tpu.pipeline_mode<synchronous>, transform_indices = @transform_8, window_bounds = array<i64: 160, 80>}, {pipeline_mode = #tpu.pipeline_mode<synchronous>, transform_indices = @transform_9, window_bounds = array<i64: 3, 80, 96>}, {pipeline_mode = #tpu.pipeline_mode<synchronous>, transform_indices = @transform_10, window_bounds = array<i64: 1, 96>}, {pipeline_mode = #tpu.pipeline_mode<synchronous>, transform_indices = @transform_11, window_bounds = array<i64: 8, 37>}, {pipeline_mode = #tpu.pipeline_mode<synchronous>, transform_indices = @transform_12, window_bounds = array<i64: 32, 10>}, {pipeline_mode = #tpu.pipeline_mode<synchronous>, transform_indices = @transform_13, window_bounds = array<i64: 1, 10>}, {transform_indices = @transform_14, window_bounds = array<i64: 8, 10>}]} {
    %c0 = arith.constant 0 : index
    %c0_0 = arith.constant 0 : index
    %0 = vector.load %arg1[%c0, %c0_0] : memref<224x28xf32, #tpu.memory_space<vmem>>, vector<224x28xf32>
    %1 = arith.truncf %0 : vector<224x28xf32> to vector<224x28xbf16>
    %2 = vector.extract_strided_slice %1 {offsets = [0, 0], sizes = [222, 28], strides = [1, 1]} : vector<224x28xbf16> to vector<222x28xbf16>
    %c0_1 = arith.constant 0 : index
    %c0_2 = arith.constant 0 : index
    %c0_3 = arith.constant 0 : index
    %3 = vector.load %arg2[%c0_1, %c0_2, %c0_3] : memref<3x28x208xbf16, #tpu.memory_space<vmem>>, vector<1x28x208xbf16>
    %4 = vector.shape_cast %3 : vector<1x28x208xbf16> to vector<28x208xbf16>
    %cst = arith.constant dense<0.000000e+00> : vector<222x208xf32>
    %5 = tpu.matmul %2, %4, %cst {dimension_numbers = #tpu.dot_dimension_numbers<[1], [0], [0], [1], [0, 0, 1, 1], [], []>} : vector<222x28xbf16>, vector<28x208xbf16>, vector<222x208xf32> -> vector<222x208xf32>
    %6 = vector.extract_strided_slice %1 {offsets = [1, 0], sizes = [222, 28], strides = [1, 1]} : vector<224x28xbf16> to vector<222x28xbf16>
    %c1 = arith.constant 1 : index
    %c0_4 = arith.constant 0 : index
    %c0_5 = arith.constant 0 : index
    %7 = vector.load %arg2[%c1, %c0_4, %c0_5] : memref<3x28x208xbf16, #tpu.memory_space<vmem>>, vector<1x28x208xbf16>
    %8 = vector.shape_cast %7 : vector<1x28x208xbf16> to vector<28x208xbf16>
    %cst_6 = arith.constant dense<0.000000e+00> : vector<222x208xf32>
    %9 = tpu.matmul %6, %8, %cst_6 {dimension_numbers = #tpu.dot_dimension_numbers<[1], [0], [0], [1], [0, 0, 1, 1], [], []>} : vector<222x28xbf16>, vector<28x208xbf16>, vector<222x208xf32> -> vector<222x208xf32>
    %10 = arith.addf %5, %9 : vector<222x208xf32>
    %11 = vector.extract_strided_slice %1 {offsets = [2, 0], sizes = [222, 28], strides = [1, 1]} : vector<224x28xbf16> to vector<222x28xbf16>
    %c2 = arith.constant 2 : index
    %c0_7 = arith.constant 0 : index
    %c0_8 = arith.constant 0 : index
    %12 = vector.load %arg2[%c2, %c0_7, %c0_8] : memref<3x28x208xbf16, #tpu.memory_space<vmem>>, vector<1x28x208xbf16>
    %13 = vector.shape_cast %12 : vector<1x28x208xbf16> to vector<28x208xbf16>
    %cst_9 = arith.constant dense<0.000000e+00> : vector<222x208xf32>
    %14 = tpu.matmul %11, %13, %cst_9 {dimension_numbers = #tpu.dot_dimension_numbers<[1], [0], [0], [1], [0, 0, 1, 1], [], []>} : vector<222x28xbf16>, vector<28x208xbf16>, vector<222x208xf32> -> vector<222x208xf32>
    %15 = arith.addf %10, %14 : vector<222x208xf32>
    %c0_10 = arith.constant 0 : index
    %c0_11 = arith.constant 0 : index
    %16 = vector.load %arg3[%c0_10, %c0_11] : memref<1x208xf32, #tpu.memory_space<vmem>>, vector<1x208xf32>
    %17 = vector.broadcast %16 : vector<1x208xf32> to vector<222x208xf32>
    %18 = arith.addf %15, %17 : vector<222x208xf32>
    %cst_12 = arith.constant 0.000000e+00 : f32
    %19 = vector.broadcast %cst_12 : f32 to vector<222x208xf32>
    %20 = arith.maximumf %18, %19 : vector<222x208xf32>
    %21 = vector.extract_strided_slice %20 {offsets = [0, 0], sizes = [221, 208], strides = [1, 1]} : vector<222x208xf32> to vector<221x208xf32>
    %22 = vector.extract_strided_slice %20 {offsets = [1, 0], sizes = [221, 208], strides = [1, 1]} : vector<222x208xf32> to vector<221x208xf32>
    %23 = arith.maximumf %21, %22 : vector<221x208xf32>
    %24 = vector.extract_strided_slice %23 {offsets = [0, 0], sizes = [221, 200], strides = [1, 1]} : vector<221x208xf32> to vector<221x200xf32>
    %25 = vector.extract_strided_slice %23 {offsets = [0, 8], sizes = [221, 200], strides = [1, 1]} : vector<221x208xf32> to vector<221x200xf32>
    %26 = arith.maximumf %24, %25 : vector<221x200xf32>
    %c0_13 = arith.constant 0 : index
    %c0_14 = arith.constant 0 : index
    %27 = vector.load %arg4[%c0_13, %c0_14] : memref<104x221xbf16, #tpu.memory_space<vmem>>, vector<104x221xbf16>
    %28 = arith.truncf %26 : vector<221x200xf32> to vector<221x200xbf16>
    %cst_15 = arith.constant dense<0.000000e+00> : vector<104x200xf32>
    %29 = tpu.matmul %27, %28, %cst_15 {dimension_numbers = #tpu.dot_dimension_numbers<[1], [0], [0], [1], [0, 0, 1, 1], [], []>} : vector<104x221xbf16>, vector<221x200xbf16>, vector<104x200xf32> -> vector<104x200xf32>
    %30 = arith.truncf %29 : vector<104x200xf32> to vector<104x200xbf16>
    %c0_16 = arith.constant 0 : index
    %c0_17 = arith.constant 0 : index
    %31 = vector.load %arg5[%c0_16, %c0_17] : memref<200x104xbf16, #tpu.memory_space<vmem>>, vector<200x104xbf16>
    %cst_18 = arith.constant dense<0.000000e+00> : vector<104x104xf32>
    %32 = tpu.matmul %30, %31, %cst_18 {dimension_numbers = #tpu.dot_dimension_numbers<[1], [0], [0], [1], [0, 0, 1, 1], [], []>} : vector<104x200xbf16>, vector<200x104xbf16>, vector<104x104xf32> -> vector<104x104xf32>
    %33 = arith.truncf %32 : vector<104x104xf32> to vector<104x104xbf16>
    %34 = vector.extract_strided_slice %33 {offsets = [0, 0], sizes = [102, 104], strides = [1, 1]} : vector<104x104xbf16> to vector<102x104xbf16>
    %c0_19 = arith.constant 0 : index
    %c0_20 = arith.constant 0 : index
    %c0_21 = arith.constant 0 : index
    %35 = vector.load %arg6[%c0_19, %c0_20, %c0_21] : memref<3x104x176xbf16, #tpu.memory_space<vmem>>, vector<1x104x176xbf16>
    %36 = vector.shape_cast %35 : vector<1x104x176xbf16> to vector<104x176xbf16>
    %cst_22 = arith.constant dense<0.000000e+00> : vector<102x176xf32>
    %37 = tpu.matmul %34, %36, %cst_22 {dimension_numbers = #tpu.dot_dimension_numbers<[1], [0], [0], [1], [0, 0, 1, 1], [], []>} : vector<102x104xbf16>, vector<104x176xbf16>, vector<102x176xf32> -> vector<102x176xf32>
    %38 = vector.extract_strided_slice %33 {offsets = [1, 0], sizes = [102, 104], strides = [1, 1]} : vector<104x104xbf16> to vector<102x104xbf16>
    %c1_23 = arith.constant 1 : index
    %c0_24 = arith.constant 0 : index
    %c0_25 = arith.constant 0 : index
    %39 = vector.load %arg6[%c1_23, %c0_24, %c0_25] : memref<3x104x176xbf16, #tpu.memory_space<vmem>>, vector<1x104x176xbf16>
    %40 = vector.shape_cast %39 : vector<1x104x176xbf16> to vector<104x176xbf16>
    %cst_26 = arith.constant dense<0.000000e+00> : vector<102x176xf32>
    %41 = tpu.matmul %38, %40, %cst_26 {dimension_numbers = #tpu.dot_dimension_numbers<[1], [0], [0], [1], [0, 0, 1, 1], [], []>} : vector<102x104xbf16>, vector<104x176xbf16>, vector<102x176xf32> -> vector<102x176xf32>
    %42 = arith.addf %37, %41 : vector<102x176xf32>
    %43 = vector.extract_strided_slice %33 {offsets = [2, 0], sizes = [102, 104], strides = [1, 1]} : vector<104x104xbf16> to vector<102x104xbf16>
    %c2_27 = arith.constant 2 : index
    %c0_28 = arith.constant 0 : index
    %c0_29 = arith.constant 0 : index
    %44 = vector.load %arg6[%c2_27, %c0_28, %c0_29] : memref<3x104x176xbf16, #tpu.memory_space<vmem>>, vector<1x104x176xbf16>
    %45 = vector.shape_cast %44 : vector<1x104x176xbf16> to vector<104x176xbf16>
    %cst_30 = arith.constant dense<0.000000e+00> : vector<102x176xf32>
    %46 = tpu.matmul %43, %45, %cst_30 {dimension_numbers = #tpu.dot_dimension_numbers<[1], [0], [0], [1], [0, 0, 1, 1], [], []>} : vector<102x104xbf16>, vector<104x176xbf16>, vector<102x176xf32> -> vector<102x176xf32>
    %47 = arith.addf %42, %46 : vector<102x176xf32>
    %c0_31 = arith.constant 0 : index
    %c0_32 = arith.constant 0 : index
    %48 = vector.load %arg7[%c0_31, %c0_32] : memref<1x176xf32, #tpu.memory_space<vmem>>, vector<1x176xf32>
    %49 = vector.broadcast %48 : vector<1x176xf32> to vector<102x176xf32>
    %50 = arith.addf %47, %49 : vector<102x176xf32>
    %cst_33 = arith.constant 0.000000e+00 : f32
    %51 = vector.broadcast %cst_33 : f32 to vector<102x176xf32>
    %52 = arith.maximumf %50, %51 : vector<102x176xf32>
    %53 = vector.extract_strided_slice %52 {offsets = [0, 0], sizes = [101, 176], strides = [1, 1]} : vector<102x176xf32> to vector<101x176xf32>
    %54 = vector.extract_strided_slice %52 {offsets = [1, 0], sizes = [101, 176], strides = [1, 1]} : vector<102x176xf32> to vector<101x176xf32>
    %55 = arith.maximumf %53, %54 : vector<101x176xf32>
    %56 = vector.extract_strided_slice %55 {offsets = [0, 0], sizes = [101, 160], strides = [1, 1]} : vector<101x176xf32> to vector<101x160xf32>
    %57 = vector.extract_strided_slice %55 {offsets = [0, 16], sizes = [101, 160], strides = [1, 1]} : vector<101x176xf32> to vector<101x160xf32>
    %58 = arith.maximumf %56, %57 : vector<101x160xf32>
    %c0_34 = arith.constant 0 : index
    %c0_35 = arith.constant 0 : index
    %59 = vector.load %arg8[%c0_34, %c0_35] : memref<40x101xbf16, #tpu.memory_space<vmem>>, vector<40x101xbf16>
    %60 = arith.truncf %58 : vector<101x160xf32> to vector<101x160xbf16>
    %cst_36 = arith.constant dense<0.000000e+00> : vector<40x160xf32>
    %61 = tpu.matmul %59, %60, %cst_36 {dimension_numbers = #tpu.dot_dimension_numbers<[1], [0], [0], [1], [0, 0, 1, 1], [], []>} : vector<40x101xbf16>, vector<101x160xbf16>, vector<40x160xf32> -> vector<40x160xf32>
    %62 = arith.truncf %61 : vector<40x160xf32> to vector<40x160xbf16>
    %c0_37 = arith.constant 0 : index
    %c0_38 = arith.constant 0 : index
    %63 = vector.load %arg9[%c0_37, %c0_38] : memref<160x80xbf16, #tpu.memory_space<vmem>>, vector<160x80xbf16>
    %cst_39 = arith.constant dense<0.000000e+00> : vector<40x80xf32>
    %64 = tpu.matmul %62, %63, %cst_39 {dimension_numbers = #tpu.dot_dimension_numbers<[1], [0], [0], [1], [0, 0, 1, 1], [], []>} : vector<40x160xbf16>, vector<160x80xbf16>, vector<40x80xf32> -> vector<40x80xf32>
    %65 = arith.truncf %64 : vector<40x80xf32> to vector<40x80xbf16>
    %66 = vector.extract_strided_slice %65 {offsets = [0, 0], sizes = [38, 80], strides = [1, 1]} : vector<40x80xbf16> to vector<38x80xbf16>
    %c0_40 = arith.constant 0 : index
    %c0_41 = arith.constant 0 : index
    %c0_42 = arith.constant 0 : index
    %67 = vector.load %arg10[%c0_40, %c0_41, %c0_42] : memref<3x80x96xbf16, #tpu.memory_space<vmem>>, vector<1x80x96xbf16>
    %68 = vector.shape_cast %67 : vector<1x80x96xbf16> to vector<80x96xbf16>
    %cst_43 = arith.constant dense<0.000000e+00> : vector<38x96xf32>
    %69 = tpu.matmul %66, %68, %cst_43 {dimension_numbers = #tpu.dot_dimension_numbers<[1], [0], [0], [1], [0, 0, 1, 1], [], []>} : vector<38x80xbf16>, vector<80x96xbf16>, vector<38x96xf32> -> vector<38x96xf32>
    %70 = vector.extract_strided_slice %65 {offsets = [1, 0], sizes = [38, 80], strides = [1, 1]} : vector<40x80xbf16> to vector<38x80xbf16>
    %c1_44 = arith.constant 1 : index
    %c0_45 = arith.constant 0 : index
    %c0_46 = arith.constant 0 : index
    %71 = vector.load %arg10[%c1_44, %c0_45, %c0_46] : memref<3x80x96xbf16, #tpu.memory_space<vmem>>, vector<1x80x96xbf16>
    %72 = vector.shape_cast %71 : vector<1x80x96xbf16> to vector<80x96xbf16>
    %cst_47 = arith.constant dense<0.000000e+00> : vector<38x96xf32>
    %73 = tpu.matmul %70, %72, %cst_47 {dimension_numbers = #tpu.dot_dimension_numbers<[1], [0], [0], [1], [0, 0, 1, 1], [], []>} : vector<38x80xbf16>, vector<80x96xbf16>, vector<38x96xf32> -> vector<38x96xf32>
    %74 = arith.addf %69, %73 : vector<38x96xf32>
    %75 = vector.extract_strided_slice %65 {offsets = [2, 0], sizes = [38, 80], strides = [1, 1]} : vector<40x80xbf16> to vector<38x80xbf16>
    %c2_48 = arith.constant 2 : index
    %c0_49 = arith.constant 0 : index
    %c0_50 = arith.constant 0 : index
    %76 = vector.load %arg10[%c2_48, %c0_49, %c0_50] : memref<3x80x96xbf16, #tpu.memory_space<vmem>>, vector<1x80x96xbf16>
    %77 = vector.shape_cast %76 : vector<1x80x96xbf16> to vector<80x96xbf16>
    %cst_51 = arith.constant dense<0.000000e+00> : vector<38x96xf32>
    %78 = tpu.matmul %75, %77, %cst_51 {dimension_numbers = #tpu.dot_dimension_numbers<[1], [0], [0], [1], [0, 0, 1, 1], [], []>} : vector<38x80xbf16>, vector<80x96xbf16>, vector<38x96xf32> -> vector<38x96xf32>
    %79 = arith.addf %74, %78 : vector<38x96xf32>
    %c0_52 = arith.constant 0 : index
    %c0_53 = arith.constant 0 : index
    %80 = vector.load %arg11[%c0_52, %c0_53] : memref<1x96xf32, #tpu.memory_space<vmem>>, vector<1x96xf32>
    %81 = vector.broadcast %80 : vector<1x96xf32> to vector<38x96xf32>
    %82 = arith.addf %79, %81 : vector<38x96xf32>
    %cst_54 = arith.constant 0.000000e+00 : f32
    %83 = vector.broadcast %cst_54 : f32 to vector<38x96xf32>
    %84 = arith.maximumf %82, %83 : vector<38x96xf32>
    %85 = vector.extract_strided_slice %84 {offsets = [0, 0], sizes = [37, 96], strides = [1, 1]} : vector<38x96xf32> to vector<37x96xf32>
    %86 = vector.extract_strided_slice %84 {offsets = [1, 0], sizes = [37, 96], strides = [1, 1]} : vector<38x96xf32> to vector<37x96xf32>
    %87 = arith.maximumf %85, %86 : vector<37x96xf32>
    %88 = vector.extract_strided_slice %87 {offsets = [0, 0], sizes = [37, 32], strides = [1, 1]} : vector<37x96xf32> to vector<37x32xf32>
    %89 = vector.extract_strided_slice %87 {offsets = [0, 32], sizes = [37, 32], strides = [1, 1]} : vector<37x96xf32> to vector<37x32xf32>
    %90 = arith.maximumf %88, %89 : vector<37x32xf32>
    %c0_55 = arith.constant 0 : index
    %c0_56 = arith.constant 0 : index
    %91 = vector.load %arg12[%c0_55, %c0_56] : memref<8x37xbf16, #tpu.memory_space<vmem>>, vector<8x37xbf16>
    %92 = arith.truncf %90 : vector<37x32xf32> to vector<37x32xbf16>
    %cst_57 = arith.constant dense<0.000000e+00> : vector<8x32xf32>
    %93 = tpu.matmul %91, %92, %cst_57 {dimension_numbers = #tpu.dot_dimension_numbers<[1], [0], [0], [1], [0, 0, 1, 1], [], []>} : vector<8x37xbf16>, vector<37x32xbf16>, vector<8x32xf32> -> vector<8x32xf32>
    %94 = arith.truncf %93 : vector<8x32xf32> to vector<8x32xbf16>
    %c0_58 = arith.constant 0 : index
    %c0_59 = arith.constant 0 : index
    %95 = vector.load %arg13[%c0_58, %c0_59] : memref<32x10xbf16, #tpu.memory_space<vmem>>, vector<32x10xbf16>
    %cst_60 = arith.constant dense<0.000000e+00> : vector<8x10xf32>
    %96 = tpu.matmul %94, %95, %cst_60 {dimension_numbers = #tpu.dot_dimension_numbers<[1], [0], [0], [1], [0, 0, 1, 1], [], []>} : vector<8x32xbf16>, vector<32x10xbf16>, vector<8x10xf32> -> vector<8x10xf32>
    %c0_61 = arith.constant 0 : index
    %c0_62 = arith.constant 0 : index
    %97 = vector.load %arg14[%c0_61, %c0_62] : memref<1x10xf32, #tpu.memory_space<vmem>>, vector<1x10xf32>
    %98 = vector.broadcast %97 : vector<1x10xf32> to vector<8x10xf32>
    %99 = arith.addf %96, %98 : vector<8x10xf32>
    %c0_63 = arith.constant 0 : index
    %c0_64 = arith.constant 0 : index
    %100 = vector.load %arg15[%c0_63, %c0_64] : memref<8x10xf32, #tpu.memory_space<vmem>>, vector<8x10xf32>
    tpu.vector_store %arg15[%c0_63, %c0_64], %99 {strides = array<i32>} : memref<8x10xf32, #tpu.memory_space<vmem>>, vector<8x10xf32>,
    return
  }
  func.func @transform_0(%arg0: i32) -> (i32, i32) {
    %c0_i32 = arith.constant 0 : i32
    %c0_i32_0 = arith.constant 0 : i32
    return %arg0, %c0_i32 : i32, i32
  }
  func.func @transform_1(%arg0: i32) -> (i32, i32, i32) {
    %c0_i32 = arith.constant 0 : i32
    %c0_i32_0 = arith.constant 0 : i32
    %c0_i32_1 = arith.constant 0 : i32
    %c0_i32_2 = arith.constant 0 : i32
    return %c0_i32, %c0_i32_0, %c0_i32_1 : i32, i32, i32
  }
  func.func @transform_2(%arg0: i32) -> (i32, i32) {
    %c0_i32 = arith.constant 0 : i32
    %c0_i32_0 = arith.constant 0 : i32
    %c0_i32_1 = arith.constant 0 : i32
    return %c0_i32, %c0_i32_0 : i32, i32
  }
  func.func @transform_3(%arg0: i32) -> (i32, i32) {
    %c0_i32 = arith.constant 0 : i32
    %c0_i32_0 = arith.constant 0 : i32
    %c0_i32_1 = arith.constant 0 : i32
    return %c0_i32, %c0_i32_0 : i32, i32
  }
  func.func @transform_4(%arg0: i32) -> (i32, i32) {
    %c0_i32 = arith.constant 0 : i32
    %c0_i32_0 = arith.constant 0 : i32
    %c0_i32_1 = arith.constant 0 : i32
    return %c0_i32, %c0_i32_0 : i32, i32
  }
  func.func @transform_5(%arg0: i32) -> (i32, i32, i32) {
    %c0_i32 = arith.constant 0 : i32
    %c0_i32_0 = arith.constant 0 : i32
    %c0_i32_1 = arith.constant 0 : i32
    %c0_i32_2 = arith.constant 0 : i32
    return %c0_i32, %c0_i32_0, %c0_i32_1 : i32, i32, i32
  }
  func.func @transform_6(%arg0: i32) -> (i32, i32) {
    %c0_i32 = arith.constant 0 : i32
    %c0_i32_0 = arith.constant 0 : i32
    %c0_i32_1 = arith.constant 0 : i32
    return %c0_i32, %c0_i32_0 : i32, i32
  }
  func.func @transform_7(%arg0: i32) -> (i32, i32) {
    %c0_i32 = arith.constant 0 : i32
    %c0_i32_0 = arith.constant 0 : i32
    %c0_i32_1 = arith.constant 0 : i32
    return %c0_i32, %c0_i32_0 : i32, i32
  }
  func.func @transform_8(%arg0: i32) -> (i32, i32) {
    %c0_i32 = arith.constant 0 : i32
    %c0_i32_0 = arith.constant 0 : i32
    %c0_i32_1 = arith.constant 0 : i32
    return %c0_i32, %c0_i32_0 : i32, i32
  }
  func.func @transform_9(%arg0: i32) -> (i32, i32, i32) {
    %c0_i32 = arith.constant 0 : i32
    %c0_i32_0 = arith.constant 0 : i32
    %c0_i32_1 = arith.constant 0 : i32
    %c0_i32_2 = arith.constant 0 : i32
    return %c0_i32, %c0_i32_0, %c0_i32_1 : i32, i32, i32
  }
  func.func @transform_10(%arg0: i32) -> (i32, i32) {
    %c0_i32 = arith.constant 0 : i32
    %c0_i32_0 = arith.constant 0 : i32
    %c0_i32_1 = arith.constant 0 : i32
    return %c0_i32, %c0_i32_0 : i32, i32
  }
  func.func @transform_11(%arg0: i32) -> (i32, i32) {
    %c0_i32 = arith.constant 0 : i32
    %c0_i32_0 = arith.constant 0 : i32
    %c0_i32_1 = arith.constant 0 : i32
    return %c0_i32, %c0_i32_0 : i32, i32
  }
  func.func @transform_12(%arg0: i32) -> (i32, i32) {
    %c0_i32 = arith.constant 0 : i32
    %c0_i32_0 = arith.constant 0 : i32
    %c0_i32_1 = arith.constant 0 : i32
    return %c0_i32, %c0_i32_0 : i32, i32
  }
  func.func @transform_13(%arg0: i32) -> (i32, i32) {
    %c0_i32 = arith.constant 0 : i32
    %c0_i32_0 = arith.constant 0 : i32
    %c0_i32_1 = arith.constant 0 : i32
    return %c0_i32, %c0_i32_0 : i32, i32
  }
  func.func @transform_14(%arg0: i32) -> (i32, i32) {
    %c0_i32 = arith.constant 0 : i32
    %c0_i32_0 = arith.constant 0 : i32
    return %arg0, %c0_i32 : i32, i32
  }
}

</mosaic_0001>

<llo_original>
// kernel: my_awesome_model_forward.1
$region0: #{my_awesome_model_forward.1}
  #allocation0 [shape = 'u32[]', space=smem, size = 0x4, offset = 0x4, fixed_abs, tag = 'smem constant byte address 0x4 - core index']
  #allocation1 [shape = 'u32[72,128]{1,0:T(1,128)}', space=vmem, size = 0x9000, scoped, tag = 'internal scratch']
  %s0 = inlined_call_operand.vmem [shape: f32[448,28], index: 0, kind: input, shape index: {}]
  %s1 = inlined_call_operand.hbm [shape: bf16[3,28,208], index: 1, kind: input, shape index: {}]
  %s2 = inlined_call_operand.vmem [shape: f32[1,208], index: 2, kind: input, shape index: {}]
  %s3 = inlined_call_operand.hbm [shape: bf16[104,221], index: 3, kind: input, shape index: {}]
  %s4 = inlined_call_operand.hbm [shape: bf16[200,104], index: 4, kind: input, shape index: {}]
  %s5 = inlined_call_operand.vmem [shape: bf16[3,104,176], index: 5, kind: input, shape index: {}]
  %s6 = inlined_call_operand.vmem [shape: f32[1,176], index: 6, kind: input, shape index: {}]
  %s7 = inlined_call_operand.vmem [shape: bf16[40,101], index: 7, kind: input, shape index: {}]
  %s8 = inlined_call_operand.hbm [shape: bf16[160,80], index: 8, kind: input, shape index: {}]
  %s9 = inlined_call_operand.vmem [shape: bf16[3,80,96], index: 9, kind: input, shape index: {}]
  %s10 = inlined_call_operand.vmem [shape: f32[1,96], index: 10, kind: input, shape index: {}]
  %s11 = inlined_call_operand.vmem [shape: bf16[8,37], index: 11, kind: input, shape index: {}]
  %s12 = inlined_call_operand.vmem [shape: bf16[32,10], index: 12, kind: input, shape index: {}]
  %s13 = inlined_call_operand.vmem [shape: f32[1,10], index: 13, kind: input, shape index: {}]
  %s14 = inlined_call_operand.hbm [shape: f32[16,10], index: 14, kind: output, shape index: {}]
  %s15 = sld [smem:[#allocation0]]
  $region105: #{my_awesome_model_forward.1} parent=0
    _
  %s17 = ssub.s32 1, %s15
  %s18 = scalar_select 0, %s17, %s15
  $region1: #{my_awesome_model_forward.1} parent=0
    #allocation2 [shape = 'u8[49152]{0}', space=vmem, size = 0xc000, scoped, tag = 'input window, operand 1, single buffered']
    #allocation3 [shape = 's32[2]{0}', space=sflag, size = 0x8, scoped, tag = 'scoped memory for my_awesome_model_forward.1']
    #allocation4 [shape = 's32[2]{0}', space=sflag, size = 0x8, scoped, tag = 'scoped memory for my_awesome_model_forward.1']
    #allocation5 [shape = 'u8[53248]{0}', space=vmem, size = 0xd000, scoped, tag = 'input window, operand 3, single buffered']
    #allocation6 [shape = 's32[1]{0}', space=sflag, size = 0x4, scoped, tag = 'scoped memory for my_awesome_model_forward.1']
    #allocation7 [shape = 'u8[51200]{0}', space=vmem, size = 0xc800, scoped, tag = 'input window, operand 4, single buffered']
    #allocation8 [shape = 'u8[40960]{0}', space=vmem, size = 0xa000, scoped, tag = 'input window, operand 8, single buffered']
    #allocation9 [shape = 's32[1]{0}', space=sflag, size = 0x4, scoped, tag = 'scoped memory for my_awesome_model_forward.1']
    #allocation10 [shape = 'u8[8192]{0}', space=vmem, size = 0x2000, scoped, tag = 'output window, operand 0']
    %19 = vsyncpa [#allocation3], 0
    %20 = vsyncpa [#allocation6], 0
    %21 = vsyncpa [#allocation9], 0
    %22 = vsyncpa [#allocation4], 0
    %s23 = scalar_lea.sflag [#allocation4], 1
    %24 = vsyncpa %s23, 0
    loop: start=0, step=1, limit=4
    $region2: #{my_awesome_model_forward.1} parent=1 // loop_pre_header
      _
    $region3: #{my_awesome_model_forward.1} parent=1 // loop_header
      %s26 = sphi 0, %s30
      %p27 = scmp.ge.s32.totalorder %s26, 4
      %s36 = sphi 0, %s38
      %s39 = sphi 0, %s36
      %s40 = sphi 0, %s39
      %s56 = sphi 0, %s40
      %s60 = sphi 0, %s60
      %s62 = sphi 0, %s60
      %s63 = sphi 0, %s62
      %s77 = sphi 0, %s63
      %s81 = sphi 0, %s81
      %s83 = sphi 0, %s81
      %s84 = sphi 0, %s83
      %s98 = sphi 0, %s84
      %s102 = sphi 0, %s102
      %s104 = sphi 0, %s102
      %s105 = sphi 0, %s104
      %s119 = sphi 0, %s105
      %s123 = sphi 0, %s123
      %s125 = sphi 0, %s123
      %s126 = sphi 0, %s125
      %s140 = sphi 0, %s126
      %s144 = sphi 0, %s144
      %s146 = sphi 0, %s144
      %s147 = sphi 0, %s146
      %s161 = sphi 0, %s147
      %s165 = sphi 0, %s165
      %s167 = sphi 0, %s165
      %s168 = sphi 0, %s167
      %s182 = sphi 0, %s168
      %s186 = sphi 0, %s186
      %s188 = sphi 0, %s186
      %s189 = sphi 0, %s188
      %s203 = sphi 0, %s189
      %s207 = sphi 0, %s207
      %s209 = sphi 0, %s207
      %s210 = sphi 0, %s209
      %s224 = sphi 0, %s210
      %s228 = sphi 0, %s228
      %s230 = sphi 0, %s228
      %s231 = sphi 0, %s230
      %s245 = sphi 0, %s231
      %s249 = sphi 0, %s249
      %s251 = sphi 0, %s249
      %s252 = sphi 0, %s251
      %s266 = sphi 0, %s252
      %s270 = sphi 0, %s270
      %s272 = sphi 0, %s270
      %s273 = sphi 0, %s272
      %s287 = sphi 0, %s273
      %s291 = sphi 0, %s291
      %s293 = sphi 0, %s291
      %s294 = sphi 0, %s293
      %s308 = sphi 0, %s294
      %s312 = sphi 0, %s312
      %s314 = sphi 0, %s312
      %s315 = sphi 0, %s314
      %s329 = sphi 0, %s315
      %s335 = sphi 0, %s337
      %s338 = sphi 0, %s335
      %s339 = sphi 0, %s338
      %s355 = sphi 0, %s339
    $region4: #{my_awesome_model_forward.1} parent=1 // loop_header_branch
      %29 = sbr.rel (%p27) target = $region8
    $region5: #{my_awesome_model_forward.1} parent=1 // loop_body
      %s31 = ssub.s32 %s26, 1
      %s32 = ssub.s32 %s26, 2
      %s33 = sadd.s32 %s26, 1
      %s34 = ssub.s32 %s26, %s33
      %p35 = scmp.eq.s32.totalorder %s34, 0
      %s37 = sadd.s32 %s36, 1
      %s38 = scalar_select %p35, %s36, %s37
      %p41 = pneg %p35
      %p42 = scmp.eq.s32.totalorder %s26, 1
      %p43 = por %p41, %p42
      %p44 = scmp.ne.s32.totalorder %s36, %s39
      %p45 = scmp.eq.s32.totalorder %s26, 0
      %p46 = por %p44, %p45
      %p47 = scmp.ne.s32.totalorder %s36, %s39
      %p48 = scmp.eq.s32.totalorder %s31, 1
      %p49 = por %p47, %p48
      %p50 = scmp.ne.s32.totalorder %s39, %s40
      %p51 = scmp.eq.s32.totalorder %s31, 0
      %p52 = por %p50, %p51
      %p53 = scmp.ne.s32.totalorder %s39, %s40
      %p54 = scmp.eq.s32.totalorder %s32, 1
      %p55 = por %p53, %p54
      %p57 = scmp.ne.s32.totalorder %s40, %s56
      %p58 = scmp.eq.s32.totalorder %s32, 0
      %p59 = por %p57, %p58
      %s61 = sadd.s32 %s60, 1
      %p64 = scmp.eq.s32.totalorder %s26, 1
      %p65 = scmp.ne.s32.totalorder %s60, %s62
      %p66 = scmp.eq.s32.totalorder %s26, 0
      %p67 = por %p65, %p66
      %p68 = scmp.ne.s32.totalorder %s60, %s62
      %p69 = scmp.eq.s32.totalorder %s31, 1
      %p70 = por %p68, %p69
      %p71 = scmp.ne.s32.totalorder %s62, %s63
      %p72 = scmp.eq.s32.totalorder %s31, 0
      %p73 = por %p71, %p72
      %p74 = scmp.ne.s32.totalorder %s62, %s63
      %p75 = scmp.eq.s32.totalorder %s32, 1
      %p76 = por %p74, %p75
      %p78 = scmp.ne.s32.totalorder %s63, %s77
      %p79 = scmp.eq.s32.totalorder %s32, 0
      %p80 = por %p78, %p79
      %s82 = sadd.s32 %s81, 1
      %p85 = scmp.eq.s32.totalorder %s26, 1
      %p86 = scmp.ne.s32.totalorder %s81, %s83
      %p87 = scmp.eq.s32.totalorder %s26, 0
      %p88 = por %p86, %p87
      %p89 = scmp.ne.s32.totalorder %s81, %s83
      %p90 = scmp.eq.s32.totalorder %s31, 1
      %p91 = por %p89, %p90
      %p92 = scmp.ne.s32.totalorder %s83, %s84
      %p93 = scmp.eq.s32.totalorder %s31, 0
      %p94 = por %p92, %p93
      %p95 = scmp.ne.s32.totalorder %s83, %s84
      %p96 = scmp.eq.s32.totalorder %s32, 1
      %p97 = por %p95, %p96
      %p99 = scmp.ne.s32.totalorder %s84, %s98
      %p100 = scmp.eq.s32.totalorder %s32, 0
      %p101 = por %p99, %p100
      %s103 = sadd.s32 %s102, 1
      %p106 = scmp.eq.s32.totalorder %s26, 1
      %p107 = scmp.ne.s32.totalorder %s102, %s104
      %p108 = scmp.eq.s32.totalorder %s26, 0
      %p109 = por %p107, %p108
      %p110 = scmp.ne.s32.totalorder %s102, %s104
      %p111 = scmp.eq.s32.totalorder %s31, 1
      %p112 = por %p110, %p111
      %p113 = scmp.ne.s32.totalorder %s104, %s105
      %p114 = scmp.eq.s32.totalorder %s31, 0
      %p115 = por %p113, %p114
      %p116 = scmp.ne.s32.totalorder %s104, %s105
      %p117 = scmp.eq.s32.totalorder %s32, 1
      %p118 = por %p116, %p117
      %p120 = scmp.ne.s32.totalorder %s105, %s119
      %p121 = scmp.eq.s32.totalorder %s32, 0
      %p122 = por %p120, %p121
      %s124 = sadd.s32 %s123, 1
      %p127 = scmp.eq.s32.totalorder %s26, 1
      %p128 = scmp.ne.s32.totalorder %s123, %s125
      %p129 = scmp.eq.s32.totalorder %s26, 0
      %p130 = por %p128, %p129
      %p131 = scmp.ne.s32.totalorder %s123, %s125
      %p132 = scmp.eq.s32.totalorder %s31, 1
      %p133 = por %p131, %p132
      %p134 = scmp.ne.s32.totalorder %s125, %s126
      %p135 = scmp.eq.s32.totalorder %s31, 0
      %p136 = por %p134, %p135
      %p137 = scmp.ne.s32.totalorder %s125, %s126
      %p138 = scmp.eq.s32.totalorder %s32, 1
      %p139 = por %p137, %p138
      %p141 = scmp.ne.s32.totalorder %s126, %s140
      %p142 = scmp.eq.s32.totalorder %s32, 0
      %p143 = por %p141, %p142
      %s145 = sadd.s32 %s144, 1
      %p148 = scmp.eq.s32.totalorder %s26, 1
      %p149 = scmp.ne.s32.totalorder %s144, %s146
      %p150 = scmp.eq.s32.totalorder %s26, 0
      %p151 = por %p149, %p150
      %p152 = scmp.ne.s32.totalorder %s144, %s146
      %p153 = scmp.eq.s32.totalorder %s31, 1
      %p154 = por %p152, %p153
      %p155 = scmp.ne.s32.totalorder %s146, %s147
      %p156 = scmp.eq.s32.totalorder %s31, 0
      %p157 = por %p155, %p156
      %p158 = scmp.ne.s32.totalorder %s146, %s147
      %p159 = scmp.eq.s32.totalorder %s32, 1
      %p160 = por %p158, %p159
      %p162 = scmp.ne.s32.totalorder %s147, %s161
      %p163 = scmp.eq.s32.totalorder %s32, 0
      %p164 = por %p162, %p163
      %s166 = sadd.s32 %s165, 1
      %p169 = scmp.eq.s32.totalorder %s26, 1
      %p170 = scmp.ne.s32.totalorder %s165, %s167
      %p171 = scmp.eq.s32.totalorder %s26, 0
      %p172 = por %p170, %p171
      %p173 = scmp.ne.s32.totalorder %s165, %s167
      %p174 = scmp.eq.s32.totalorder %s31, 1
      %p175 = por %p173, %p174
      %p176 = scmp.ne.s32.totalorder %s167, %s168
      %p177 = scmp.eq.s32.totalorder %s31, 0
      %p178 = por %p176, %p177
      %p179 = scmp.ne.s32.totalorder %s167, %s168
      %p180 = scmp.eq.s32.totalorder %s32, 1
      %p181 = por %p179, %p180
      %p183 = scmp.ne.s32.totalorder %s168, %s182
      %p184 = scmp.eq.s32.totalorder %s32, 0
      %p185 = por %p183, %p184
      %s187 = sadd.s32 %s186, 1
      %p190 = scmp.eq.s32.totalorder %s26, 1
      %p191 = scmp.ne.s32.totalorder %s186, %s188
      %p192 = scmp.eq.s32.totalorder %s26, 0
      %p193 = por %p191, %p192
      %p194 = scmp.ne.s32.totalorder %s186, %s188
      %p195 = scmp.eq.s32.totalorder %s31, 1
      %p196 = por %p194, %p195
      %p197 = scmp.ne.s32.totalorder %s188, %s189
      %p198 = scmp.eq.s32.totalorder %s31, 0
      %p199 = por %p197, %p198
      %p200 = scmp.ne.s32.totalorder %s188, %s189
      %p201 = scmp.eq.s32.totalorder %s32, 1
      %p202 = por %p200, %p201
      %p204 = scmp.ne.s32.totalorder %s189, %s203
      %p205 = scmp.eq.s32.totalorder %s32, 0
      %p206 = por %p204, %p205
      %s208 = sadd.s32 %s207, 1
      %p211 = scmp.eq.s32.totalorder %s26, 1
      %p212 = scmp.ne.s32.totalorder %s207, %s209
      %p213 = scmp.eq.s32.totalorder %s26, 0
      %p214 = por %p212, %p213
      %p215 = scmp.ne.s32.totalorder %s207, %s209
      %p216 = scmp.eq.s32.totalorder %s31, 1
      %p217 = por %p215, %p216
      %p218 = scmp.ne.s32.totalorder %s209, %s210
      %p219 = scmp.eq.s32.totalorder %s31, 0
      %p220 = por %p218, %p219
      %p221 = scmp.ne.s32.totalorder %s209, %s210
      %p222 = scmp.eq.s32.totalorder %s32, 1
      %p223 = por %p221, %p222
      %p225 = scmp.ne.s32.totalorder %s210, %s224
      %p226 = scmp.eq.s32.totalorder %s32, 0
      %p227 = por %p225, %p226
      %s229 = sadd.s32 %s228, 1
      %p232 = scmp.eq.s32.totalorder %s26, 1
      %p233 = scmp.ne.s32.totalorder %s228, %s230
      %p234 = scmp.eq.s32.totalorder %s26, 0
      %p235 = por %p233, %p234
      %p236 = scmp.ne.s32.totalorder %s228, %s230
      %p237 = scmp.eq.s32.totalorder %s31, 1
      %p238 = por %p236, %p237
      %p239 = scmp.ne.s32.totalorder %s230, %s231
      %p240 = scmp.eq.s32.totalorder %s31, 0
      %p241 = por %p239, %p240
      %p242 = scmp.ne.s32.totalorder %s230, %s231
      %p243 = scmp.eq.s32.totalorder %s32, 1
      %p244 = por %p242, %p243
      %p246 = scmp.ne.s32.totalorder %s231, %s245
      %p247 = scmp.eq.s32.totalorder %s32, 0
      %p248 = por %p246, %p247
      %s250 = sadd.s32 %s249, 1
      %p253 = scmp.eq.s32.totalorder %s26, 1
      %p254 = scmp.ne.s32.totalorder %s249, %s251
      %p255 = scmp.eq.s32.totalorder %s26, 0
      %p256 = por %p254, %p255
      %p257 = scmp.ne.s32.totalorder %s249, %s251
      %p258 = scmp.eq.s32.totalorder %s31, 1
      %p259 = por %p257, %p258
      %p260 = scmp.ne.s32.totalorder %s251, %s252
      %p261 = scmp.eq.s32.totalorder %s31, 0
      %p262 = por %p260, %p261
      %p263 = scmp.ne.s32.totalorder %s251, %s252
      %p264 = scmp.eq.s32.totalorder %s32, 1
      %p265 = por %p263, %p264
      %p267 = scmp.ne.s32.totalorder %s252, %s266
      %p268 = scmp.eq.s32.totalorder %s32, 0
      %p269 = por %p267, %p268
      %s271 = sadd.s32 %s270, 1
      %p274 = scmp.eq.s32.totalorder %s26, 1
      %p275 = scmp.ne.s32.totalorder %s270, %s272
      %p276 = scmp.eq.s32.totalorder %s26, 0
      %p277 = por %p275, %p276
      %p278 = scmp.ne.s32.totalorder %s270, %s272
      %p279 = scmp.eq.s32.totalorder %s31, 1
      %p280 = por %p278, %p279
      %p281 = scmp.ne.s32.totalorder %s272, %s273
      %p282 = scmp.eq.s32.totalorder %s31, 0
      %p283 = por %p281, %p282
      %p284 = scmp.ne.s32.totalorder %s272, %s273
      %p285 = scmp.eq.s32.totalorder %s32, 1
      %p286 = por %p284, %p285
      %p288 = scmp.ne.s32.totalorder %s273, %s287
      %p289 = scmp.eq.s32.totalorder %s32, 0
      %p290 = por %p288, %p289
      %s292 = sadd.s32 %s291, 1
      %p295 = scmp.eq.s32.totalorder %s26, 1
      %p296 = scmp.ne.s32.totalorder %s291, %s293
      %p297 = scmp.eq.s32.totalorder %s26, 0
      %p298 = por %p296, %p297
      %p299 = scmp.ne.s32.totalorder %s291, %s293
      %p300 = scmp.eq.s32.totalorder %s31, 1
      %p301 = por %p299, %p300
      %p302 = scmp.ne.s32.totalorder %s293, %s294
      %p303 = scmp.eq.s32.totalorder %s31, 0
      %p304 = por %p302, %p303
      %p305 = scmp.ne.s32.totalorder %s293, %s294
      %p306 = scmp.eq.s32.totalorder %s32, 1
      %p307 = por %p305, %p306
      %p309 = scmp.ne.s32.totalorder %s294, %s308
      %p310 = scmp.eq.s32.totalorder %s32, 0
      %p311 = por %p309, %p310
      %s313 = sadd.s32 %s312, 1
      %p316 = scmp.eq.s32.totalorder %s26, 1
      %p317 = scmp.ne.s32.totalorder %s312, %s314
      %p318 = scmp.eq.s32.totalorder %s26, 0
      %p319 = por %p317, %p318
      %p320 = scmp.ne.s32.totalorder %s312, %s314
      %p321 = scmp.eq.s32.totalorder %s31, 1
      %p322 = por %p320, %p321
      %p323 = scmp.ne.s32.totalorder %s314, %s315
      %p324 = scmp.eq.s32.totalorder %s31, 0
      %p325 = por %p323, %p324
      %p326 = scmp.ne.s32.totalorder %s314, %s315
      %p327 = scmp.eq.s32.totalorder %s32, 1
      %p328 = por %p326, %p327
      %p330 = scmp.ne.s32.totalorder %s315, %s329
      %p331 = scmp.eq.s32.totalorder %s32, 0
      %p332 = por %p330, %p331
      %s333 = ssub.s32 %s26, %s33
      %p334 = scmp.eq.s32.totalorder %s333, 0
      %s336 = sadd.s32 %s335, 1
      %s337 = scalar_select %p334, %s335, %s336
      %p340 = pneg %p334
      %p341 = scmp.eq.s32.totalorder %s26, 1
      %p342 = por %p340, %p341
      %p343 = scmp.ne.s32.totalorder %s335, %s338
      %p344 = scmp.eq.s32.totalorder %s26, 0
      %p345 = por %p343, %p344
      %p346 = scmp.ne.s32.totalorder %s335, %s338
      %p347 = scmp.eq.s32.totalorder %s31, 1
      %p348 = por %p346, %p347
      %p349 = scmp.ne.s32.totalorder %s338, %s339
      %p350 = scmp.eq.s32.totalorder %s31, 0
      %p351 = por %p349, %p350
      %p352 = scmp.ne.s32.totalorder %s338, %s339
      %p353 = scmp.eq.s32.totalorder %s32, 1
      %p354 = por %p352, %p353
      %p356 = scmp.ne.s32.totalorder %s339, %s355
      %p357 = scmp.eq.s32.totalorder %s32, 0
      %p358 = por %p356, %p357
      %p359 = scmp.le.s32.totalorder 1, %s26
      %p360 = scmp.lt.s32.totalorder %s26, 3
      %p361 = pnand %p359, %p360
      %p362 = pneg %p361
      // Predicated region
      $region9: #{my_awesome_model_forward.1} parent=5 // pred_check
        _
      $region10: #{my_awesome_model_forward.1} parent=5 // pred_check_branch
        %364 = sbr.rel (%p361) target = $region12
      $region11: #{my_awesome_model_forward.1} parent=5 // pred_region
        %s365 = ssub.s32 %s26, 1
        // Predicated region
        $region13: #{my_awesome_model_forward.1} parent=11 // pred_check
          %p366 = pneg %p73
        $region14: #{my_awesome_model_forward.1} parent=11 // pred_check_branch
          %368 = sbr.rel (%p366) target = $region16
        $region15: #{my_awesome_model_forward.1} parent=11 // pred_region
          %370 = vsyncadd [#allocation3], 0
          %s371 = sshll.u32 %s1, 4
          %s372 = int_to_ptr.hbm [resolvable:$true] %s371
          %s373 = sshll.u32 [#allocation2], 4
          %s374 = int_to_ptr.vmem [resolvable:$true] %s373
          %379 = dma.hbm_to_vmem [thread:$0]  %s372, 1536, %s374, [#allocation3], 128, 128, 8
        $region16: #{my_awesome_model_forward.1} parent=11 // pred_fallthru
          _
        // Predicated region
        $region17: #{my_awesome_model_forward.1} parent=11 // pred_check
          %p380 = pneg %p94
        $region18: #{my_awesome_model_forward.1} parent=11 // pred_check_branch
          %382 = sbr.rel (%p380) target = $region20
        $region19: #{my_awesome_model_forward.1} parent=11 // pred_region
          _
        $region20: #{my_awesome_model_forward.1} parent=11 // pred_fallthru
          _
        // Predicated region
        $region21: #{my_awesome_model_forward.1} parent=11 // pred_check
          %p383 = pneg %p115
        $region22: #{my_awesome_model_forward.1} parent=11 // pred_check_branch
          %385 = sbr.rel (%p383) target = $region24
        $region23: #{my_awesome_model_forward.1} parent=11 // pred_region
          %387 = vsyncadd [#allocation6], 0
          %s388 = sshll.u32 %s3, 4
          %s389 = int_to_ptr.hbm [resolvable:$true] %s388
          %s390 = sshll.u32 [#allocation5], 4
          %s391 = int_to_ptr.vmem [resolvable:$true] %s390
          %396 = dma.hbm_to_vmem [thread:$0]  %s389, 1664, %s391, [#allocation6], 128, 128, 8
        $region24: #{my_awesome_model_forward.1} parent=11 // pred_fallthru
          _
        // Predicated region
        $region25: #{my_awesome_model_forward.1} parent=11 // pred_check
          %p397 = pneg %p136
        $region26: #{my_awesome_model_forward.1} parent=11 // pred_check_branch
          %399 = sbr.rel (%p397) target = $region28
        $region27: #{my_awesome_model_forward.1} parent=11 // pred_region
          %401 = vsyncadd [#allocation6], 0
          %s402 = sshll.u32 %s4, 4
          %s403 = int_to_ptr.hbm [resolvable:$true] %s402
          %s404 = sshll.u32 [#allocation7], 4
          %s405 = int_to_ptr.vmem [resolvable:$true] %s404
          %410 = dma.hbm_to_vmem [thread:$0]  %s403, 1600, %s405, [#allocation6], 64, 64, 4
        $region28: #{my_awesome_model_forward.1} parent=11 // pred_fallthru
          _
        // Predicated region
        $region29: #{my_awesome_model_forward.1} parent=11 // pred_check
          %p411 = pneg %p157
        $region30: #{my_awesome_model_forward.1} parent=11 // pred_check_branch
          %413 = sbr.rel (%p411) target = $region32
        $region31: #{my_awesome_model_forward.1} parent=11 // pred_region
          _
        $region32: #{my_awesome_model_forward.1} parent=11 // pred_fallthru
          _
        // Predicated region
        $region33: #{my_awesome_model_forward.1} parent=11 // pred_check
          %p414 = pneg %p178
        $region34: #{my_awesome_model_forward.1} parent=11 // pred_check_branch
          %416 = sbr.rel (%p414) target = $region36
        $region35: #{my_awesome_model_forward.1} parent=11 // pred_region
          _
        $region36: #{my_awesome_model_forward.1} parent=11 // pred_fallthru
          _
        // Predicated region
        $region37: #{my_awesome_model_forward.1} parent=11 // pred_check
          %p417 = pneg %p199
        $region38: #{my_awesome_model_forward.1} parent=11 // pred_check_branch
          %419 = sbr.rel (%p417) target = $region40
        $region39: #{my_awesome_model_forward.1} parent=11 // pred_region
          _
        $region40: #{my_awesome_model_forward.1} parent=11 // pred_fallthru
          _
        // Predicated region
        $region41: #{my_awesome_model_forward.1} parent=11 // pred_check
          %p420 = pneg %p220
        $region42: #{my_awesome_model_forward.1} parent=11 // pred_check_branch
          %422 = sbr.rel (%p420) target = $region44
        $region43: #{my_awesome_model_forward.1} parent=11 // pred_region
          %424 = vsyncadd [#allocation9], 0
          %s425 = sshll.u32 %s8, 4
          %s426 = int_to_ptr.hbm [resolvable:$true] %s425
          %s427 = sshll.u32 [#allocation8], 4
          %s428 = int_to_ptr.vmem [resolvable:$true] %s427
          %433 = dma.hbm_to_vmem [thread:$0]  %s426, 1280, %s428, [#allocation9], 64, 64, 4
        $region44: #{my_awesome_model_forward.1} parent=11 // pred_fallthru
          _
        // Predicated region
        $region45: #{my_awesome_model_forward.1} parent=11 // pred_check
          %p434 = pneg %p241
        $region46: #{my_awesome_model_forward.1} parent=11 // pred_check_branch
          %436 = sbr.rel (%p434) target = $region48
        $region47: #{my_awesome_model_forward.1} parent=11 // pred_region
          _
        $region48: #{my_awesome_model_forward.1} parent=11 // pred_fallthru
          _
        // Predicated region
        $region49: #{my_awesome_model_forward.1} parent=11 // pred_check
          %p437 = pneg %p262
        $region50: #{my_awesome_model_forward.1} parent=11 // pred_check_branch
          %439 = sbr.rel (%p437) target = $region52
        $region51: #{my_awesome_model_forward.1} parent=11 // pred_region
          _
        $region52: #{my_awesome_model_forward.1} parent=11 // pred_fallthru
          _
        // Predicated region
        $region53: #{my_awesome_model_forward.1} parent=11 // pred_check
          %p440 = pneg %p283
        $region54: #{my_awesome_model_forward.1} parent=11 // pred_check_branch
          %442 = sbr.rel (%p440) target = $region56
        $region55: #{my_awesome_model_forward.1} parent=11 // pred_region
          _
        $region56: #{my_awesome_model_forward.1} parent=11 // pred_fallthru
          _
        // Predicated region
        $region57: #{my_awesome_model_forward.1} parent=11 // pred_check
          %p443 = pneg %p304
        $region58: #{my_awesome_model_forward.1} parent=11 // pred_check_branch
          %445 = sbr.rel (%p443) target = $region60
        $region59: #{my_awesome_model_forward.1} parent=11 // pred_region
          _
        $region60: #{my_awesome_model_forward.1} parent=11 // pred_fallthru
          _
        // Predicated region
        $region61: #{my_awesome_model_forward.1} parent=11 // pred_check
          %p446 = pneg %p325
        $region62: #{my_awesome_model_forward.1} parent=11 // pred_check_branch
          %448 = sbr.rel (%p446) target = $region64
        $region63: #{my_awesome_model_forward.1} parent=11 // pred_region
          _
        $region64: #{my_awesome_model_forward.1} parent=11 // pred_fallthru
          _
      $region12: #{my_awesome_model_forward.1} parent=5 // pred_fallthru
        _
      %p449 = scmp.lt.s32.totalorder %s26, 2
      // Predicated region
      $region65: #{my_awesome_model_forward.1} parent=5 // pred_check
        %p450 = pneg %p449
      $region66: #{my_awesome_model_forward.1} parent=5 // pred_check_branch
        %452 = sbr.rel (%p450) target = $region68
      $region67: #{my_awesome_model_forward.1} parent=5 // pred_region
        // Predicated region
        $region69: #{my_awesome_model_forward.1} parent=67 // pred_check
          %p453 = pneg %p46
        $region70: #{my_awesome_model_forward.1} parent=67 // pred_check_branch
          %455 = sbr.rel (%p453) target = $region72
        $region71: #{my_awesome_model_forward.1} parent=67 // pred_region
          %s456 = smul.u32 28, %s26
          %p457 = scmp.lt.s32.totalorder %s456, 55
          %s458 = scalar_select %p457, %s456, 55
          %s459 = smul.addr %s458, 8
          %s460 = scalar_lea.vmem %s0, %s459
          %s461 = smul.u32 28, %s26
        $region72: #{my_awesome_model_forward.1} parent=67 // pred_fallthru
          _
      $region68: #{my_awesome_model_forward.1} parent=5 // pred_fallthru
        _
      %p462 = scmp.le.s32.totalorder 1, %s26
      %p463 = scmp.lt.s32.totalorder %s26, 3
      %p464 = pnand %p462, %p463
      %p465 = pneg %p464
      // Predicated region
      $region73: #{my_awesome_model_forward.1} parent=5 // pred_check
        _
      $region74: #{my_awesome_model_forward.1} parent=5 // pred_check_branch
        %467 = sbr.rel (%p464) target = $region76
      $region75: #{my_awesome_model_forward.1} parent=5 // pred_region
        %s468 = ssub.s32 %s26, 1
        // Predicated region
        $region77: #{my_awesome_model_forward.1} parent=75 // pred_check
          %p469 = pneg %p73
        $region78: #{my_awesome_model_forward.1} parent=75 // pred_check_branch
          %471 = sbr.rel (%p469) target = $region80
        $region79: #{my_awesome_model_forward.1} parent=75 // pred_region
          %473 = dma.done [#allocation3], 1536
        $region80: #{my_awesome_model_forward.1} parent=75 // pred_fallthru
          _
        // Predicated region
        $region81: #{my_awesome_model_forward.1} parent=75 // pred_check
          %p474 = pneg %p115
        $region82: #{my_awesome_model_forward.1} parent=75 // pred_check_branch
          %476 = sbr.rel (%p474) target = $region84
        $region83: #{my_awesome_model_forward.1} parent=75 // pred_region
          %478 = dma.done [#allocation6], 1664
        $region84: #{my_awesome_model_forward.1} parent=75 // pred_fallthru
          _
        // Predicated region
        $region85: #{my_awesome_model_forward.1} parent=75 // pred_check
          %p479 = pneg %p136
        $region86: #{my_awesome_model_forward.1} parent=75 // pred_check_branch
          %481 = sbr.rel (%p479) target = $region88
        $region87: #{my_awesome_model_forward.1} parent=75 // pred_region
          %483 = dma.done [#allocation6], 1600
        $region88: #{my_awesome_model_forward.1} parent=75 // pred_fallthru
          _
        // Predicated region
        $region89: #{my_awesome_model_forward.1} parent=75 // pred_check
          %p484 = pneg %p220
        $region90: #{my_awesome_model_forward.1} parent=75 // pred_check_branch
          %486 = sbr.rel (%p484) target = $region92
        $region91: #{my_awesome_model_forward.1} parent=75 // pred_region
          %488 = dma.done [#allocation9], 1280
        $region92: #{my_awesome_model_forward.1} parent=75 // pred_fallthru
          _
        %s489 = smul.u32 28, %s31
        %p490 = scmp.lt.s32.totalorder %s489, 55
        %s491 = scalar_select %p490, %s489, 55
        %s492 = smul.addr %s491, 8
        %s493 = scalar_lea.vmem %s0, %s492
        %p494 = pneg %p52
        %p495 = pneg %p49
        %p496 = pneg %p73
        %p497 = pneg %p70
        %p498 = pneg %p94
        %p499 = pneg %p91
        %p500 = pneg %p115
        %p501 = pneg %p112
        %p502 = pneg %p136
        %p503 = pneg %p133
        %p504 = pneg %p157
        %p505 = pneg %p154
        %p506 = pneg %p178
        %p507 = pneg %p175
        %p508 = pneg %p199
        %p509 = pneg %p196
        %p510 = pneg %p220
        %p511 = pneg %p217
        %p512 = pneg %p241
        %p513 = pneg %p238
        %p514 = pneg %p262
        %p515 = pneg %p259
        %p516 = pneg %p283
        %p517 = pneg %p280
        %p518 = pneg %p304
        %p519 = pneg %p301
        %p520 = pneg %p325
        %p521 = pneg %p322
        %p522 = pneg %p351
        %p523 = pneg %p348
        %s524 = sand.u32 %s338, 1
        %s525 = scalar_lea.sflag [#allocation4], %s524
        %s526 = sand.u32 %s338, 1
        %s527 = smul.addr %s526, 8
        %s528 = scalar_lea.vmem [#allocation10], %s527
        %s529 = smul.u32 28, %s31
        %p530 = scmp.lt.s32.totalorder %s529, 55
        %s531 = scalar_select %p530, %s529, 55
        %s532 = smul.addr %s531, 8
        %s533 = scalar_lea.vmem %s0, %s532
        %s534 = smul.u32 28, %s31
        %v536 = vld [vmem:[%s533] sm:$0xff]
        %v537 = vld [vmem:[%s533 + $0x8] sm:$0xff]
        %v538 = vld [vmem:[%s533 + $0x10] sm:$0xff]
        %v539 = vld [vmem:[%s533 + $0x18] sm:$0xff]
        %v540 = vld [vmem:[%s533 + $0x20] sm:$0xff]
        %v541 = vld [vmem:[%s533 + $0x28] sm:$0xff]
        %v542 = vld [vmem:[%s533 + $0x30] sm:$0xff]
        %v543 = vld [vmem:[%s533 + $0x38] sm:$0xff]
        %v544 = vld [vmem:[%s533 + $0x40] sm:$0xff]
        %v545 = vld [vmem:[%s533 + $0x48] sm:$0xff]
        %v546 = vld [vmem:[%s533 + $0x50] sm:$0xff]
        %v547 = vld [vmem:[%s533 + $0x58] sm:$0xff]
        %v548 = vld [vmem:[%s533 + $0x60] sm:$0xff]
        %v549 = vld [vmem:[%s533 + $0x68] sm:$0xff]
        %v550 = vld [vmem:[%s533 + $0x70] sm:$0xff]
        %v551 = vld [vmem:[%s533 + $0x78] sm:$0xff]
        %v552 = vld [vmem:[%s533 + $0x80] sm:$0xff]
        %v553 = vld [vmem:[%s533 + $0x88] sm:$0xff]
        %v554 = vld [vmem:[%s533 + $0x90] sm:$0xff]
        %v555 = vld [vmem:[%s533 + $0x98] sm:$0xff]
        %v556 = vld [vmem:[%s533 + $0xa0] sm:$0xff]
        %v557 = vld [vmem:[%s533 + $0xa8] sm:$0xff]
        %v558 = vld [vmem:[%s533 + $0xb0] sm:$0xff]
        %v559 = vld [vmem:[%s533 + $0xb8] sm:$0xff]
        %v560 = vld [vmem:[%s533 + $0xc0] sm:$0xff]
        %v561 = vld [vmem:[%s533 + $0xc8] sm:$0xff]
        %v562 = vld [vmem:[%s533 + $0xd0] sm:$0xff]
        %v563 = vld [vmem:[%s533 + $0xd8] sm:$0xff]
        %v564 = vpack.c.bf16 %v536, %v536
        %v565 = vpack.c.bf16 %v537, %v537
        %v566 = vpack.c.bf16 %v538, %v538
        %v567 = vpack.c.bf16 %v539, %v539
        %v568 = vpack.c.bf16 %v540, %v540
        %v569 = vpack.c.bf16 %v541, %v541
        %v570 = vpack.c.bf16 %v542, %v542
        %v571 = vpack.c.bf16 %v543, %v543
        %v572 = vpack.c.bf16 %v544, %v544
        %v573 = vpack.c.bf16 %v545, %v545
        %v574 = vpack.c.bf16 %v546, %v546
        %v575 = vpack.c.bf16 %v547, %v547
        %v576 = vpack.c.bf16 %v548, %v548
        %v577 = vpack.c.bf16 %v549, %v549
        %v578 = vpack.c.bf16 %v550, %v550
        %v579 = vpack.c.bf16 %v551, %v551
        %v580 = vpack.c.bf16 %v552, %v552
        %v581 = vpack.c.bf16 %v553, %v553
        %v582 = vpack.c.bf16 %v554, %v554
        %v583 = vpack.c.bf16 %v555, %v555
        %v584 = vpack.c.bf16 %v556, %v556
        %v585 = vpack.c.bf16 %v557, %v557
        %v586 = vpack.c.bf16 %v558, %v558
        %v587 = vpack.c.bf16 %v559, %v559
        %v588 = vpack.c.bf16 %v560, %v560
        %v589 = vpack.c.bf16 %v561, %v561
        %v590 = vpack.c.bf16 %v562, %v562
        %v591 = vpack.c.bf16 %v563, %v563
        %v592 = vld [vmem:[#allocation2] sm:$0xff]
        %v593 = vld [vmem:[#allocation2 + $0x8] sm:$0xff]
        %v594 = vld [vmem:[#allocation2 + $0x10] sm:$0xff]
        %v595 = vld [vmem:[#allocation2 + $0x18] sm:$0x33]
        %s596 = scalar_lea.vmem [#allocation2], 32
        %v597 = vld [vmem:[%s596] sm:$0xff]
        %v598 = vld [vmem:[%s596 + $0x8] sm:$0xff]
        %v599 = vld [vmem:[%s596 + $0x10] sm:$0xff]
        %v600 = vld [vmem:[%s596 + $0x18] sm:$0x33]
        %v629 = vunpack.c.l.b16 %v564
        %v630 = vunpack.c.l.b16 %v565
        %v631 = vunpack.c.l.b16 %v566
        %v632 = vunpack.c.l.b16 %v567
        %v633 = vunpack.c.l.b16 %v568
        %v634 = vunpack.c.l.b16 %v569
        %v635 = vunpack.c.l.b16 %v570
        %v636 = vunpack.c.l.b16 %v571
        %v637 = vunpack.c.l.b16 %v572
        %v638 = vunpack.c.l.b16 %v573
        %v639 = vunpack.c.l.b16 %v574
        %v640 = vunpack.c.l.b16 %v575
        %v641 = vunpack.c.l.b16 %v576
        %v642 = vunpack.c.l.b16 %v577
        %v643 = vunpack.c.l.b16 %v578
        %v644 = vunpack.c.l.b16 %v579
        %v645 = vunpack.c.l.b16 %v580
        %v646 = vunpack.c.l.b16 %v581
        %v647 = vunpack.c.l.b16 %v582
        %v648 = vunpack.c.l.b16 %v583
        %v649 = vunpack.c.l.b16 %v584
        %v650 = vunpack.c.l.b16 %v585
        %v651 = vunpack.c.l.b16 %v586
        %v652 = vunpack.c.l.b16 %v587
        %v653 = vunpack.c.l.b16 %v588
        %v654 = vunpack.c.l.b16 %v589
        %v655 = vunpack.c.l.b16 %v590
        %v656 = vunpack.c.l.b16 %v591
        %v657 = vpack.c.b16 %v630, %v629
        %v658 = vpack.c.b16 %v632, %v631
        %v659 = vpack.c.b16 %v634, %v633
        %v660 = vpack.c.b16 %v636, %v635
        %v661 = vpack.c.b16 %v638, %v637
        %v662 = vpack.c.b16 %v640, %v639
        %v663 = vpack.c.b16 %v642, %v641
        %v664 = vpack.c.b16 %v644, %v643
        %v665 = vpack.c.b16 %v646, %v645
        %v666 = vpack.c.b16 %v648, %v647
        %v667 = vpack.c.b16 %v650, %v649
        %v668 = vpack.c.b16 %v652, %v651
        %v669 = vpack.c.b16 %v654, %v653
        %v670 = vpack.c.b16 %v656, %v655
        %vm671 = vsmask.f32 7424
        %v673 = vshrl.u32 %v657, 16
        %v675 = vshll.u32 %v657, 16
        %v677 = vrot.slane %v675, 1
        %v678 = vor.u32 %v673, %v677
        %v680 = vshll.u32 %v658, 16
        %v682 = vrot.slane %v680, 1
        %v683 = vsel %vm671, %v678, %v682
        %v684 = vshrl.u32 %v658, 16
        %v686 = vor.u32 %v684, %v682
        %v688 = vshll.u32 %v659, 16
        %v690 = vrot.slane %v688, 1
        %v691 = vsel %vm671, %v686, %v690
        %v692 = vshrl.u32 %v659, 16
        %v694 = vor.u32 %v692, %v690
        %v696 = vshll.u32 %v660, 16
        %v698 = vrot.slane %v696, 1
        %v699 = vsel %vm671, %v694, %v698
        %v700 = vshrl.u32 %v660, 16
        %v702 = vor.u32 %v700, %v698
        %v704 = vshll.u32 %v661, 16
        %v706 = vrot.slane %v704, 1
        %v707 = vsel %vm671, %v702, %v706
        %v708 = vshrl.u32 %v661, 16
        %v710 = vor.u32 %v708, %v706
        %v712 = vshll.u32 %v662, 16
        %v714 = vrot.slane %v712, 1
        %v715 = vsel %vm671, %v710, %v714
        %v716 = vshrl.u32 %v662, 16
        %v718 = vor.u32 %v716, %v714
        %v720 = vshll.u32 %v663, 16
        %v722 = vrot.slane %v720, 1
        %v723 = vsel %vm671, %v718, %v722
        %v724 = vshrl.u32 %v663, 16
        %v726 = vor.u32 %v724, %v722
        %v728 = vshll.u32 %v664, 16
        %v730 = vrot.slane %v728, 1
        %v731 = vsel %vm671, %v726, %v730
        %v732 = vshrl.u32 %v664, 16
        %v734 = vor.u32 %v732, %v730
        %v736 = vshll.u32 %v665, 16
        %v738 = vrot.slane %v736, 1
        %v739 = vsel %vm671, %v734, %v738
        %v740 = vshrl.u32 %v665, 16
        %v742 = vor.u32 %v740, %v738
        %v744 = vshll.u32 %v666, 16
        %v746 = vrot.slane %v744, 1
        %v747 = vsel %vm671, %v742, %v746
        %v748 = vshrl.u32 %v666, 16
        %v750 = vor.u32 %v748, %v746
        %v752 = vshll.u32 %v667, 16
        %v754 = vrot.slane %v752, 1
        %v755 = vsel %vm671, %v750, %v754
        %v756 = vshrl.u32 %v667, 16
        %v758 = vor.u32 %v756, %v754
        %v760 = vshll.u32 %v668, 16
        %v762 = vrot.slane %v760, 1
        %v763 = vsel %vm671, %v758, %v762
        %v764 = vshrl.u32 %v668, 16
        %v766 = vor.u32 %v764, %v762
        %v768 = vshll.u32 %v669, 16
        %v770 = vrot.slane %v768, 1
        %v771 = vsel %vm671, %v766, %v770
        %v772 = vshrl.u32 %v669, 16
        %v774 = vor.u32 %v772, %v770
        %v776 = vshll.u32 %v670, 16
        %v778 = vrot.slane %v776, 1
        %v779 = vsel %vm671, %v774, %v778
        %v780 = vshrl.u32 %v670, 16
        %v782 = vor.u32 %v780, %v778
        %v787 = vunpack.c.l.b16 %v597
        %v788 = vunpack.c.h.b16 %v597
        %v789 = vunpack.c.l.b16 %v598
        %v790 = vunpack.c.h.b16 %v598
        %v791 = vunpack.c.l.b16 %v599
        %v792 = vunpack.c.h.b16 %v599
        %v793 = vunpack.c.l.b16 %v600
        %v794 = vunpack.c.h.b16 %v600
        %v795 = vpack.c.b16 %v789, %v787
        %v796 = vpack.c.b16 %v790, %v788
        %v797 = vpack.c.b16 %v793, %v791
        %v798 = vpack.c.b16 %v794, %v792
        %vm801 = vcmask 228352
        %v803 = vsel %vm801, %v683, 0
        %v806 = vsel %vm801, %v691, 0
        %v809 = vsel %vm801, %v699, 0
        %v812 = vsel %vm801, %v707, 0
        %v815 = vsel %vm801, %v715, 0
        %v818 = vsel %vm801, %v723, 0
        %v821 = vsel %vm801, %v731, 0
        %v824 = vsel %vm801, %v739, 0
        %v827 = vsel %vm801, %v747, 0
        %v830 = vsel %vm801, %v755, 0
        %v833 = vsel %vm801, %v763, 0
        %v836 = vsel %vm801, %v771, 0
        %v839 = vsel %vm801, %v779, 0
        %v842 = vsel %vm801, %v782, 0
        %vm844 = vcmask 1045504
        %v846 = vsel %vm844, %v797, 0
        %v849 = vsel %vm844, %v798, 0
        %851 = vmatpush.bf16.msra.mxu0 0
        %852 = vmatpush.bf16.msra.mxu0 0
        %853 = vmatpush.bf16.msra.mxu0 0
        %854 = vmatpush.bf16.msra.mxu0 0
        %855 = vmatpush.bf16.msra.mxu0 0
        %856 = vmatpush.bf16.msra.mxu0 0
        %857 = vmatpush.bf16.msra.mxu0 %v846
        %858 = vmatpush.bf16.msra.mxu0 %v795
        %859 = vmatmul.bf16.gmra.mxu0 %v803
        %v860 = vpop.f32.mrf.mxu0
        %v861 = vadd.f32 0.0, %v860
        %v862 = vpop.f32.mrf.mxu0
        %v863 = vadd.f32 0.0, %v862
        %864 = vmatmul.bf16.gmra.mxu0 %v806
        %v865 = vpop.f32.mrf.mxu0
        %v866 = vadd.f32 0.0, %v865
        %v867 = vpop.f32.mrf.mxu0
        %v868 = vadd.f32 0.0, %v867
        %869 = vmatmul.bf16.gmra.mxu0 %v809
        %v870 = vpop.f32.mrf.mxu0
        %v871 = vadd.f32 0.0, %v870
        %v872 = vpop.f32.mrf.mxu0
        %v873 = vadd.f32 0.0, %v872
        %874 = vmatmul.bf16.gmra.mxu0 %v812
        %v875 = vpop.f32.mrf.mxu0
        %v876 = vadd.f32 0.0, %v875
        %v877 = vpop.f32.mrf.mxu0
        %v878 = vadd.f32 0.0, %v877
        %879 = vmatmul.bf16.gmra.mxu0 %v815
        %v880 = vpop.f32.mrf.mxu0
        %v881 = vadd.f32 0.0, %v880
        %v882 = vpop.f32.mrf.mxu0
        %v883 = vadd.f32 0.0, %v882
        %884 = vmatmul.bf16.gmra.mxu0 %v818
        %v885 = vpop.f32.mrf.mxu0
        %v886 = vadd.f32 0.0, %v885
        %v887 = vpop.f32.mrf.mxu0
        %v888 = vadd.f32 0.0, %v887
        %889 = vmatmul.bf16.gmra.mxu0 %v821
        %v890 = vpop.f32.mrf.mxu0
        %v891 = vadd.f32 0.0, %v890
        %v892 = vpop.f32.mrf.mxu0
        %v893 = vadd.f32 0.0, %v892
        %894 = vmatmul.bf16.gmra.mxu0 %v824
        %v895 = vpop.f32.mrf.mxu0
        %v896 = vadd.f32 0.0, %v895
        %v897 = vpop.f32.mrf.mxu0
        %v898 = vadd.f32 0.0, %v897
        %899 = vmatmul.bf16.gmra.mxu0 %v827
        %v900 = vpop.f32.mrf.mxu0
        %v901 = vadd.f32 0.0, %v900
        %v902 = vpop.f32.mrf.mxu0
        %v903 = vadd.f32 0.0, %v902
        %904 = vmatmul.bf16.gmra.mxu0 %v830
        %v905 = vpop.f32.mrf.mxu0
        %v906 = vadd.f32 0.0, %v905
        %v907 = vpop.f32.mrf.mxu0
        %v908 = vadd.f32 0.0, %v907
        %909 = vmatmul.bf16.gmra.mxu0 %v833
        %v910 = vpop.f32.mrf.mxu0
        %v911 = vadd.f32 0.0, %v910
        %v912 = vpop.f32.mrf.mxu0
        %v913 = vadd.f32 0.0, %v912
        %914 = vmatmul.bf16.gmra.mxu0 %v836
        %v915 = vpop.f32.mrf.mxu0
        %v916 = vadd.f32 0.0, %v915
        %v917 = vpop.f32.mrf.mxu0
        %v918 = vadd.f32 0.0, %v917
        %919 = vmatmul.bf16.gmra.mxu0 %v839
        %v920 = vpop.f32.mrf.mxu0
        %v921 = vadd.f32 0.0, %v920
        %v922 = vpop.f32.mrf.mxu0
        %v923 = vadd.f32 0.0, %v922
        %924 = vmatmul.bf16.gmra.mxu0 %v842
        %v925 = vpop.f32.mrf.mxu0
        %v926 = vadd.f32 0.0, %v925
        %v927 = vpop.f32.mrf.mxu0
        %v928 = vadd.f32 0.0, %v927
        %929 = vdwg.mxu0
        %930 = vmatpush.bf16.msra.mxu0 0
        %931 = vmatpush.bf16.msra.mxu0 0
        %932 = vmatpush.bf16.msra.mxu0 0
        %933 = vmatpush.bf16.msra.mxu0 0
        %934 = vmatpush.bf16.msra.mxu0 0
        %935 = vmatpush.bf16.msra.mxu0 0
        %936 = vmatpush.bf16.msra.mxu0 %v849
        %937 = vmatpush.bf16.msra.mxu0 %v796
        %938 = vmatmul.bf16.gmra.mxu0 %v803
        %v939 = vpop.f32.mrf.mxu0
        %v940 = vadd.f32 0.0, %v939
        %v941 = vpop.f32.mrf.mxu0
        %v942 = vadd.f32 0.0, %v941
        %943 = vmatmul.bf16.gmra.mxu0 %v806
        %v944 = vpop.f32.mrf.mxu0
        %v945 = vadd.f32 0.0, %v944
        %v946 = vpop.f32.mrf.mxu0
        %v947 = vadd.f32 0.0, %v946
        %948 = vmatmul.bf16.gmra.mxu0 %v809
        %v949 = vpop.f32.mrf.mxu0
        %v950 = vadd.f32 0.0, %v949
        %v951 = vpop.f32.mrf.mxu0
        %v952 = vadd.f32 0.0, %v951
        %953 = vmatmul.bf16.gmra.mxu0 %v812
        %v954 = vpop.f32.mrf.mxu0
        %v955 = vadd.f32 0.0, %v954
        %v956 = vpop.f32.mrf.mxu0
        %v957 = vadd.f32 0.0, %v956
        %958 = vmatmul.bf16.gmra.mxu0 %v815
        %v959 = vpop.f32.mrf.mxu0
        %v960 = vadd.f32 0.0, %v959
        %v961 = vpop.f32.mrf.mxu0
        %v962 = vadd.f32 0.0, %v961
        %963 = vmatmul.bf16.gmra.mxu0 %v818
        %v964 = vpop.f32.mrf.mxu0
        %v965 = vadd.f32 0.0, %v964
        %v966 = vpop.f32.mrf.mxu0
        %v967 = vadd.f32 0.0, %v966
        %968 = vmatmul.bf16.gmra.mxu0 %v821
        %v969 = vpop.f32.mrf.mxu0
        %v970 = vadd.f32 0.0, %v969
        %v971 = vpop.f32.mrf.mxu0
        %v972 = vadd.f32 0.0, %v971
        %973 = vmatmul.bf16.gmra.mxu0 %v824
        %v974 = vpop.f32.mrf.mxu0
        %v975 = vadd.f32 0.0, %v974
        %v976 = vpop.f32.mrf.mxu0
        %v977 = vadd.f32 0.0, %v976
        %978 = vmatmul.bf16.gmra.mxu0 %v827
        %v979 = vpop.f32.mrf.mxu0
        %v980 = vadd.f32 0.0, %v979
        %v981 = vpop.f32.mrf.mxu0
        %v982 = vadd.f32 0.0, %v981
        %983 = vmatmul.bf16.gmra.mxu0 %v830
        %v984 = vpop.f32.mrf.mxu0
        %v985 = vadd.f32 0.0, %v984
        %v986 = vpop.f32.mrf.mxu0
        %v987 = vadd.f32 0.0, %v986
        %988 = vmatmul.bf16.gmra.mxu0 %v833
        %v989 = vpop.f32.mrf.mxu0
        %v990 = vadd.f32 0.0, %v989
        %v991 = vpop.f32.mrf.mxu0
        %v992 = vadd.f32 0.0, %v991
        %993 = vmatmul.bf16.gmra.mxu0 %v836
        %v994 = vpop.f32.mrf.mxu0
        %v995 = vadd.f32 0.0, %v994
        %v996 = vpop.f32.mrf.mxu0
        %v997 = vadd.f32 0.0, %v996
        %998 = vmatmul.bf16.gmra.mxu0 %v839
        %v999 = vpop.f32.mrf.mxu0
        %v1000 = vadd.f32 0.0, %v999
        %v1001 = vpop.f32.mrf.mxu0
        %v1002 = vadd.f32 0.0, %v1001
        %1003 = vmatmul.bf16.gmra.mxu0 %v842
        %v1004 = vpop.f32.mrf.mxu0
        %v1005 = vadd.f32 0.0, %v1004
        %v1006 = vpop.f32.mrf.mxu0
        %v1007 = vadd.f32 0.0, %v1006
        %1008 = vdwg.mxu0
        %v1013 = vunpack.c.l.b16 %v592
        %v1014 = vunpack.c.h.b16 %v592
        %v1015 = vunpack.c.l.b16 %v593
        %v1016 = vunpack.c.h.b16 %v593
        %v1017 = vunpack.c.l.b16 %v594
        %v1018 = vunpack.c.h.b16 %v594
        %v1019 = vunpack.c.l.b16 %v595
        %v1020 = vunpack.c.h.b16 %v595
        %v1021 = vpack.c.b16 %v1015, %v1013
        %v1022 = vpack.c.b16 %v1016, %v1014
        %v1023 = vpack.c.b16 %v1019, %v1017
        %v1024 = vpack.c.b16 %v1020, %v1018
        %v1027 = vsel %vm801, %v657, 0
        %v1029 = vsel %vm801, %v658, 0
        %v1031 = vsel %vm801, %v659, 0
        %v1033 = vsel %vm801, %v660, 0
        %v1035 = vsel %vm801, %v661, 0
        %v1037 = vsel %vm801, %v662, 0
        %v1039 = vsel %vm801, %v663, 0
        %v1041 = vsel %vm801, %v664, 0
        %v1043 = vsel %vm801, %v665, 0
        %v1045 = vsel %vm801, %v666, 0
        %v1047 = vsel %vm801, %v667, 0
        %v1049 = vsel %vm801, %v668, 0
        %v1051 = vsel %vm801, %v669, 0
        %v1053 = vsel %vm801, %v670, 0
        %v1056 = vsel %vm844, %v1023, 0
        %v1059 = vsel %vm844, %v1024, 0
        %1061 = vmatpush.bf16.msra.mxu0 0
        %1062 = vmatpush.bf16.msra.mxu0 0
        %1063 = vmatpush.bf16.msra.mxu0 0
        %1064 = vmatpush.bf16.msra.mxu0 0
        %1065 = vmatpush.bf16.msra.mxu0 0
        %1066 = vmatpush.bf16.msra.mxu0 0
        %1067 = vmatpush.bf16.msra.mxu0 %v1056
        %1068 = vmatpush.bf16.msra.mxu0 %v1021
        %1069 = vmatmul.bf16.gmra.mxu0 %v1027
        %v1070 = vpop.f32.mrf.mxu0
        %v1071 = vadd.f32 %v861, %v1070
        %v1072 = vpop.f32.mrf.mxu0
        %v1073 = vadd.f32 %v863, %v1072
        %1074 = vmatmul.bf16.gmra.mxu0 %v1029
        %v1075 = vpop.f32.mrf.mxu0
        %v1076 = vadd.f32 %v866, %v1075
        %v1077 = vpop.f32.mrf.mxu0
        %v1078 = vadd.f32 %v868, %v1077
        %1079 = vmatmul.bf16.gmra.mxu0 %v1031
        %v1080 = vpop.f32.mrf.mxu0
        %v1081 = vadd.f32 %v871, %v1080
        %v1082 = vpop.f32.mrf.mxu0
        %v1083 = vadd.f32 %v873, %v1082
        %1084 = vmatmul.bf16.gmra.mxu0 %v1033
        %v1085 = vpop.f32.mrf.mxu0
        %v1086 = vadd.f32 %v876, %v1085
        %v1087 = vpop.f32.mrf.mxu0
        %v1088 = vadd.f32 %v878, %v1087
        %1089 = vmatmul.bf16.gmra.mxu0 %v1035
        %v1090 = vpop.f32.mrf.mxu0
        %v1091 = vadd.f32 %v881, %v1090
        %v1092 = vpop.f32.mrf.mxu0
        %v1093 = vadd.f32 %v883, %v1092
        %1094 = vmatmul.bf16.gmra.mxu0 %v1037
        %v1095 = vpop.f32.mrf.mxu0
        %v1096 = vadd.f32 %v886, %v1095
        %v1097 = vpop.f32.mrf.mxu0
        %v1098 = vadd.f32 %v888, %v1097
        %1099 = vmatmul.bf16.gmra.mxu0 %v1039
        %v1100 = vpop.f32.mrf.mxu0
        %v1101 = vadd.f32 %v891, %v1100
        %v1102 = vpop.f32.mrf.mxu0
        %v1103 = vadd.f32 %v893, %v1102
        %1104 = vmatmul.bf16.gmra.mxu0 %v1041
        %v1105 = vpop.f32.mrf.mxu0
        %v1106 = vadd.f32 %v896, %v1105
        %v1107 = vpop.f32.mrf.mxu0
        %v1108 = vadd.f32 %v898, %v1107
        %1109 = vmatmul.bf16.gmra.mxu0 %v1043
        %v1110 = vpop.f32.mrf.mxu0
        %v1111 = vadd.f32 %v901, %v1110
        %v1112 = vpop.f32.mrf.mxu0
        %v1113 = vadd.f32 %v903, %v1112
        %1114 = vmatmul.bf16.gmra.mxu0 %v1045
        %v1115 = vpop.f32.mrf.mxu0
        %v1116 = vadd.f32 %v906, %v1115
        %v1117 = vpop.f32.mrf.mxu0
        %v1118 = vadd.f32 %v908, %v1117
        %1119 = vmatmul.bf16.gmra.mxu0 %v1047
        %v1120 = vpop.f32.mrf.mxu0
        %v1121 = vadd.f32 %v911, %v1120
        %v1122 = vpop.f32.mrf.mxu0
        %v1123 = vadd.f32 %v913, %v1122
        %1124 = vmatmul.bf16.gmra.mxu0 %v1049
        %v1125 = vpop.f32.mrf.mxu0
        %v1126 = vadd.f32 %v916, %v1125
        %v1127 = vpop.f32.mrf.mxu0
        %v1128 = vadd.f32 %v918, %v1127
        %1129 = vmatmul.bf16.gmra.mxu0 %v1051
        %v1130 = vpop.f32.mrf.mxu0
        %v1131 = vadd.f32 %v921, %v1130
        %v1132 = vpop.f32.mrf.mxu0
        %v1133 = vadd.f32 %v923, %v1132
        %1134 = vmatmul.bf16.gmra.mxu0 %v1053
        %v1135 = vpop.f32.mrf.mxu0
        %v1136 = vadd.f32 %v926, %v1135
        %v1137 = vpop.f32.mrf.mxu0
        %v1138 = vadd.f32 %v928, %v1137
        %1139 = vdwg.mxu0
        %1140 = vmatpush.bf16.msra.mxu0 0
        %1141 = vmatpush.bf16.msra.mxu0 0
        %1142 = vmatpush.bf16.msra.mxu0 0
        %1143 = vmatpush.bf16.msra.mxu0 0
        %1144 = vmatpush.bf16.msra.mxu0 0
        %1145 = vmatpush.bf16.msra.mxu0 0
        %1146 = vmatpush.bf16.msra.mxu0 %v1059
        %1147 = vmatpush.bf16.msra.mxu0 %v1022
        %1148 = vmatmul.bf16.gmra.mxu0 %v1027
        %v1149 = vpop.f32.mrf.mxu0
        %v1150 = vadd.f32 %v940, %v1149
        %v1151 = vpop.f32.mrf.mxu0
        %v1152 = vadd.f32 %v942, %v1151
        %1153 = vmatmul.bf16.gmra.mxu0 %v1029
        %v1154 = vpop.f32.mrf.mxu0
        %v1155 = vadd.f32 %v945, %v1154
        %v1156 = vpop.f32.mrf.mxu0
        %v1157 = vadd.f32 %v947, %v1156
        %1158 = vmatmul.bf16.gmra.mxu0 %v1031
        %v1159 = vpop.f32.mrf.mxu0
        %v1160 = vadd.f32 %v950, %v1159
        %v1161 = vpop.f32.mrf.mxu0
        %v1162 = vadd.f32 %v952, %v1161
        %1163 = vmatmul.bf16.gmra.mxu0 %v1033
        %v1164 = vpop.f32.mrf.mxu0
        %v1165 = vadd.f32 %v955, %v1164
        %v1166 = vpop.f32.mrf.mxu0
        %v1167 = vadd.f32 %v957, %v1166
        %1168 = vmatmul.bf16.gmra.mxu0 %v1035
        %v1169 = vpop.f32.mrf.mxu0
        %v1170 = vadd.f32 %v960, %v1169
        %v1171 = vpop.f32.mrf.mxu0
        %v1172 = vadd.f32 %v962, %v1171
        %1173 = vmatmul.bf16.gmra.mxu0 %v1037
        %v1174 = vpop.f32.mrf.mxu0
        %v1175 = vadd.f32 %v965, %v1174
        %v1176 = vpop.f32.mrf.mxu0
        %v1177 = vadd.f32 %v967, %v1176
        %1178 = vmatmul.bf16.gmra.mxu0 %v1039
        %v1179 = vpop.f32.mrf.mxu0
        %v1180 = vadd.f32 %v970, %v1179
        %v1181 = vpop.f32.mrf.mxu0
        %v1182 = vadd.f32 %v972, %v1181
        %1183 = vmatmul.bf16.gmra.mxu0 %v1041
        %v1184 = vpop.f32.mrf.mxu0
        %v1185 = vadd.f32 %v975, %v1184
        %v1186 = vpop.f32.mrf.mxu0
        %v1187 = vadd.f32 %v977, %v1186
        %1188 = vmatmul.bf16.gmra.mxu0 %v1043
        %v1189 = vpop.f32.mrf.mxu0
        %v1190 = vadd.f32 %v980, %v1189
        %v1191 = vpop.f32.mrf.mxu0
        %v1192 = vadd.f32 %v982, %v1191
        %1193 = vmatmul.bf16.gmra.mxu0 %v1045
        %v1194 = vpop.f32.mrf.mxu0
        %v1195 = vadd.f32 %v985, %v1194
        %v1196 = vpop.f32.mrf.mxu0
        %v1197 = vadd.f32 %v987, %v1196
        %1198 = vmatmul.bf16.gmra.mxu0 %v1047
        %v1199 = vpop.f32.mrf.mxu0
        %v1200 = vadd.f32 %v990, %v1199
        %v1201 = vpop.f32.mrf.mxu0
        %v1202 = vadd.f32 %v992, %v1201
        %1203 = vmatmul.bf16.gmra.mxu0 %v1049
        %v1204 = vpop.f32.mrf.mxu0
        %v1205 = vadd.f32 %v995, %v1204
        %v1206 = vpop.f32.mrf.mxu0
        %v1207 = vadd.f32 %v997, %v1206
        %1208 = vmatmul.bf16.gmra.mxu0 %v1051
        %v1209 = vpop.f32.mrf.mxu0
        %v1210 = vadd.f32 %v1000, %v1209
        %v1211 = vpop.f32.mrf.mxu0
        %v1212 = vadd.f32 %v1002, %v1211
        %1213 = vmatmul.bf16.gmra.mxu0 %v1053
        %v1214 = vpop.f32.mrf.mxu0
        %v1215 = vadd.f32 %v1005, %v1214
        %v1216 = vpop.f32.mrf.mxu0
        %v1217 = vadd.f32 %v1007, %v1216
        %1218 = vdwg.mxu0
        %s1219 = scalar_lea.vmem [#allocation2], 64
        %v1220 = vld [vmem:[%s1219] sm:$0xff]
        %v1221 = vld [vmem:[%s1219 + $0x8] sm:$0xff]
        %v1222 = vld [vmem:[%s1219 + $0x10] sm:$0xff]
        %v1223 = vld [vmem:[%s1219 + $0x18] sm:$0x33]
        %vm1224 = vcmask 1046528
        %v1225 = vrot.slane %v657, 1
        %v1226 = vrot.slane %v658, 1
        %v1227 = vsel %vm1224, %v1225, %v1226
        %v1228 = vrot.slane %v659, 1
        %v1229 = vsel %vm1224, %v1226, %v1228
        %v1230 = vrot.slane %v660, 1
        %v1231 = vsel %vm1224, %v1228, %v1230
        %v1232 = vrot.slane %v661, 1
        %v1233 = vsel %vm1224, %v1230, %v1232
        %v1234 = vrot.slane %v662, 1
        %v1235 = vsel %vm1224, %v1232, %v1234
        %v1236 = vrot.slane %v663, 1
        %v1237 = vsel %vm1224, %v1234, %v1236
        %v1238 = vrot.slane %v664, 1
        %v1239 = vsel %vm1224, %v1236, %v1238
        %v1240 = vrot.slane %v665, 1
        %v1241 = vsel %vm1224, %v1238, %v1240
        %v1242 = vrot.slane %v666, 1
        %v1243 = vsel %vm1224, %v1240, %v1242
        %v1244 = vrot.slane %v667, 1
        %v1245 = vsel %vm1224, %v1242, %v1244
        %v1246 = vrot.slane %v668, 1
        %v1247 = vsel %vm1224, %v1244, %v1246
        %v1248 = vrot.slane %v669, 1
        %v1249 = vsel %vm1224, %v1246, %v1248
        %v1250 = vrot.slane %v670, 1
        %v1251 = vsel %vm1224, %v1248, %v1250
        %v1256 = vunpack.c.l.b16 %v1220
        %v1257 = vunpack.c.h.b16 %v1220
        %v1258 = vunpack.c.l.b16 %v1221
        %v1259 = vunpack.c.h.b16 %v1221
        %v1260 = vunpack.c.l.b16 %v1222
        %v1261 = vunpack.c.h.b16 %v1222
        %v1262 = vunpack.c.l.b16 %v1223
        %v1263 = vunpack.c.h.b16 %v1223
        %v1264 = vpack.c.b16 %v1258, %v1256
        %v1265 = vpack.c.b16 %v1259, %v1257
        %v1266 = vpack.c.b16 %v1262, %v1260
        %v1267 = vpack.c.b16 %v1263, %v1261
        %v1271 = vsel %vm801, %v1227, 0
        %v1274 = vsel %vm801, %v1229, 0
        %v1277 = vsel %vm801, %v1231, 0
        %v1280 = vsel %vm801, %v1233, 0
        %v1283 = vsel %vm801, %v1235, 0
        %v1286 = vsel %vm801, %v1237, 0
        %v1289 = vsel %vm801, %v1239, 0
        %v1292 = vsel %vm801, %v1241, 0
        %v1295 = vsel %vm801, %v1243, 0
        %v1298 = vsel %vm801, %v1245, 0
        %v1301 = vsel %vm801, %v1247, 0
        %v1304 = vsel %vm801, %v1249, 0
        %v1307 = vsel %vm801, %v1251, 0
        %v1310 = vsel %vm801, %v1250, 0
        %v1313 = vsel %vm844, %v1266, 0
        %v1316 = vsel %vm844, %v1267, 0
        %1318 = vmatpush.bf16.msra.mxu0 0
        %1319 = vmatpush.bf16.msra.mxu0 0
        %1320 = vmatpush.bf16.msra.mxu0 0
        %1321 = vmatpush.bf16.msra.mxu0 0
        %1322 = vmatpush.bf16.msra.mxu0 0
        %1323 = vmatpush.bf16.msra.mxu0 0
        %1324 = vmatpush.bf16.msra.mxu0 %v1313
        %1325 = vmatpush.bf16.msra.mxu0 %v1264
        %1326 = vmatmul.bf16.gmra.mxu0 %v1271
        %v1327 = vpop.f32.mrf.mxu0
        %v1328 = vadd.f32 0.0, %v1327
        %v1329 = vpop.f32.mrf.mxu0
        %v1330 = vadd.f32 0.0, %v1329
        %1331 = vmatmul.bf16.gmra.mxu0 %v1274
        %v1332 = vpop.f32.mrf.mxu0
        %v1333 = vadd.f32 0.0, %v1332
        %v1334 = vpop.f32.mrf.mxu0
        %v1335 = vadd.f32 0.0, %v1334
        %1336 = vmatmul.bf16.gmra.mxu0 %v1277
        %v1337 = vpop.f32.mrf.mxu0
        %v1338 = vadd.f32 0.0, %v1337
        %v1339 = vpop.f32.mrf.mxu0
        %v1340 = vadd.f32 0.0, %v1339
        %1341 = vmatmul.bf16.gmra.mxu0 %v1280
        %v1342 = vpop.f32.mrf.mxu0
        %v1343 = vadd.f32 0.0, %v1342
        %v1344 = vpop.f32.mrf.mxu0
        %v1345 = vadd.f32 0.0, %v1344
        %1346 = vmatmul.bf16.gmra.mxu0 %v1283
        %v1347 = vpop.f32.mrf.mxu0
        %v1348 = vadd.f32 0.0, %v1347
        %v1349 = vpop.f32.mrf.mxu0
        %v1350 = vadd.f32 0.0, %v1349
        %1351 = vmatmul.bf16.gmra.mxu0 %v1286
        %v1352 = vpop.f32.mrf.mxu0
        %v1353 = vadd.f32 0.0, %v1352
        %v1354 = vpop.f32.mrf.mxu0
        %v1355 = vadd.f32 0.0, %v1354
        %1356 = vmatmul.bf16.gmra.mxu0 %v1289
        %v1357 = vpop.f32.mrf.mxu0
        %v1358 = vadd.f32 0.0, %v1357
        %v1359 = vpop.f32.mrf.mxu0
        %v1360 = vadd.f32 0.0, %v1359
        %1361 = vmatmul.bf16.gmra.mxu0 %v1292
        %v1362 = vpop.f32.mrf.mxu0
        %v1363 = vadd.f32 0.0, %v1362
        %v1364 = vpop.f32.mrf.mxu0
        %v1365 = vadd.f32 0.0, %v1364
        %1366 = vmatmul.bf16.gmra.mxu0 %v1295
        %v1367 = vpop.f32.mrf.mxu0
        %v1368 = vadd.f32 0.0, %v1367
        %v1369 = vpop.f32.mrf.mxu0
        %v1370 = vadd.f32 0.0, %v1369
        %1371 = vmatmul.bf16.gmra.mxu0 %v1298
        %v1372 = vpop.f32.mrf.mxu0
        %v1373 = vadd.f32 0.0, %v1372
        %v1374 = vpop.f32.mrf.mxu0
        %v1375 = vadd.f32 0.0, %v1374
        %1376 = vmatmul.bf16.gmra.mxu0 %v1301
        %v1377 = vpop.f32.mrf.mxu0
        %v1378 = vadd.f32 0.0, %v1377
        %v1379 = vpop.f32.mrf.mxu0
        %v1380 = vadd.f32 0.0, %v1379
        %1381 = vmatmul.bf16.gmra.mxu0 %v1304
        %v1382 = vpop.f32.mrf.mxu0
        %v1383 = vadd.f32 0.0, %v1382
        %v1384 = vpop.f32.mrf.mxu0
        %v1385 = vadd.f32 0.0, %v1384
        %1386 = vmatmul.bf16.gmra.mxu0 %v1307
        %v1387 = vpop.f32.mrf.mxu0
        %v1388 = vadd.f32 0.0, %v1387
        %v1389 = vpop.f32.mrf.mxu0
        %v1390 = vadd.f32 0.0, %v1389
        %1391 = vmatmul.bf16.gmra.mxu0 %v1310
        %v1392 = vpop.f32.mrf.mxu0
        %v1393 = vadd.f32 0.0, %v1392
        %v1394 = vpop.f32.mrf.mxu0
        %v1395 = vadd.f32 0.0, %v1394
        %1396 = vdwg.mxu0
        %1397 = vmatpush.bf16.msra.mxu0 0
        %1398 = vmatpush.bf16.msra.mxu0 0
        %1399 = vmatpush.bf16.msra.mxu0 0
        %1400 = vmatpush.bf16.msra.mxu0 0
        %1401 = vmatpush.bf16.msra.mxu0 0
        %1402 = vmatpush.bf16.msra.mxu0 0
        %1403 = vmatpush.bf16.msra.mxu0 %v1316
        %1404 = vmatpush.bf16.msra.mxu0 %v1265
        %1405 = vmatmul.bf16.gmra.mxu0 %v1271
        %v1406 = vpop.f32.mrf.mxu0
        %v1407 = vadd.f32 0.0, %v1406
        %v1408 = vpop.f32.mrf.mxu0
        %v1409 = vadd.f32 0.0, %v1408
        %1410 = vmatmul.bf16.gmra.mxu0 %v1274
        %v1411 = vpop.f32.mrf.mxu0
        %v1412 = vadd.f32 0.0, %v1411
        %v1413 = vpop.f32.mrf.mxu0
        %v1414 = vadd.f32 0.0, %v1413
        %1415 = vmatmul.bf16.gmra.mxu0 %v1277
        %v1416 = vpop.f32.mrf.mxu0
        %v1417 = vadd.f32 0.0, %v1416
        %v1418 = vpop.f32.mrf.mxu0
        %v1419 = vadd.f32 0.0, %v1418
        %1420 = vmatmul.bf16.gmra.mxu0 %v1280
        %v1421 = vpop.f32.mrf.mxu0
        %v1422 = vadd.f32 0.0, %v1421
        %v1423 = vpop.f32.mrf.mxu0
        %v1424 = vadd.f32 0.0, %v1423
        %1425 = vmatmul.bf16.gmra.mxu0 %v1283
        %v1426 = vpop.f32.mrf.mxu0
        %v1427 = vadd.f32 0.0, %v1426
        %v1428 = vpop.f32.mrf.mxu0
        %v1429 = vadd.f32 0.0, %v1428
        %1430 = vmatmul.bf16.gmra.mxu0 %v1286
        %v1431 = vpop.f32.mrf.mxu0
        %v1432 = vadd.f32 0.0, %v1431
        %v1433 = vpop.f32.mrf.mxu0
        %v1434 = vadd.f32 0.0, %v1433
        %1435 = vmatmul.bf16.gmra.mxu0 %v1289
        %v1436 = vpop.f32.mrf.mxu0
        %v1437 = vadd.f32 0.0, %v1436
        %v1438 = vpop.f32.mrf.mxu0
        %v1439 = vadd.f32 0.0, %v1438
        %1440 = vmatmul.bf16.gmra.mxu0 %v1292
        %v1441 = vpop.f32.mrf.mxu0
        %v1442 = vadd.f32 0.0, %v1441
        %v1443 = vpop.f32.mrf.mxu0
        %v1444 = vadd.f32 0.0, %v1443
        %1445 = vmatmul.bf16.gmra.mxu0 %v1295
        %v1446 = vpop.f32.mrf.mxu0
        %v1447 = vadd.f32 0.0, %v1446
        %v1448 = vpop.f32.mrf.mxu0
        %v1449 = vadd.f32 0.0, %v1448
        %1450 = vmatmul.bf16.gmra.mxu0 %v1298
        %v1451 = vpop.f32.mrf.mxu0
        %v1452 = vadd.f32 0.0, %v1451
        %v1453 = vpop.f32.mrf.mxu0
        %v1454 = vadd.f32 0.0, %v1453
        %1455 = vmatmul.bf16.gmra.mxu0 %v1301
        %v1456 = vpop.f32.mrf.mxu0
        %v1457 = vadd.f32 0.0, %v1456
        %v1458 = vpop.f32.mrf.mxu0
        %v1459 = vadd.f32 0.0, %v1458
        %1460 = vmatmul.bf16.gmra.mxu0 %v1304
        %v1461 = vpop.f32.mrf.mxu0
        %v1462 = vadd.f32 0.0, %v1461
        %v1463 = vpop.f32.mrf.mxu0
        %v1464 = vadd.f32 0.0, %v1463
        %1465 = vmatmul.bf16.gmra.mxu0 %v1307
        %v1466 = vpop.f32.mrf.mxu0
        %v1467 = vadd.f32 0.0, %v1466
        %v1468 = vpop.f32.mrf.mxu0
        %v1469 = vadd.f32 0.0, %v1468
        %1470 = vmatmul.bf16.gmra.mxu0 %v1310
        %v1471 = vpop.f32.mrf.mxu0
        %v1472 = vadd.f32 0.0, %v1471
        %v1473 = vpop.f32.mrf.mxu0
        %v1474 = vadd.f32 0.0, %v1473
        %1475 = vdwg.mxu0
        %v1476 = vadd.f32 %v1071, %v1328
        %v1477 = vadd.f32 %v1150, %v1407
        %v1478 = vadd.f32 %v1073, %v1330
        %v1479 = vadd.f32 %v1152, %v1409
        %v1480 = vadd.f32 %v1076, %v1333
        %v1481 = vadd.f32 %v1155, %v1412
        %v1482 = vadd.f32 %v1078, %v1335
        %v1483 = vadd.f32 %v1157, %v1414
        %v1484 = vadd.f32 %v1081, %v1338
        %v1485 = vadd.f32 %v1160, %v1417
        %v1486 = vadd.f32 %v1083, %v1340
        %v1487 = vadd.f32 %v1162, %v1419
        %v1488 = vadd.f32 %v1086, %v1343
        %v1489 = vadd.f32 %v1165, %v1422
        %v1490 = vadd.f32 %v1088, %v1345
        %v1491 = vadd.f32 %v1167, %v1424
        %v1492 = vadd.f32 %v1091, %v1348
        %v1493 = vadd.f32 %v1170, %v1427
        %v1494 = vadd.f32 %v1093, %v1350
        %v1495 = vadd.f32 %v1172, %v1429
        %v1496 = vadd.f32 %v1096, %v1353
        %v1497 = vadd.f32 %v1175, %v1432
        %v1498 = vadd.f32 %v1098, %v1355
        %v1499 = vadd.f32 %v1177, %v1434
        %v1500 = vadd.f32 %v1101, %v1358
        %v1501 = vadd.f32 %v1180, %v1437
        %v1502 = vadd.f32 %v1103, %v1360
        %v1503 = vadd.f32 %v1182, %v1439
        %v1504 = vadd.f32 %v1106, %v1363
        %v1505 = vadd.f32 %v1185, %v1442
        %v1506 = vadd.f32 %v1108, %v1365
        %v1507 = vadd.f32 %v1187, %v1444
        %v1508 = vadd.f32 %v1111, %v1368
        %v1509 = vadd.f32 %v1190, %v1447
        %v1510 = vadd.f32 %v1113, %v1370
        %v1511 = vadd.f32 %v1192, %v1449
        %v1512 = vadd.f32 %v1116, %v1373
        %v1513 = vadd.f32 %v1195, %v1452
        %v1514 = vadd.f32 %v1118, %v1375
        %v1515 = vadd.f32 %v1197, %v1454
        %v1516 = vadd.f32 %v1121, %v1378
        %v1517 = vadd.f32 %v1200, %v1457
        %v1518 = vadd.f32 %v1123, %v1380
        %v1519 = vadd.f32 %v1202, %v1459
        %v1520 = vadd.f32 %v1126, %v1383
        %v1521 = vadd.f32 %v1205, %v1462
        %v1522 = vadd.f32 %v1128, %v1385
        %v1523 = vadd.f32 %v1207, %v1464
        %v1524 = vadd.f32 %v1131, %v1388
        %v1525 = vadd.f32 %v1210, %v1467
        %v1526 = vadd.f32 %v1133, %v1390
        %v1527 = vadd.f32 %v1212, %v1469
        %v1528 = vadd.f32 %v1136, %v1393
        %v1529 = vadd.f32 %v1215, %v1472
        %v1530 = vadd.f32 %v1138, %v1395
        %v1531 = vadd.f32 %v1217, %v1474
        %v1532 = vld [vmem:[%s2] sm:$0x3]
        %v1534 = vperm.slane %v1532, 0
        %v1535 = vperm.slane %v1532, 1
        %v1538 = vadd.f32 %v1476, %v1534
        %v1539 = vadd.f32 %v1477, %v1535
        %v1540 = vadd.f32 %v1478, %v1534
        %v1541 = vadd.f32 %v1479, %v1535
        %v1542 = vadd.f32 %v1480, %v1534
        %v1543 = vadd.f32 %v1481, %v1535
        %v1544 = vadd.f32 %v1482, %v1534
        %v1545 = vadd.f32 %v1483, %v1535
        %v1546 = vadd.f32 %v1484, %v1534
        %v1547 = vadd.f32 %v1485, %v1535
        %v1548 = vadd.f32 %v1486, %v1534
        %v1549 = vadd.f32 %v1487, %v1535
        %v1550 = vadd.f32 %v1488, %v1534
        %v1551 = vadd.f32 %v1489, %v1535
        %v1552 = vadd.f32 %v1490, %v1534
        %v1553 = vadd.f32 %v1491, %v1535
        %v1554 = vadd.f32 %v1492, %v1534
        %v1555 = vadd.f32 %v1493, %v1535
        %v1556 = vadd.f32 %v1494, %v1534
        %v1557 = vadd.f32 %v1495, %v1535
        %v1558 = vadd.f32 %v1496, %v1534
        %v1559 = vadd.f32 %v1497, %v1535
        %v1560 = vadd.f32 %v1498, %v1534
        %v1561 = vadd.f32 %v1499, %v1535
        %v1562 = vadd.f32 %v1500, %v1534
        %v1563 = vadd.f32 %v1501, %v1535
        %v1564 = vadd.f32 %v1502, %v1534
        %v1565 = vadd.f32 %v1503, %v1535
        %v1566 = vadd.f32 %v1504, %v1534
        %v1567 = vadd.f32 %v1505, %v1535
        %v1568 = vadd.f32 %v1506, %v1534
        %v1569 = vadd.f32 %v1507, %v1535
        %v1570 = vadd.f32 %v1508, %v1534
        %v1571 = vadd.f32 %v1509, %v1535
        %v1572 = vadd.f32 %v1510, %v1534
        %v1573 = vadd.f32 %v1511, %v1535
        %v1574 = vadd.f32 %v1512, %v1534
        %v1575 = vadd.f32 %v1513, %v1535
        %v1576 = vadd.f32 %v1514, %v1534
        %v1577 = vadd.f32 %v1515, %v1535
        %v1578 = vadd.f32 %v1516, %v1534
        %v1579 = vadd.f32 %v1517, %v1535
        %v1580 = vadd.f32 %v1518, %v1534
        %v1581 = vadd.f32 %v1519, %v1535
        %v1582 = vadd.f32 %v1520, %v1534
        %v1583 = vadd.f32 %v1521, %v1535
        %v1584 = vadd.f32 %v1522, %v1534
        %v1585 = vadd.f32 %v1523, %v1535
        %v1586 = vadd.f32 %v1524, %v1534
        %v1587 = vadd.f32 %v1525, %v1535
        %v1588 = vadd.f32 %v1526, %v1534
        %v1589 = vadd.f32 %v1527, %v1535
        %v1590 = vadd.f32 %v1528, %v1534
        %v1591 = vadd.f32 %v1529, %v1535
        %v1592 = vadd.f32 %v1530, %v1534
        %v1593 = vadd.f32 %v1531, %v1535
        %v1594 = vmax.f32 %v1538, 0.0
        %v1595 = vmax.f32 %v1539, 0.0
        %v1596 = vmax.f32 %v1540, 0.0
        %v1597 = vmax.f32 %v1541, 0.0
        %v1598 = vmax.f32 %v1542, 0.0
        %v1599 = vmax.f32 %v1543, 0.0
        %v1600 = vmax.f32 %v1544, 0.0
        %v1601 = vmax.f32 %v1545, 0.0
        %v1602 = vmax.f32 %v1546, 0.0
        %v1603 = vmax.f32 %v1547, 0.0
        %v1604 = vmax.f32 %v1548, 0.0
        %v1605 = vmax.f32 %v1549, 0.0
        %v1606 = vmax.f32 %v1550, 0.0
        %v1607 = vmax.f32 %v1551, 0.0
        %v1608 = vmax.f32 %v1552, 0.0
        %v1609 = vmax.f32 %v1553, 0.0
        %v1610 = vmax.f32 %v1554, 0.0
        %v1611 = vmax.f32 %v1555, 0.0
        %v1612 = vmax.f32 %v1556, 0.0
        %v1613 = vmax.f32 %v1557, 0.0
        %v1614 = vmax.f32 %v1558, 0.0
        %v1615 = vmax.f32 %v1559, 0.0
        %v1616 = vmax.f32 %v1560, 0.0
        %v1617 = vmax.f32 %v1561, 0.0
        %v1618 = vmax.f32 %v1562, 0.0
        %v1619 = vmax.f32 %v1563, 0.0
        %v1620 = vmax.f32 %v1564, 0.0
        %v1621 = vmax.f32 %v1565, 0.0
        %v1622 = vmax.f32 %v1566, 0.0
        %v1623 = vmax.f32 %v1567, 0.0
        %v1624 = vmax.f32 %v1568, 0.0
        %v1625 = vmax.f32 %v1569, 0.0
        %v1626 = vmax.f32 %v1570, 0.0
        %v1627 = vmax.f32 %v1571, 0.0
        %v1628 = vmax.f32 %v1572, 0.0
        %v1629 = vmax.f32 %v1573, 0.0
        %v1630 = vmax.f32 %v1574, 0.0
        %v1631 = vmax.f32 %v1575, 0.0
        %v1632 = vmax.f32 %v1576, 0.0
        %v1633 = vmax.f32 %v1577, 0.0
        %v1634 = vmax.f32 %v1578, 0.0
        %v1635 = vmax.f32 %v1579, 0.0
        %v1636 = vmax.f32 %v1580, 0.0
        %v1637 = vmax.f32 %v1581, 0.0
        %v1638 = vmax.f32 %v1582, 0.0
        %v1639 = vmax.f32 %v1583, 0.0
        %v1640 = vmax.f32 %v1584, 0.0
        %v1641 = vmax.f32 %v1585, 0.0
        %v1642 = vmax.f32 %v1586, 0.0
        %v1643 = vmax.f32 %v1587, 0.0
        %v1644 = vmax.f32 %v1588, 0.0
        %v1645 = vmax.f32 %v1589, 0.0
        %v1646 = vmax.f32 %v1590, 0.0
        %v1647 = vmax.f32 %v1591, 0.0
        %v1648 = vmax.f32 %v1592, 0.0
        %v1649 = vmax.f32 %v1593, 0.0
        %vm1706 = vcmask 1046528
        %v1707 = vrot.slane %v1594, 1
        %v1708 = vrot.slane %v1596, 1
        %v1709 = vsel %vm1706, %v1707, %v1708
        %v1710 = vrot.slane %v1595, 1
        %v1711 = vrot.slane %v1597, 1
        %v1712 = vsel %vm1706, %v1710, %v1711
        %v1713 = vrot.slane %v1598, 1
        %v1714 = vsel %vm1706, %v1708, %v1713
        %v1715 = vrot.slane %v1599, 1
        %v1716 = vsel %vm1706, %v1711, %v1715
        %v1717 = vrot.slane %v1600, 1
        %v1718 = vsel %vm1706, %v1713, %v1717
        %v1719 = vrot.slane %v1601, 1
        %v1720 = vsel %vm1706, %v1715, %v1719
        %v1721 = vrot.slane %v1602, 1
        %v1722 = vsel %vm1706, %v1717, %v1721
        %v1723 = vrot.slane %v1603, 1
        %v1724 = vsel %vm1706, %v1719, %v1723
        %v1725 = vrot.slane %v1604, 1
        %v1726 = vsel %vm1706, %v1721, %v1725
        %v1727 = vrot.slane %v1605, 1
        %v1728 = vsel %vm1706, %v1723, %v1727
        %v1729 = vrot.slane %v1606, 1
        %v1730 = vsel %vm1706, %v1725, %v1729
        %v1731 = vrot.slane %v1607, 1
        %v1732 = vsel %vm1706, %v1727, %v1731
        %v1733 = vrot.slane %v1608, 1
        %v1734 = vsel %vm1706, %v1729, %v1733
        %v1735 = vrot.slane %v1609, 1
        %v1736 = vsel %vm1706, %v1731, %v1735
        %v1737 = vrot.slane %v1610, 1
        %v1738 = vsel %vm1706, %v1733, %v1737
        %v1739 = vrot.slane %v1611, 1
        %v1740 = vsel %vm1706, %v1735, %v1739
        %v1741 = vrot.slane %v1612, 1
        %v1742 = vsel %vm1706, %v1737, %v1741
        %v1743 = vrot.slane %v1613, 1
        %v1744 = vsel %vm1706, %v1739, %v1743
        %v1745 = vrot.slane %v1614, 1
        %v1746 = vsel %vm1706, %v1741, %v1745
        %v1747 = vrot.slane %v1615, 1
        %v1748 = vsel %vm1706, %v1743, %v1747
        %v1749 = vrot.slane %v1616, 1
        %v1750 = vsel %vm1706, %v1745, %v1749
        %v1751 = vrot.slane %v1617, 1
        %v1752 = vsel %vm1706, %v1747, %v1751
        %v1753 = vrot.slane %v1618, 1
        %v1754 = vsel %vm1706, %v1749, %v1753
        %v1755 = vrot.slane %v1619, 1
        %v1756 = vsel %vm1706, %v1751, %v1755
        %v1757 = vrot.slane %v1620, 1
        %v1758 = vsel %vm1706, %v1753, %v1757
        %v1759 = vrot.slane %v1621, 1
        %v1760 = vsel %vm1706, %v1755, %v1759
        %v1761 = vrot.slane %v1622, 1
        %v1762 = vsel %vm1706, %v1757, %v1761
        %v1763 = vrot.slane %v1623, 1
        %v1764 = vsel %vm1706, %v1759, %v1763
        %v1765 = vrot.slane %v1624, 1
        %v1766 = vsel %vm1706, %v1761, %v1765
        %v1767 = vrot.slane %v1625, 1
        %v1768 = vsel %vm1706, %v1763, %v1767
        %v1769 = vrot.slane %v1626, 1
        %v1770 = vsel %vm1706, %v1765, %v1769
        %v1771 = vrot.slane %v1627, 1
        %v1772 = vsel %vm1706, %v1767, %v1771
        %v1773 = vrot.slane %v1628, 1
        %v1774 = vsel %vm1706, %v1769, %v1773
        %v1775 = vrot.slane %v1629, 1
        %v1776 = vsel %vm1706, %v1771, %v1775
        %v1777 = vrot.slane %v1630, 1
        %v1778 = vsel %vm1706, %v1773, %v1777
        %v1779 = vrot.slane %v1631, 1
        %v1780 = vsel %vm1706, %v1775, %v1779
        %v1781 = vrot.slane %v1632, 1
        %v1782 = vsel %vm1706, %v1777, %v1781
        %v1783 = vrot.slane %v1633, 1
        %v1784 = vsel %vm1706, %v1779, %v1783
        %v1785 = vrot.slane %v1634, 1
        %v1786 = vsel %vm1706, %v1781, %v1785
        %v1787 = vrot.slane %v1635, 1
        %v1788 = vsel %vm1706, %v1783, %v1787
        %v1789 = vrot.slane %v1636, 1
        %v1790 = vsel %vm1706, %v1785, %v1789
        %v1791 = vrot.slane %v1637, 1
        %v1792 = vsel %vm1706, %v1787, %v1791
        %v1793 = vrot.slane %v1638, 1
        %v1794 = vsel %vm1706, %v1789, %v1793
        %v1795 = vrot.slane %v1639, 1
        %v1796 = vsel %vm1706, %v1791, %v1795
        %v1797 = vrot.slane %v1640, 1
        %v1798 = vsel %vm1706, %v1793, %v1797
        %v1799 = vrot.slane %v1641, 1
        %v1800 = vsel %vm1706, %v1795, %v1799
        %v1801 = vrot.slane %v1642, 1
        %v1802 = vsel %vm1706, %v1797, %v1801
        %v1803 = vrot.slane %v1643, 1
        %v1804 = vsel %vm1706, %v1799, %v1803
        %v1805 = vrot.slane %v1644, 1
        %v1806 = vsel %vm1706, %v1801, %v1805
        %v1807 = vrot.slane %v1645, 1
        %v1808 = vsel %vm1706, %v1803, %v1807
        %v1809 = vrot.slane %v1646, 1
        %v1810 = vsel %vm1706, %v1805, %v1809
        %v1811 = vrot.slane %v1647, 1
        %v1812 = vsel %vm1706, %v1807, %v1811
        %v1813 = vrot.slane %v1648, 1
        %v1814 = vsel %vm1706, %v1809, %v1813
        %v1815 = vrot.slane %v1649, 1
        %v1816 = vsel %vm1706, %v1811, %v1815
        %v1873 = vmax.f32 %v1594, %v1709
        %v1874 = vmax.f32 %v1595, %v1712
        %v1875 = vmax.f32 %v1596, %v1714
        %v1876 = vmax.f32 %v1597, %v1716
        %v1877 = vmax.f32 %v1598, %v1718
        %v1878 = vmax.f32 %v1599, %v1720
        %v1879 = vmax.f32 %v1600, %v1722
        %v1880 = vmax.f32 %v1601, %v1724
        %v1881 = vmax.f32 %v1602, %v1726
        %v1882 = vmax.f32 %v1603, %v1728
        %v1883 = vmax.f32 %v1604, %v1730
        %v1884 = vmax.f32 %v1605, %v1732
        %v1885 = vmax.f32 %v1606, %v1734
        %v1886 = vmax.f32 %v1607, %v1736
        %v1887 = vmax.f32 %v1608, %v1738
        %v1888 = vmax.f32 %v1609, %v1740
        %v1889 = vmax.f32 %v1610, %v1742
        %v1890 = vmax.f32 %v1611, %v1744
        %v1891 = vmax.f32 %v1612, %v1746
        %v1892 = vmax.f32 %v1613, %v1748
        %v1893 = vmax.f32 %v1614, %v1750
        %v1894 = vmax.f32 %v1615, %v1752
        %v1895 = vmax.f32 %v1616, %v1754
        %v1896 = vmax.f32 %v1617, %v1756
        %v1897 = vmax.f32 %v1618, %v1758
        %v1898 = vmax.f32 %v1619, %v1760
        %v1899 = vmax.f32 %v1620, %v1762
        %v1900 = vmax.f32 %v1621, %v1764
        %v1901 = vmax.f32 %v1622, %v1766
        %v1902 = vmax.f32 %v1623, %v1768
        %v1903 = vmax.f32 %v1624, %v1770
        %v1904 = vmax.f32 %v1625, %v1772
        %v1905 = vmax.f32 %v1626, %v1774
        %v1906 = vmax.f32 %v1627, %v1776
        %v1907 = vmax.f32 %v1628, %v1778
        %v1908 = vmax.f32 %v1629, %v1780
        %v1909 = vmax.f32 %v1630, %v1782
        %v1910 = vmax.f32 %v1631, %v1784
        %v1911 = vmax.f32 %v1632, %v1786
        %v1912 = vmax.f32 %v1633, %v1788
        %v1913 = vmax.f32 %v1634, %v1790
        %v1914 = vmax.f32 %v1635, %v1792
        %v1915 = vmax.f32 %v1636, %v1794
        %v1916 = vmax.f32 %v1637, %v1796
        %v1917 = vmax.f32 %v1638, %v1798
        %v1918 = vmax.f32 %v1639, %v1800
        %v1919 = vmax.f32 %v1640, %v1802
        %v1920 = vmax.f32 %v1641, %v1804
        %v1921 = vmax.f32 %v1642, %v1806
        %v1922 = vmax.f32 %v1643, %v1808
        %v1923 = vmax.f32 %v1644, %v1810
        %v1924 = vmax.f32 %v1645, %v1812
        %v1925 = vmax.f32 %v1646, %v1814
        %v1926 = vmax.f32 %v1647, %v1816
        %v1927 = vmax.f32 %v1648, %v1813
        %v1928 = vmax.f32 %v1649, %v1815
        %1985 = vrot.lane.b32.xlu0 %v1873, 120
        %v1986 = vpop.permute.xlu0 %1985
        %1987 = vrot.lane.b32.xlu0 %v1874, 120
        %v1988 = vpop.permute.xlu0 %1987
        %1989 = vrot.lane.b32.xlu0 %v1875, 120
        %v1990 = vpop.permute.xlu0 %1989
        %1991 = vrot.lane.b32.xlu0 %v1876, 120
        %v1992 = vpop.permute.xlu0 %1991
        %1993 = vrot.lane.b32.xlu0 %v1877, 120
        %v1994 = vpop.permute.xlu0 %1993
        %1995 = vrot.lane.b32.xlu0 %v1878, 120
        %v1996 = vpop.permute.xlu0 %1995
        %1997 = vrot.lane.b32.xlu0 %v1879, 120
        %v1998 = vpop.permute.xlu0 %1997
        %1999 = vrot.lane.b32.xlu0 %v1880, 120
        %v2000 = vpop.permute.xlu0 %1999
        %2001 = vrot.lane.b32.xlu0 %v1881, 120
        %v2002 = vpop.permute.xlu0 %2001
        %2003 = vrot.lane.b32.xlu0 %v1882, 120
        %v2004 = vpop.permute.xlu0 %2003
        %2005 = vrot.lane.b32.xlu0 %v1883, 120
        %v2006 = vpop.permute.xlu0 %2005
        %2007 = vrot.lane.b32.xlu0 %v1884, 120
        %v2008 = vpop.permute.xlu0 %2007
        %2009 = vrot.lane.b32.xlu0 %v1885, 120
        %v2010 = vpop.permute.xlu0 %2009
        %2011 = vrot.lane.b32.xlu0 %v1886, 120
        %v2012 = vpop.permute.xlu0 %2011
        %2013 = vrot.lane.b32.xlu0 %v1887, 120
        %v2014 = vpop.permute.xlu0 %2013
        %2015 = vrot.lane.b32.xlu0 %v1888, 120
        %v2016 = vpop.permute.xlu0 %2015
        %2017 = vrot.lane.b32.xlu0 %v1889, 120
        %v2018 = vpop.permute.xlu0 %2017
        %2019 = vrot.lane.b32.xlu0 %v1890, 120
        %v2020 = vpop.permute.xlu0 %2019
        %2021 = vrot.lane.b32.xlu0 %v1891, 120
        %v2022 = vpop.permute.xlu0 %2021
        %2023 = vrot.lane.b32.xlu0 %v1892, 120
        %v2024 = vpop.permute.xlu0 %2023
        %2025 = vrot.lane.b32.xlu0 %v1893, 120
        %v2026 = vpop.permute.xlu0 %2025
        %2027 = vrot.lane.b32.xlu0 %v1894, 120
        %v2028 = vpop.permute.xlu0 %2027
        %2029 = vrot.lane.b32.xlu0 %v1895, 120
        %v2030 = vpop.permute.xlu0 %2029
        %2031 = vrot.lane.b32.xlu0 %v1896, 120
        %v2032 = vpop.permute.xlu0 %2031
        %2033 = vrot.lane.b32.xlu0 %v1897, 120
        %v2034 = vpop.permute.xlu0 %2033
        %2035 = vrot.lane.b32.xlu0 %v1898, 120
        %v2036 = vpop.permute.xlu0 %2035
        %2037 = vrot.lane.b32.xlu0 %v1899, 120
        %v2038 = vpop.permute.xlu0 %2037
        %2039 = vrot.lane.b32.xlu0 %v1900, 120
        %v2040 = vpop.permute.xlu0 %2039
        %2041 = vrot.lane.b32.xlu0 %v1901, 120
        %v2042 = vpop.permute.xlu0 %2041
        %2043 = vrot.lane.b32.xlu0 %v1902, 120
        %v2044 = vpop.permute.xlu0 %2043
        %2045 = vrot.lane.b32.xlu0 %v1903, 120
        %v2046 = vpop.permute.xlu0 %2045
        %2047 = vrot.lane.b32.xlu0 %v1904, 120
        %v2048 = vpop.permute.xlu0 %2047
        %2049 = vrot.lane.b32.xlu0 %v1905, 120
        %v2050 = vpop.permute.xlu0 %2049
        %2051 = vrot.lane.b32.xlu0 %v1906, 120
        %v2052 = vpop.permute.xlu0 %2051
        %2053 = vrot.lane.b32.xlu0 %v1907, 120
        %v2054 = vpop.permute.xlu0 %2053
        %2055 = vrot.lane.b32.xlu0 %v1908, 120
        %v2056 = vpop.permute.xlu0 %2055
        %2057 = vrot.lane.b32.xlu0 %v1909, 120
        %v2058 = vpop.permute.xlu0 %2057
        %2059 = vrot.lane.b32.xlu0 %v1910, 120
        %v2060 = vpop.permute.xlu0 %2059
        %2061 = vrot.lane.b32.xlu0 %v1911, 120
        %v2062 = vpop.permute.xlu0 %2061
        %2063 = vrot.lane.b32.xlu0 %v1912, 120
        %v2064 = vpop.permute.xlu0 %2063
        %2065 = vrot.lane.b32.xlu0 %v1913, 120
        %v2066 = vpop.permute.xlu0 %2065
        %2067 = vrot.lane.b32.xlu0 %v1914, 120
        %v2068 = vpop.permute.xlu0 %2067
        %2069 = vrot.lane.b32.xlu0 %v1915, 120
        %v2070 = vpop.permute.xlu0 %2069
        %2071 = vrot.lane.b32.xlu0 %v1916, 120
        %v2072 = vpop.permute.xlu0 %2071
        %2073 = vrot.lane.b32.xlu0 %v1917, 120
        %v2074 = vpop.permute.xlu0 %2073
        %2075 = vrot.lane.b32.xlu0 %v1918, 120
        %v2076 = vpop.permute.xlu0 %2075
        %2077 = vrot.lane.b32.xlu0 %v1919, 120
        %v2078 = vpop.permute.xlu0 %2077
        %2079 = vrot.lane.b32.xlu0 %v1920, 120
        %v2080 = vpop.permute.xlu0 %2079
        %2081 = vrot.lane.b32.xlu0 %v1921, 120
        %v2082 = vpop.permute.xlu0 %2081
        %2083 = vrot.lane.b32.xlu0 %v1922, 120
        %v2084 = vpop.permute.xlu0 %2083
        %2085 = vrot.lane.b32.xlu0 %v1923, 120
        %v2086 = vpop.permute.xlu0 %2085
        %2087 = vrot.lane.b32.xlu0 %v1924, 120
        %v2088 = vpop.permute.xlu0 %2087
        %2089 = vrot.lane.b32.xlu0 %v1925, 120
        %v2090 = vpop.permute.xlu0 %2089
        %2091 = vrot.lane.b32.xlu0 %v1926, 120
        %v2092 = vpop.permute.xlu0 %2091
        %2093 = vrot.lane.b32.xlu0 %v1927, 120
        %v2094 = vpop.permute.xlu0 %2093
        %2095 = vrot.lane.b32.xlu0 %v1928, 120
        %v2096 = vpop.permute.xlu0 %2095
        %vm2097 = vcmask 982016
        %v2098 = vsel %vm2097, %v1986, %v1988
        %v2099 = vsel %vm2097, %v1990, %v1992
        %v2100 = vsel %vm2097, %v1994, %v1996
        %v2101 = vsel %vm2097, %v1998, %v2000
        %v2102 = vsel %vm2097, %v2002, %v2004
        %v2103 = vsel %vm2097, %v2006, %v2008
        %v2104 = vsel %vm2097, %v2010, %v2012
        %v2105 = vsel %vm2097, %v2014, %v2016
        %v2106 = vsel %vm2097, %v2018, %v2020
        %v2107 = vsel %vm2097, %v2022, %v2024
        %v2108 = vsel %vm2097, %v2026, %v2028
        %v2109 = vsel %vm2097, %v2030, %v2032
        %v2110 = vsel %vm2097, %v2034, %v2036
        %v2111 = vsel %vm2097, %v2038, %v2040
        %v2112 = vsel %vm2097, %v2042, %v2044
        %v2113 = vsel %vm2097, %v2046, %v2048
        %v2114 = vsel %vm2097, %v2050, %v2052
        %v2115 = vsel %vm2097, %v2054, %v2056
        %v2116 = vsel %vm2097, %v2058, %v2060
        %v2117 = vsel %vm2097, %v2062, %v2064
        %v2118 = vsel %vm2097, %v2066, %v2068
        %v2119 = vsel %vm2097, %v2070, %v2072
        %v2120 = vsel %vm2097, %v2074, %v2076
        %v2121 = vsel %vm2097, %v2078, %v2080
        %v2122 = vsel %vm2097, %v2082, %v2084
        %v2123 = vsel %vm2097, %v2086, %v2088
        %v2124 = vsel %vm2097, %v2090, %v2092
        %v2125 = vsel %vm2097, %v2094, %v2096
        %v2182 = vmax.f32 %v1873, %v2098
        %v2183 = vmax.f32 %v1874, %v1988
        %v2184 = vmax.f32 %v1875, %v2099
        %v2185 = vmax.f32 %v1876, %v1992
        %v2186 = vmax.f32 %v1877, %v2100
        %v2187 = vmax.f32 %v1878, %v1996
        %v2188 = vmax.f32 %v1879, %v2101
        %v2189 = vmax.f32 %v1880, %v2000
        %v2190 = vmax.f32 %v1881, %v2102
        %v2191 = vmax.f32 %v1882, %v2004
        %v2192 = vmax.f32 %v1883, %v2103
        %v2193 = vmax.f32 %v1884, %v2008
        %v2194 = vmax.f32 %v1885, %v2104
        %v2195 = vmax.f32 %v1886, %v2012
        %v2196 = vmax.f32 %v1887, %v2105
        %v2197 = vmax.f32 %v1888, %v2016
        %v2198 = vmax.f32 %v1889, %v2106
        %v2199 = vmax.f32 %v1890, %v2020
        %v2200 = vmax.f32 %v1891, %v2107
        %v2201 = vmax.f32 %v1892, %v2024
        %v2202 = vmax.f32 %v1893, %v2108
        %v2203 = vmax.f32 %v1894, %v2028
        %v2204 = vmax.f32 %v1895, %v2109
        %v2205 = vmax.f32 %v1896, %v2032
        %v2206 = vmax.f32 %v1897, %v2110
        %v2207 = vmax.f32 %v1898, %v2036
        %v2208 = vmax.f32 %v1899, %v2111
        %v2209 = vmax.f32 %v1900, %v2040
        %v2210 = vmax.f32 %v1901, %v2112
        %v2211 = vmax.f32 %v1902, %v2044
        %v2212 = vmax.f32 %v1903, %v2113
        %v2213 = vmax.f32 %v1904, %v2048
        %v2214 = vmax.f32 %v1905, %v2114
        %v2215 = vmax.f32 %v1906, %v2052
        %v2216 = vmax.f32 %v1907, %v2115
        %v2217 = vmax.f32 %v1908, %v2056
        %v2218 = vmax.f32 %v1909, %v2116
        %v2219 = vmax.f32 %v1910, %v2060
        %v2220 = vmax.f32 %v1911, %v2117
        %v2221 = vmax.f32 %v1912, %v2064
        %v2222 = vmax.f32 %v1913, %v2118
        %v2223 = vmax.f32 %v1914, %v2068
        %v2224 = vmax.f32 %v1915, %v2119
        %v2225 = vmax.f32 %v1916, %v2072
        %v2226 = vmax.f32 %v1917, %v2120
        %v2227 = vmax.f32 %v1918, %v2076
        %v2228 = vmax.f32 %v1919, %v2121
        %v2229 = vmax.f32 %v1920, %v2080
        %v2230 = vmax.f32 %v1921, %v2122
        %v2231 = vmax.f32 %v1922, %v2084
        %v2232 = vmax.f32 %v1923, %v2123
        %v2233 = vmax.f32 %v1924, %v2088
        %v2234 = vmax.f32 %v1925, %v2124
        %v2235 = vmax.f32 %v1926, %v2092
        %v2236 = vmax.f32 %v1927, %v2125
        %v2237 = vmax.f32 %v1928, %v2096
        %v2238 = vld [vmem:[#allocation5] sm:$0xff]
        %v2239 = vld [vmem:[#allocation5 + $0x8] sm:$0xff]
        %v2240 = vld [vmem:[#allocation5 + $0x10] sm:$0xff]
        %v2241 = vld [vmem:[#allocation5 + $0x18] sm:$0xff]
        %v2242 = vld [vmem:[#allocation5 + $0x20] sm:$0xff]
        %v2243 = vld [vmem:[#allocation5 + $0x28] sm:$0xff]
        %v2244 = vld [vmem:[#allocation5 + $0x30] sm:$0xff]
        %v2245 = vld [vmem:[#allocation5 + $0x38] sm:$0xff]
        %v2246 = vld [vmem:[#allocation5 + $0x40] sm:$0xff]
        %v2247 = vld [vmem:[#allocation5 + $0x48] sm:$0xff]
        %v2248 = vld [vmem:[#allocation5 + $0x50] sm:$0xff]
        %v2249 = vld [vmem:[#allocation5 + $0x58] sm:$0xff]
        %v2250 = vld [vmem:[#allocation5 + $0x60] sm:$0xff]
        %v2251 = vpack.c.bf16 %v2184, %v2182
        %v2252 = vpack.c.bf16 %v2185, %v2183
        %v2253 = vpack.c.bf16 %v2188, %v2186
        %v2254 = vpack.c.bf16 %v2189, %v2187
        %v2255 = vpack.c.bf16 %v2192, %v2190
        %v2256 = vpack.c.bf16 %v2193, %v2191
        %v2257 = vpack.c.bf16 %v2196, %v2194
        %v2258 = vpack.c.bf16 %v2197, %v2195
        %v2259 = vpack.c.bf16 %v2200, %v2198
        %v2260 = vpack.c.bf16 %v2201, %v2199
        %v2261 = vpack.c.bf16 %v2204, %v2202
        %v2262 = vpack.c.bf16 %v2205, %v2203
        %v2263 = vpack.c.bf16 %v2208, %v2206
        %v2264 = vpack.c.bf16 %v2209, %v2207
        %v2265 = vpack.c.bf16 %v2212, %v2210
        %v2266 = vpack.c.bf16 %v2213, %v2211
        %v2267 = vpack.c.bf16 %v2216, %v2214
        %v2268 = vpack.c.bf16 %v2217, %v2215
        %v2269 = vpack.c.bf16 %v2220, %v2218
        %v2270 = vpack.c.bf16 %v2221, %v2219
        %v2271 = vpack.c.bf16 %v2224, %v2222
        %v2272 = vpack.c.bf16 %v2225, %v2223
        %v2273 = vpack.c.bf16 %v2228, %v2226
        %v2274 = vpack.c.bf16 %v2229, %v2227
        %v2275 = vpack.c.bf16 %v2232, %v2230
        %v2276 = vpack.c.bf16 %v2233, %v2231
        %v2277 = vpack.c.bf16 %v2236, %v2234
        %v2278 = vpack.c.bf16 %v2237, %v2235
        %v2292 = vunpack.c.l.b16 %v2238
        %v2293 = vunpack.c.h.b16 %v2238
        %v2294 = vunpack.c.l.b16 %v2239
        %v2295 = vunpack.c.h.b16 %v2239
        %v2296 = vunpack.c.l.b16 %v2240
        %v2297 = vunpack.c.h.b16 %v2240
        %v2298 = vunpack.c.l.b16 %v2241
        %v2299 = vunpack.c.h.b16 %v2241
        %v2300 = vunpack.c.l.b16 %v2242
        %v2301 = vunpack.c.h.b16 %v2242
        %v2302 = vunpack.c.l.b16 %v2243
        %v2303 = vunpack.c.h.b16 %v2243
        %v2304 = vunpack.c.l.b16 %v2244
        %v2305 = vunpack.c.h.b16 %v2244
        %v2306 = vunpack.c.l.b16 %v2245
        %v2307 = vunpack.c.h.b16 %v2245
        %v2308 = vunpack.c.l.b16 %v2246
        %v2309 = vunpack.c.h.b16 %v2246
        %v2310 = vunpack.c.l.b16 %v2247
        %v2311 = vunpack.c.h.b16 %v2247
        %v2312 = vunpack.c.l.b16 %v2248
        %v2313 = vunpack.c.h.b16 %v2248
        %v2314 = vunpack.c.l.b16 %v2249
        %v2315 = vunpack.c.h.b16 %v2249
        %v2316 = vunpack.c.l.b16 %v2250
        %v2317 = vunpack.c.h.b16 %v2250
        %v2318 = vpack.c.b16 %v2294, %v2292
        %v2319 = vpack.c.b16 %v2295, %v2293
        %v2320 = vpack.c.b16 %v2298, %v2296
        %v2321 = vpack.c.b16 %v2299, %v2297
        %v2322 = vpack.c.b16 %v2302, %v2300
        %v2323 = vpack.c.b16 %v2303, %v2301
        %v2324 = vpack.c.b16 %v2306, %v2304
        %v2325 = vpack.c.b16 %v2307, %v2305
        %v2326 = vpack.c.b16 %v2310, %v2308
        %v2327 = vpack.c.b16 %v2311, %v2309
        %v2328 = vpack.c.b16 %v2314, %v2312
        %v2329 = vpack.c.b16 %v2315, %v2313
        %v2330 = vpack.c.b16 %v2316, %v2316
        %v2331 = vpack.c.b16 %v2317, %v2317
        %vm2339 = vcmask 760832
        %v2341 = vsel %vm2339, %v2319, 0
        %v2344 = vsel %vm2339, %v2321, 0
        %v2347 = vsel %vm2339, %v2323, 0
        %v2350 = vsel %vm2339, %v2325, 0
        %v2353 = vsel %vm2339, %v2327, 0
        %v2356 = vsel %vm2339, %v2329, 0
        %v2359 = vsel %vm2339, %v2331, 0
        %v2361 = vsel %vm844, 4294967295, 65535
        %v2362 = vsel %vm1706, %v2361, 0
        %v2364 = vand.u32 %v2277, %v2362
        %v2367 = vand.u32 %v2278, %v2362
        %2369 = vmatpush.bf16.msra.mxu0 %v2265
        %2370 = vmatpush.bf16.msra.mxu0 %v2263
        %2371 = vmatpush.bf16.msra.mxu0 %v2261
        %2372 = vmatpush.bf16.msra.mxu0 %v2259
        %2373 = vmatpush.bf16.msra.mxu0 %v2257
        %2374 = vmatpush.bf16.msra.mxu0 %v2255
        %2375 = vmatpush.bf16.msra.mxu0 %v2253
        %2376 = vmatpush.bf16.msra.mxu0 %v2251
        %2377 = vmatmul.bf16.gmra.mxu0 %v2318
        %v2378 = vpop.f32.mrf.mxu0
        %v2379 = vadd.f32 0.0, %v2378
        %v2380 = vpop.f32.mrf.mxu0
        %v2381 = vadd.f32 0.0, %v2380
        %2382 = vmatmul.bf16.gmra.mxu0 %v2320
        %v2383 = vpop.f32.mrf.mxu0
        %v2384 = vadd.f32 0.0, %v2383
        %v2385 = vpop.f32.mrf.mxu0
        %v2386 = vadd.f32 0.0, %v2385
        %2387 = vmatmul.bf16.gmra.mxu0 %v2322
        %v2388 = vpop.f32.mrf.mxu0
        %v2389 = vadd.f32 0.0, %v2388
        %v2390 = vpop.f32.mrf.mxu0
        %v2391 = vadd.f32 0.0, %v2390
        %2392 = vmatmul.bf16.gmra.mxu0 %v2324
        %v2393 = vpop.f32.mrf.mxu0
        %v2394 = vadd.f32 0.0, %v2393
        %v2395 = vpop.f32.mrf.mxu0
        %v2396 = vadd.f32 0.0, %v2395
        %2397 = vmatmul.bf16.gmra.mxu0 %v2326
        %v2398 = vpop.f32.mrf.mxu0
        %v2399 = vadd.f32 0.0, %v2398
        %v2400 = vpop.f32.mrf.mxu0
        %v2401 = vadd.f32 0.0, %v2400
        %2402 = vmatmul.bf16.gmra.mxu0 %v2328
        %v2403 = vpop.f32.mrf.mxu0
        %v2404 = vadd.f32 0.0, %v2403
        %v2405 = vpop.f32.mrf.mxu0
        %v2406 = vadd.f32 0.0, %v2405
        %2407 = vmatmul.bf16.gmra.mxu0 %v2330
        %v2408 = vpop.f32.mrf.mxu0
        %v2409 = vadd.f32 0.0, %v2408
        %v2410 = vpop.f32.mrf.mxu0
        %2411 = vdwg.mxu0
        %2412 = vmatpush.bf16.msra.mxu0 0
        %2413 = vmatpush.bf16.msra.mxu0 0
        %2414 = vmatpush.bf16.msra.mxu0 %v2364
        %2415 = vmatpush.bf16.msra.mxu0 %v2275
        %2416 = vmatpush.bf16.msra.mxu0 %v2273
        %2417 = vmatpush.bf16.msra.mxu0 %v2271
        %2418 = vmatpush.bf16.msra.mxu0 %v2269
        %2419 = vmatpush.bf16.msra.mxu0 %v2267
        %2420 = vmatmul.bf16.gmra.mxu0 %v2341
        %v2421 = vpop.f32.mrf.mxu0
        %v2422 = vadd.f32 %v2379, %v2421
        %v2423 = vpop.f32.mrf.mxu0
        %v2424 = vadd.f32 %v2381, %v2423
        %2425 = vmatmul.bf16.gmra.mxu0 %v2344
        %v2426 = vpop.f32.mrf.mxu0
        %v2427 = vadd.f32 %v2384, %v2426
        %v2428 = vpop.f32.mrf.mxu0
        %v2429 = vadd.f32 %v2386, %v2428
        %2430 = vmatmul.bf16.gmra.mxu0 %v2347
        %v2431 = vpop.f32.mrf.mxu0
        %v2432 = vadd.f32 %v2389, %v2431
        %v2433 = vpop.f32.mrf.mxu0
        %v2434 = vadd.f32 %v2391, %v2433
        %2435 = vmatmul.bf16.gmra.mxu0 %v2350
        %v2436 = vpop.f32.mrf.mxu0
        %v2437 = vadd.f32 %v2394, %v2436
        %v2438 = vpop.f32.mrf.mxu0
        %v2439 = vadd.f32 %v2396, %v2438
        %2440 = vmatmul.bf16.gmra.mxu0 %v2353
        %v2441 = vpop.f32.mrf.mxu0
        %v2442 = vadd.f32 %v2399, %v2441
        %v2443 = vpop.f32.mrf.mxu0
        %v2444 = vadd.f32 %v2401, %v2443
        %2445 = vmatmul.bf16.gmra.mxu0 %v2356
        %v2446 = vpop.f32.mrf.mxu0
        %v2447 = vadd.f32 %v2404, %v2446
        %v2448 = vpop.f32.mrf.mxu0
        %v2449 = vadd.f32 %v2406, %v2448
        %2450 = vmatmul.bf16.gmra.mxu0 %v2359
        %v2451 = vpop.f32.mrf.mxu0
        %v2452 = vadd.f32 %v2409, %v2451
        %v2453 = vpop.f32.mrf.mxu0
        %2454 = vdwg.mxu0
        %2455 = vmatpush.bf16.msra.mxu0 %v2266
        %2456 = vmatpush.bf16.msra.mxu0 %v2264
        %2457 = vmatpush.bf16.msra.mxu0 %v2262
        %2458 = vmatpush.bf16.msra.mxu0 %v2260
        %2459 = vmatpush.bf16.msra.mxu0 %v2258
        %2460 = vmatpush.bf16.msra.mxu0 %v2256
        %2461 = vmatpush.bf16.msra.mxu0 %v2254
        %2462 = vmatpush.bf16.msra.mxu0 %v2252
        %2463 = vmatmul.bf16.gmra.mxu0 %v2318
        %v2464 = vpop.f32.mrf.mxu0
        %v2465 = vadd.f32 0.0, %v2464
        %v2466 = vpop.f32.mrf.mxu0
        %v2467 = vadd.f32 0.0, %v2466
        %2468 = vmatmul.bf16.gmra.mxu0 %v2320
        %v2469 = vpop.f32.mrf.mxu0
        %v2470 = vadd.f32 0.0, %v2469
        %v2471 = vpop.f32.mrf.mxu0
        %v2472 = vadd.f32 0.0, %v2471
        %2473 = vmatmul.bf16.gmra.mxu0 %v2322
        %v2474 = vpop.f32.mrf.mxu0
        %v2475 = vadd.f32 0.0, %v2474
        %v2476 = vpop.f32.mrf.mxu0
        %v2477 = vadd.f32 0.0, %v2476
        %2478 = vmatmul.bf16.gmra.mxu0 %v2324
        %v2479 = vpop.f32.mrf.mxu0
        %v2480 = vadd.f32 0.0, %v2479
        %v2481 = vpop.f32.mrf.mxu0
        %v2482 = vadd.f32 0.0, %v2481
        %2483 = vmatmul.bf16.gmra.mxu0 %v2326
        %v2484 = vpop.f32.mrf.mxu0
        %v2485 = vadd.f32 0.0, %v2484
        %v2486 = vpop.f32.mrf.mxu0
        %v2487 = vadd.f32 0.0, %v2486
        %2488 = vmatmul.bf16.gmra.mxu0 %v2328
        %v2489 = vpop.f32.mrf.mxu0
        %v2490 = vadd.f32 0.0, %v2489
        %v2491 = vpop.f32.mrf.mxu0
        %v2492 = vadd.f32 0.0, %v2491
        %2493 = vmatmul.bf16.gmra.mxu0 %v2330
        %v2494 = vpop.f32.mrf.mxu0
        %v2495 = vadd.f32 0.0, %v2494
        %v2496 = vpop.f32.mrf.mxu0
        %2497 = vdwg.mxu0
        %2498 = vmatpush.bf16.msra.mxu0 0
        %2499 = vmatpush.bf16.msra.mxu0 0
        %2500 = vmatpush.bf16.msra.mxu0 %v2367
        %2501 = vmatpush.bf16.msra.mxu0 %v2276
        %2502 = vmatpush.bf16.msra.mxu0 %v2274
        %2503 = vmatpush.bf16.msra.mxu0 %v2272
        %2504 = vmatpush.bf16.msra.mxu0 %v2270
        %2505 = vmatpush.bf16.msra.mxu0 %v2268
        %2506 = vmatmul.bf16.gmra.mxu0 %v2341
        %v2507 = vpop.f32.mrf.mxu0
        %v2508 = vadd.f32 %v2465, %v2507
        %v2509 = vpop.f32.mrf.mxu0
        %v2510 = vadd.f32 %v2467, %v2509
        %2511 = vmatmul.bf16.gmra.mxu0 %v2344
        %v2512 = vpop.f32.mrf.mxu0
        %v2513 = vadd.f32 %v2470, %v2512
        %v2514 = vpop.f32.mrf.mxu0
        %v2515 = vadd.f32 %v2472, %v2514
        %2516 = vmatmul.bf16.gmra.mxu0 %v2347
        %v2517 = vpop.f32.mrf.mxu0
        %v2518 = vadd.f32 %v2475, %v2517
        %v2519 = vpop.f32.mrf.mxu0
        %v2520 = vadd.f32 %v2477, %v2519
        %2521 = vmatmul.bf16.gmra.mxu0 %v2350
        %v2522 = vpop.f32.mrf.mxu0
        %v2523 = vadd.f32 %v2480, %v2522
        %v2524 = vpop.f32.mrf.mxu0
        %v2525 = vadd.f32 %v2482, %v2524
        %2526 = vmatmul.bf16.gmra.mxu0 %v2353
        %v2527 = vpop.f32.mrf.mxu0
        %v2528 = vadd.f32 %v2485, %v2527
        %v2529 = vpop.f32.mrf.mxu0
        %v2530 = vadd.f32 %v2487, %v2529
        %2531 = vmatmul.bf16.gmra.mxu0 %v2356
        %v2532 = vpop.f32.mrf.mxu0
        %v2533 = vadd.f32 %v2490, %v2532
        %v2534 = vpop.f32.mrf.mxu0
        %v2535 = vadd.f32 %v2492, %v2534
        %2536 = vmatmul.bf16.gmra.mxu0 %v2359
        %v2537 = vpop.f32.mrf.mxu0
        %v2538 = vadd.f32 %v2495, %v2537
        %v2539 = vpop.f32.mrf.mxu0
        %2540 = vdwg.mxu0
        %v2541 = vpack.c.bf16 %v2424, %v2422
        %v2542 = vpack.c.bf16 %v2510, %v2508
        %v2543 = vpack.c.bf16 %v2429, %v2427
        %v2544 = vpack.c.bf16 %v2515, %v2513
        %v2545 = vpack.c.bf16 %v2434, %v2432
        %v2546 = vpack.c.bf16 %v2520, %v2518
        %v2547 = vpack.c.bf16 %v2439, %v2437
        %v2548 = vpack.c.bf16 %v2525, %v2523
        %v2549 = vpack.c.bf16 %v2444, %v2442
        %v2550 = vpack.c.bf16 %v2530, %v2528
        %v2551 = vpack.c.bf16 %v2449, %v2447
        %v2552 = vpack.c.bf16 %v2535, %v2533
        %v2553 = vpack.c.bf16 %v2452, %v2452
        %v2554 = vpack.c.bf16 %v2538, %v2538
        %v2555 = vld [vmem:[#allocation7] sm:$0xf]
        %v2556 = vld [vmem:[#allocation7 + $0x4] sm:$0xf]
        %v2557 = vld [vmem:[#allocation7 + $0x8] sm:$0xf]
        %v2558 = vld [vmem:[#allocation7 + $0xc] sm:$0xf]
        %v2559 = vld [vmem:[#allocation7 + $0x10] sm:$0xf]
        %v2560 = vld [vmem:[#allocation7 + $0x14] sm:$0xf]
        %v2561 = vld [vmem:[#allocation7 + $0x18] sm:$0xf]
        %v2562 = vld [vmem:[#allocation7 + $0x1c] sm:$0xf]
        %v2563 = vld [vmem:[#allocation7 + $0x20] sm:$0xf]
        %v2564 = vld [vmem:[#allocation7 + $0x24] sm:$0xf]
        %v2565 = vld [vmem:[#allocation7 + $0x28] sm:$0xf]
        %v2566 = vld [vmem:[#allocation7 + $0x2c] sm:$0xf]
        %v2567 = vld [vmem:[#allocation7 + $0x30] sm:$0xf]
        %v2568 = vld [vmem:[#allocation7 + $0x34] sm:$0xf]
        %v2569 = vld [vmem:[#allocation7 + $0x38] sm:$0xf]
        %v2570 = vld [vmem:[#allocation7 + $0x3c] sm:$0xf]
        %v2571 = vld [vmem:[#allocation7 + $0x40] sm:$0xf]
        %v2572 = vld [vmem:[#allocation7 + $0x44] sm:$0xf]
        %v2573 = vld [vmem:[#allocation7 + $0x48] sm:$0xf]
        %v2574 = vld [vmem:[#allocation7 + $0x4c] sm:$0xf]
        %v2575 = vld [vmem:[#allocation7 + $0x50] sm:$0xf]
        %v2576 = vld [vmem:[#allocation7 + $0x54] sm:$0xf]
        %v2577 = vld [vmem:[#allocation7 + $0x58] sm:$0xf]
        %v2578 = vld [vmem:[#allocation7 + $0x5c] sm:$0xf]
        %v2579 = vld [vmem:[#allocation7 + $0x60] sm:$0xf]
        %v2605 = vunpack.c.l.b16 %v2555
        %v2606 = vunpack.c.l.b16 %v2556
        %v2607 = vunpack.c.l.b16 %v2557
        %v2608 = vunpack.c.l.b16 %v2558
        %v2609 = vunpack.c.l.b16 %v2559
        %v2610 = vunpack.c.l.b16 %v2560
        %v2611 = vunpack.c.l.b16 %v2561
        %v2612 = vunpack.c.l.b16 %v2562
        %v2613 = vunpack.c.l.b16 %v2563
        %v2614 = vunpack.c.l.b16 %v2564
        %v2615 = vunpack.c.l.b16 %v2565
        %v2616 = vunpack.c.l.b16 %v2566
        %v2617 = vunpack.c.l.b16 %v2567
        %v2618 = vunpack.c.l.b16 %v2568
        %v2619 = vunpack.c.l.b16 %v2569
        %v2620 = vunpack.c.l.b16 %v2570
        %v2621 = vunpack.c.l.b16 %v2571
        %v2622 = vunpack.c.l.b16 %v2572
        %v2623 = vunpack.c.l.b16 %v2573
        %v2624 = vunpack.c.l.b16 %v2574
        %v2625 = vunpack.c.l.b16 %v2575
        %v2626 = vunpack.c.l.b16 %v2576
        %v2627 = vunpack.c.l.b16 %v2577
        %v2628 = vunpack.c.l.b16 %v2578
        %v2629 = vunpack.c.l.b16 %v2579
        %v2630 = vpack.c.b16 %v2606, %v2605
        %v2631 = vpack.c.b16 %v2608, %v2607
        %v2632 = vpack.c.b16 %v2610, %v2609
        %v2633 = vpack.c.b16 %v2612, %v2611
        %v2634 = vpack.c.b16 %v2614, %v2613
        %v2635 = vpack.c.b16 %v2616, %v2615
        %v2636 = vpack.c.b16 %v2618, %v2617
        %v2637 = vpack.c.b16 %v2620, %v2619
        %v2638 = vpack.c.b16 %v2622, %v2621
        %v2639 = vpack.c.b16 %v2624, %v2623
        %v2640 = vpack.c.b16 %v2626, %v2625
        %v2641 = vpack.c.b16 %v2628, %v2627
        %v2642 = vpack.c.b16 %v2629, %v2629
        %vm2655 = vcmask 588800
        %v2657 = vsel %vm2655, %v2542, 0
        %v2660 = vsel %vm2655, %v2544, 0
        %v2663 = vsel %vm2655, %v2546, 0
        %v2666 = vsel %vm2655, %v2548, 0
        %v2669 = vsel %vm2655, %v2550, 0
        %v2672 = vsel %vm2655, %v2552, 0
        %v2675 = vsel %vm2655, %v2554, 0
        %vm2677 = vcmask 1043456
        %v2679 = vsel %vm2677, %v2642, 0
        %2681 = vmatpush.bf16.msra.mxu0 %v2637
        %2682 = vmatpush.bf16.msra.mxu0 %v2636
        %2683 = vmatpush.bf16.msra.mxu0 %v2635
        %2684 = vmatpush.bf16.msra.mxu0 %v2634
        %2685 = vmatpush.bf16.msra.mxu0 %v2633
        %2686 = vmatpush.bf16.msra.mxu0 %v2632
        %2687 = vmatpush.bf16.msra.mxu0 %v2631
        %2688 = vmatpush.bf16.msra.mxu0 %v2630
        %2689 = vmatmul.bf16.gmra.mxu0 %v2541
        %v2690 = vpop.f32.mrf.mxu0
        %v2691 = vadd.f32 0.0, %v2690
        %v2692 = vpop.f32.mrf.mxu0
        %v2693 = vadd.f32 0.0, %v2692
        %2694 = vmatmul.bf16.gmra.mxu0 %v2543
        %v2695 = vpop.f32.mrf.mxu0
        %v2696 = vadd.f32 0.0, %v2695
        %v2697 = vpop.f32.mrf.mxu0
        %v2698 = vadd.f32 0.0, %v2697
        %2699 = vmatmul.bf16.gmra.mxu0 %v2545
        %v2700 = vpop.f32.mrf.mxu0
        %v2701 = vadd.f32 0.0, %v2700
        %v2702 = vpop.f32.mrf.mxu0
        %v2703 = vadd.f32 0.0, %v2702
        %2704 = vmatmul.bf16.gmra.mxu0 %v2547
        %v2705 = vpop.f32.mrf.mxu0
        %v2706 = vadd.f32 0.0, %v2705
        %v2707 = vpop.f32.mrf.mxu0
        %v2708 = vadd.f32 0.0, %v2707
        %2709 = vmatmul.bf16.gmra.mxu0 %v2549
        %v2710 = vpop.f32.mrf.mxu0
        %v2711 = vadd.f32 0.0, %v2710
        %v2712 = vpop.f32.mrf.mxu0
        %v2713 = vadd.f32 0.0, %v2712
        %2714 = vmatmul.bf16.gmra.mxu0 %v2551
        %v2715 = vpop.f32.mrf.mxu0
        %v2716 = vadd.f32 0.0, %v2715
        %v2717 = vpop.f32.mrf.mxu0
        %v2718 = vadd.f32 0.0, %v2717
        %2719 = vmatmul.bf16.gmra.mxu0 %v2553
        %v2720 = vpop.f32.mrf.mxu0
        %v2721 = vadd.f32 0.0, %v2720
        %v2722 = vpop.f32.mrf.mxu0
        %2723 = vdwg.mxu0
        %2724 = vmatpush.bf16.msra.mxu0 0
        %2725 = vmatpush.bf16.msra.mxu0 0
        %2726 = vmatpush.bf16.msra.mxu0 0
        %2727 = vmatpush.bf16.msra.mxu0 %v2679
        %2728 = vmatpush.bf16.msra.mxu0 %v2641
        %2729 = vmatpush.bf16.msra.mxu0 %v2640
        %2730 = vmatpush.bf16.msra.mxu0 %v2639
        %2731 = vmatpush.bf16.msra.mxu0 %v2638
        %2732 = vmatmul.bf16.gmra.mxu0 %v2657
        %v2733 = vpop.f32.mrf.mxu0
        %v2734 = vadd.f32 %v2691, %v2733
        %v2735 = vpop.f32.mrf.mxu0
        %v2736 = vadd.f32 %v2693, %v2735
        %2737 = vmatmul.bf16.gmra.mxu0 %v2660
        %v2738 = vpop.f32.mrf.mxu0
        %v2739 = vadd.f32 %v2696, %v2738
        %v2740 = vpop.f32.mrf.mxu0
        %v2741 = vadd.f32 %v2698, %v2740
        %2742 = vmatmul.bf16.gmra.mxu0 %v2663
        %v2743 = vpop.f32.mrf.mxu0
        %v2744 = vadd.f32 %v2701, %v2743
        %v2745 = vpop.f32.mrf.mxu0
        %v2746 = vadd.f32 %v2703, %v2745
        %2747 = vmatmul.bf16.gmra.mxu0 %v2666
        %v2748 = vpop.f32.mrf.mxu0
        %v2749 = vadd.f32 %v2706, %v2748
        %v2750 = vpop.f32.mrf.mxu0
        %v2751 = vadd.f32 %v2708, %v2750
        %2752 = vmatmul.bf16.gmra.mxu0 %v2669
        %v2753 = vpop.f32.mrf.mxu0
        %v2754 = vadd.f32 %v2711, %v2753
        %v2755 = vpop.f32.mrf.mxu0
        %v2756 = vadd.f32 %v2713, %v2755
        %2757 = vmatmul.bf16.gmra.mxu0 %v2672
        %v2758 = vpop.f32.mrf.mxu0
        %v2759 = vadd.f32 %v2716, %v2758
        %v2760 = vpop.f32.mrf.mxu0
        %v2761 = vadd.f32 %v2718, %v2760
        %2762 = vmatmul.bf16.gmra.mxu0 %v2675
        %v2763 = vpop.f32.mrf.mxu0
        %v2764 = vadd.f32 %v2721, %v2763
        %v2765 = vpop.f32.mrf.mxu0
        %2766 = vdwg.mxu0
        %v2767 = vpack.c.bf16 %v2734, %v2734
        %v2768 = vpack.c.bf16 %v2736, %v2736
        %v2769 = vpack.c.bf16 %v2739, %v2739
        %v2770 = vpack.c.bf16 %v2741, %v2741
        %v2771 = vpack.c.bf16 %v2744, %v2744
        %v2772 = vpack.c.bf16 %v2746, %v2746
        %v2773 = vpack.c.bf16 %v2749, %v2749
        %v2774 = vpack.c.bf16 %v2751, %v2751
        %v2775 = vpack.c.bf16 %v2754, %v2754
        %v2776 = vpack.c.bf16 %v2756, %v2756
        %v2777 = vpack.c.bf16 %v2759, %v2759
        %v2778 = vpack.c.bf16 %v2761, %v2761
        %v2779 = vpack.c.bf16 %v2764, %v2764
        %v2780 = vld [vmem:[%s5] sm:$0xff]
        %v2781 = vld [vmem:[%s5 + $0x8] sm:$0xff]
        %v2782 = vld [vmem:[%s5 + $0x10] sm:$0xff]
        %v2783 = vld [vmem:[%s5 + $0x18] sm:$0xff]
        %v2784 = vld [vmem:[%s5 + $0x20] sm:$0xff]
        %v2785 = vld [vmem:[%s5 + $0x28] sm:$0xff]
        %v2786 = vld [vmem:[%s5 + $0x30] sm:$0xff]
        %v2787 = vld [vmem:[%s5 + $0x38] sm:$0xff]
        %v2788 = vld [vmem:[%s5 + $0x40] sm:$0xff]
        %v2789 = vld [vmem:[%s5 + $0x48] sm:$0xff]
        %v2790 = vld [vmem:[%s5 + $0x50] sm:$0xff]
        %v2791 = vld [vmem:[%s5 + $0x58] sm:$0xff]
        %v2792 = vld [vmem:[%s5 + $0x60] sm:$0xff]
        %s2793 = scalar_lea.vmem %s5, 104
        %v2794 = vld [vmem:[%s2793] sm:$0xff]
        %v2795 = vld [vmem:[%s2793 + $0x8] sm:$0xff]
        %v2796 = vld [vmem:[%s2793 + $0x10] sm:$0xff]
        %v2797 = vld [vmem:[%s2793 + $0x18] sm:$0xff]
        %v2798 = vld [vmem:[%s2793 + $0x20] sm:$0xff]
        %v2799 = vld [vmem:[%s2793 + $0x28] sm:$0xff]
        %v2800 = vld [vmem:[%s2793 + $0x30] sm:$0xff]
        %v2801 = vld [vmem:[%s2793 + $0x38] sm:$0xff]
        %v2802 = vld [vmem:[%s2793 + $0x40] sm:$0xff]
        %v2803 = vld [vmem:[%s2793 + $0x48] sm:$0xff]
        %v2804 = vld [vmem:[%s2793 + $0x50] sm:$0xff]
        %v2805 = vld [vmem:[%s2793 + $0x58] sm:$0xff]
        %v2806 = vld [vmem:[%s2793 + $0x60] sm:$0xff]
        %v2820 = vunpack.c.l.b16 %v2767
        %v2821 = vunpack.c.l.b16 %v2768
        %v2822 = vunpack.c.l.b16 %v2769
        %v2823 = vunpack.c.l.b16 %v2770
        %v2824 = vunpack.c.l.b16 %v2771
        %v2825 = vunpack.c.l.b16 %v2772
        %v2826 = vunpack.c.l.b16 %v2773
        %v2827 = vunpack.c.l.b16 %v2774
        %v2828 = vunpack.c.l.b16 %v2775
        %v2829 = vunpack.c.l.b16 %v2776
        %v2830 = vunpack.c.l.b16 %v2777
        %v2831 = vunpack.c.l.b16 %v2778
        %v2832 = vunpack.c.l.b16 %v2779
        %v2833 = vpack.c.b16 %v2821, %v2820
        %v2834 = vpack.c.b16 %v2823, %v2822
        %v2835 = vpack.c.b16 %v2825, %v2824
        %v2836 = vpack.c.b16 %v2827, %v2826
        %v2837 = vpack.c.b16 %v2829, %v2828
        %v2838 = vpack.c.b16 %v2831, %v2830
        %v2839 = vpack.c.b16 %v2832, %v2832
        %v2841 = vshrl.u32 %v2833, 16
        %v2843 = vshll.u32 %v2833, 16
        %v2845 = vrot.slane %v2843, 1
        %v2846 = vor.u32 %v2841, %v2845
        %v2848 = vshll.u32 %v2834, 16
        %v2850 = vrot.slane %v2848, 1
        %v2851 = vsel %vm671, %v2846, %v2850
        %v2852 = vshrl.u32 %v2834, 16
        %v2854 = vor.u32 %v2852, %v2850
        %v2856 = vshll.u32 %v2835, 16
        %v2858 = vrot.slane %v2856, 1
        %v2859 = vsel %vm671, %v2854, %v2858
        %v2860 = vshrl.u32 %v2835, 16
        %v2862 = vor.u32 %v2860, %v2858
        %v2864 = vshll.u32 %v2836, 16
        %v2866 = vrot.slane %v2864, 1
        %v2867 = vsel %vm671, %v2862, %v2866
        %v2868 = vshrl.u32 %v2836, 16
        %v2870 = vor.u32 %v2868, %v2866
        %v2872 = vshll.u32 %v2837, 16
        %v2874 = vrot.slane %v2872, 1
        %v2875 = vsel %vm671, %v2870, %v2874
        %v2876 = vshrl.u32 %v2837, 16
        %v2878 = vor.u32 %v2876, %v2874
        %v2880 = vshll.u32 %v2838, 16
        %v2882 = vrot.slane %v2880, 1
        %v2883 = vsel %vm671, %v2878, %v2882
        %v2884 = vshrl.u32 %v2838, 16
        %v2886 = vor.u32 %v2884, %v2882
        %v2888 = vshll.u32 %v2839, 16
        %v2890 = vrot.slane %v2888, 1
        %v2891 = vsel %vm671, %v2886, %v2890
        %v2892 = vshrl.u32 %v2839, 16
        %v2894 = vor.u32 %v2892, %v2890
        %v2908 = vunpack.c.l.b16 %v2794
        %v2909 = vunpack.c.h.b16 %v2794
        %v2910 = vunpack.c.l.b16 %v2795
        %v2911 = vunpack.c.h.b16 %v2795
        %v2912 = vunpack.c.l.b16 %v2796
        %v2913 = vunpack.c.h.b16 %v2796
        %v2914 = vunpack.c.l.b16 %v2797
        %v2915 = vunpack.c.h.b16 %v2797
        %v2916 = vunpack.c.l.b16 %v2798
        %v2917 = vunpack.c.h.b16 %v2798
        %v2918 = vunpack.c.l.b16 %v2799
        %v2919 = vunpack.c.h.b16 %v2799
        %v2920 = vunpack.c.l.b16 %v2800
        %v2921 = vunpack.c.h.b16 %v2800
        %v2922 = vunpack.c.l.b16 %v2801
        %v2923 = vunpack.c.h.b16 %v2801
        %v2924 = vunpack.c.l.b16 %v2802
        %v2925 = vunpack.c.h.b16 %v2802
        %v2926 = vunpack.c.l.b16 %v2803
        %v2927 = vunpack.c.h.b16 %v2803
        %v2928 = vunpack.c.l.b16 %v2804
        %v2929 = vunpack.c.h.b16 %v2804
        %v2930 = vunpack.c.l.b16 %v2805
        %v2931 = vunpack.c.h.b16 %v2805
        %v2932 = vunpack.c.l.b16 %v2806
        %v2933 = vunpack.c.h.b16 %v2806
        %v2934 = vpack.c.b16 %v2910, %v2908
        %v2935 = vpack.c.b16 %v2911, %v2909
        %v2936 = vpack.c.b16 %v2914, %v2912
        %v2937 = vpack.c.b16 %v2915, %v2913
        %v2938 = vpack.c.b16 %v2918, %v2916
        %v2939 = vpack.c.b16 %v2919, %v2917
        %v2940 = vpack.c.b16 %v2922, %v2920
        %v2941 = vpack.c.b16 %v2923, %v2921
        %v2942 = vpack.c.b16 %v2926, %v2924
        %v2943 = vpack.c.b16 %v2927, %v2925
        %v2944 = vpack.c.b16 %v2930, %v2928
        %v2945 = vpack.c.b16 %v2931, %v2929
        %v2946 = vpack.c.b16 %v2932, %v2932
        %v2947 = vpack.c.b16 %v2933, %v2933
        %vm2960 = vcmask 850944
        %v2962 = vsel %vm2960, %v2851, 0
        %v2965 = vsel %vm2960, %v2859, 0
        %v2968 = vsel %vm2960, %v2867, 0
        %v2971 = vsel %vm2960, %v2875, 0
        %v2974 = vsel %vm2960, %v2883, 0
        %v2977 = vsel %vm2960, %v2891, 0
        %v2980 = vsel %vm2960, %v2894, 0
        %v2983 = vsel %vm2677, %v2946, 0
        %v2986 = vsel %vm2677, %v2947, 0
        %2988 = vmatpush.bf16.msra.mxu0 0
        %2989 = vmatpush.bf16.msra.mxu0 %v2983
        %2990 = vmatpush.bf16.msra.mxu0 %v2944
        %2991 = vmatpush.bf16.msra.mxu0 %v2942
        %2992 = vmatpush.bf16.msra.mxu0 %v2940
        %2993 = vmatpush.bf16.msra.mxu0 %v2938
        %2994 = vmatpush.bf16.msra.mxu0 %v2936
        %2995 = vmatpush.bf16.msra.mxu0 %v2934
        %2996 = vmatmul.bf16.gmra.mxu0 %v2962
        %v2997 = vpop.f32.mrf.mxu0
        %v2998 = vadd.f32 0.0, %v2997
        %v2999 = vpop.f32.mrf.mxu0
        %v3000 = vadd.f32 0.0, %v2999
        %3001 = vmatmul.bf16.gmra.mxu0 %v2965
        %v3002 = vpop.f32.mrf.mxu0
        %v3003 = vadd.f32 0.0, %v3002
        %v3004 = vpop.f32.mrf.mxu0
        %v3005 = vadd.f32 0.0, %v3004
        %3006 = vmatmul.bf16.gmra.mxu0 %v2968
        %v3007 = vpop.f32.mrf.mxu0
        %v3008 = vadd.f32 0.0, %v3007
        %v3009 = vpop.f32.mrf.mxu0
        %v3010 = vadd.f32 0.0, %v3009
        %3011 = vmatmul.bf16.gmra.mxu0 %v2971
        %v3012 = vpop.f32.mrf.mxu0
        %v3013 = vadd.f32 0.0, %v3012
        %v3014 = vpop.f32.mrf.mxu0
        %v3015 = vadd.f32 0.0, %v3014
        %3016 = vmatmul.bf16.gmra.mxu0 %v2974
        %v3017 = vpop.f32.mrf.mxu0
        %v3018 = vadd.f32 0.0, %v3017
        %v3019 = vpop.f32.mrf.mxu0
        %v3020 = vadd.f32 0.0, %v3019
        %3021 = vmatmul.bf16.gmra.mxu0 %v2977
        %v3022 = vpop.f32.mrf.mxu0
        %v3023 = vadd.f32 0.0, %v3022
        %v3024 = vpop.f32.mrf.mxu0
        %v3025 = vadd.f32 0.0, %v3024
        %3026 = vmatmul.bf16.gmra.mxu0 %v2980
        %v3027 = vpop.f32.mrf.mxu0
        %v3028 = vadd.f32 0.0, %v3027
        %v3029 = vpop.f32.mrf.mxu0
        %3030 = vdwg.mxu0
        %3031 = vmatpush.bf16.msra.mxu0 0
        %3032 = vmatpush.bf16.msra.mxu0 %v2986
        %3033 = vmatpush.bf16.msra.mxu0 %v2945
        %3034 = vmatpush.bf16.msra.mxu0 %v2943
        %3035 = vmatpush.bf16.msra.mxu0 %v2941
        %3036 = vmatpush.bf16.msra.mxu0 %v2939
        %3037 = vmatpush.bf16.msra.mxu0 %v2937
        %3038 = vmatpush.bf16.msra.mxu0 %v2935
        %3039 = vmatmul.bf16.gmra.mxu0 %v2962
        %v3040 = vpop.f32.mrf.mxu0
        %v3041 = vadd.f32 0.0, %v3040
        %v3042 = vpop.f32.mrf.mxu0
        %v3043 = vadd.f32 0.0, %v3042
        %3044 = vmatmul.bf16.gmra.mxu0 %v2965
        %v3045 = vpop.f32.mrf.mxu0
        %v3046 = vadd.f32 0.0, %v3045
        %v3047 = vpop.f32.mrf.mxu0
        %v3048 = vadd.f32 0.0, %v3047
        %3049 = vmatmul.bf16.gmra.mxu0 %v2968
        %v3050 = vpop.f32.mrf.mxu0
        %v3051 = vadd.f32 0.0, %v3050
        %v3052 = vpop.f32.mrf.mxu0
        %v3053 = vadd.f32 0.0, %v3052
        %3054 = vmatmul.bf16.gmra.mxu0 %v2971
        %v3055 = vpop.f32.mrf.mxu0
        %v3056 = vadd.f32 0.0, %v3055
        %v3057 = vpop.f32.mrf.mxu0
        %v3058 = vadd.f32 0.0, %v3057
        %3059 = vmatmul.bf16.gmra.mxu0 %v2974
        %v3060 = vpop.f32.mrf.mxu0
        %v3061 = vadd.f32 0.0, %v3060
        %v3062 = vpop.f32.mrf.mxu0
        %v3063 = vadd.f32 0.0, %v3062
        %3064 = vmatmul.bf16.gmra.mxu0 %v2977
        %v3065 = vpop.f32.mrf.mxu0
        %v3066 = vadd.f32 0.0, %v3065
        %v3067 = vpop.f32.mrf.mxu0
        %v3068 = vadd.f32 0.0, %v3067
        %3069 = vmatmul.bf16.gmra.mxu0 %v2980
        %v3070 = vpop.f32.mrf.mxu0
        %v3071 = vadd.f32 0.0, %v3070
        %v3072 = vpop.f32.mrf.mxu0
        %3073 = vdwg.mxu0
        %v3087 = vunpack.c.l.b16 %v2780
        %v3088 = vunpack.c.h.b16 %v2780
        %v3089 = vunpack.c.l.b16 %v2781
        %v3090 = vunpack.c.h.b16 %v2781
        %v3091 = vunpack.c.l.b16 %v2782
        %v3092 = vunpack.c.h.b16 %v2782
        %v3093 = vunpack.c.l.b16 %v2783
        %v3094 = vunpack.c.h.b16 %v2783
        %v3095 = vunpack.c.l.b16 %v2784
        %v3096 = vunpack.c.h.b16 %v2784
        %v3097 = vunpack.c.l.b16 %v2785
        %v3098 = vunpack.c.h.b16 %v2785
        %v3099 = vunpack.c.l.b16 %v2786
        %v3100 = vunpack.c.h.b16 %v2786
        %v3101 = vunpack.c.l.b16 %v2787
        %v3102 = vunpack.c.h.b16 %v2787
        %v3103 = vunpack.c.l.b16 %v2788
        %v3104 = vunpack.c.h.b16 %v2788
        %v3105 = vunpack.c.l.b16 %v2789
        %v3106 = vunpack.c.h.b16 %v2789
        %v3107 = vunpack.c.l.b16 %v2790
        %v3108 = vunpack.c.h.b16 %v2790
        %v3109 = vunpack.c.l.b16 %v2791
        %v3110 = vunpack.c.h.b16 %v2791
        %v3111 = vunpack.c.l.b16 %v2792
        %v3112 = vunpack.c.h.b16 %v2792
        %v3113 = vpack.c.b16 %v3089, %v3087
        %v3114 = vpack.c.b16 %v3090, %v3088
        %v3115 = vpack.c.b16 %v3093, %v3091
        %v3116 = vpack.c.b16 %v3094, %v3092
        %v3117 = vpack.c.b16 %v3097, %v3095
        %v3118 = vpack.c.b16 %v3098, %v3096
        %v3119 = vpack.c.b16 %v3101, %v3099
        %v3120 = vpack.c.b16 %v3102, %v3100
        %v3121 = vpack.c.b16 %v3105, %v3103
        %v3122 = vpack.c.b16 %v3106, %v3104
        %v3123 = vpack.c.b16 %v3109, %v3107
        %v3124 = vpack.c.b16 %v3110, %v3108
        %v3125 = vpack.c.b16 %v3111, %v3111
        %v3126 = vpack.c.b16 %v3112, %v3112
        %v3139 = vsel %vm2960, %v2833, 0
        %v3141 = vsel %vm2960, %v2834, 0
        %v3143 = vsel %vm2960, %v2835, 0
        %v3145 = vsel %vm2960, %v2836, 0
        %v3147 = vsel %vm2960, %v2837, 0
        %v3149 = vsel %vm2960, %v2838, 0
        %v3151 = vsel %vm2960, %v2839, 0
        %v3154 = vsel %vm2677, %v3125, 0
        %v3157 = vsel %vm2677, %v3126, 0
        %3159 = vmatpush.bf16.msra.mxu0 0
        %3160 = vmatpush.bf16.msra.mxu0 %v3154
        %3161 = vmatpush.bf16.msra.mxu0 %v3123
        %3162 = vmatpush.bf16.msra.mxu0 %v3121
        %3163 = vmatpush.bf16.msra.mxu0 %v3119
        %3164 = vmatpush.bf16.msra.mxu0 %v3117
        %3165 = vmatpush.bf16.msra.mxu0 %v3115
        %3166 = vmatpush.bf16.msra.mxu0 %v3113
        %3167 = vmatmul.bf16.gmra.mxu0 %v3139
        %v3168 = vpop.f32.mrf.mxu0
        %v3169 = vadd.f32 %v2998, %v3168
        %v3170 = vpop.f32.mrf.mxu0
        %v3171 = vadd.f32 %v3000, %v3170
        %3172 = vmatmul.bf16.gmra.mxu0 %v3141
        %v3173 = vpop.f32.mrf.mxu0
        %v3174 = vadd.f32 %v3003, %v3173
        %v3175 = vpop.f32.mrf.mxu0
        %v3176 = vadd.f32 %v3005, %v3175
        %3177 = vmatmul.bf16.gmra.mxu0 %v3143
        %v3178 = vpop.f32.mrf.mxu0
        %v3179 = vadd.f32 %v3008, %v3178
        %v3180 = vpop.f32.mrf.mxu0
        %v3181 = vadd.f32 %v3010, %v3180
        %3182 = vmatmul.bf16.gmra.mxu0 %v3145
        %v3183 = vpop.f32.mrf.mxu0
        %v3184 = vadd.f32 %v3013, %v3183
        %v3185 = vpop.f32.mrf.mxu0
        %v3186 = vadd.f32 %v3015, %v3185
        %3187 = vmatmul.bf16.gmra.mxu0 %v3147
        %v3188 = vpop.f32.mrf.mxu0
        %v3189 = vadd.f32 %v3018, %v3188
        %v3190 = vpop.f32.mrf.mxu0
        %v3191 = vadd.f32 %v3020, %v3190
        %3192 = vmatmul.bf16.gmra.mxu0 %v3149
        %v3193 = vpop.f32.mrf.mxu0
        %v3194 = vadd.f32 %v3023, %v3193
        %v3195 = vpop.f32.mrf.mxu0
        %v3196 = vadd.f32 %v3025, %v3195
        %3197 = vmatmul.bf16.gmra.mxu0 %v3151
        %v3198 = vpop.f32.mrf.mxu0
        %v3199 = vadd.f32 %v3028, %v3198
        %v3200 = vpop.f32.mrf.mxu0
        %3201 = vdwg.mxu0
        %3202 = vmatpush.bf16.msra.mxu0 0
        %3203 = vmatpush.bf16.msra.mxu0 %v3157
        %3204 = vmatpush.bf16.msra.mxu0 %v3124
        %3205 = vmatpush.bf16.msra.mxu0 %v3122
        %3206 = vmatpush.bf16.msra.mxu0 %v3120
        %3207 = vmatpush.bf16.msra.mxu0 %v3118
        %3208 = vmatpush.bf16.msra.mxu0 %v3116
        %3209 = vmatpush.bf16.msra.mxu0 %v3114
        %3210 = vmatmul.bf16.gmra.mxu0 %v3139
        %v3211 = vpop.f32.mrf.mxu0
        %v3212 = vadd.f32 %v3041, %v3211
        %v3213 = vpop.f32.mrf.mxu0
        %v3214 = vadd.f32 %v3043, %v3213
        %3215 = vmatmul.bf16.gmra.mxu0 %v3141
        %v3216 = vpop.f32.mrf.mxu0
        %v3217 = vadd.f32 %v3046, %v3216
        %v3218 = vpop.f32.mrf.mxu0
        %v3219 = vadd.f32 %v3048, %v3218
        %3220 = vmatmul.bf16.gmra.mxu0 %v3143
        %v3221 = vpop.f32.mrf.mxu0
        %v3222 = vadd.f32 %v3051, %v3221
        %v3223 = vpop.f32.mrf.mxu0
        %v3224 = vadd.f32 %v3053, %v3223
        %3225 = vmatmul.bf16.gmra.mxu0 %v3145
        %v3226 = vpop.f32.mrf.mxu0
        %v3227 = vadd.f32 %v3056, %v3226
        %v3228 = vpop.f32.mrf.mxu0
        %v3229 = vadd.f32 %v3058, %v3228
        %3230 = vmatmul.bf16.gmra.mxu0 %v3147
        %v3231 = vpop.f32.mrf.mxu0
        %v3232 = vadd.f32 %v3061, %v3231
        %v3233 = vpop.f32.mrf.mxu0
        %v3234 = vadd.f32 %v3063, %v3233
        %3235 = vmatmul.bf16.gmra.mxu0 %v3149
        %v3236 = vpop.f32.mrf.mxu0
        %v3237 = vadd.f32 %v3066, %v3236
        %v3238 = vpop.f32.mrf.mxu0
        %v3239 = vadd.f32 %v3068, %v3238
        %3240 = vmatmul.bf16.gmra.mxu0 %v3151
        %v3241 = vpop.f32.mrf.mxu0
        %v3242 = vadd.f32 %v3071, %v3241
        %v3243 = vpop.f32.mrf.mxu0
        %3244 = vdwg.mxu0
        %s3245 = scalar_lea.vmem %s5, 208
        %v3246 = vld [vmem:[%s3245] sm:$0xff]
        %v3247 = vld [vmem:[%s3245 + $0x8] sm:$0xff]
        %v3248 = vld [vmem:[%s3245 + $0x10] sm:$0xff]
        %v3249 = vld [vmem:[%s3245 + $0x18] sm:$0xff]
        %v3250 = vld [vmem:[%s3245 + $0x20] sm:$0xff]
        %v3251 = vld [vmem:[%s3245 + $0x28] sm:$0xff]
        %v3252 = vld [vmem:[%s3245 + $0x30] sm:$0xff]
        %v3253 = vld [vmem:[%s3245 + $0x38] sm:$0xff]
        %v3254 = vld [vmem:[%s3245 + $0x40] sm:$0xff]
        %v3255 = vld [vmem:[%s3245 + $0x48] sm:$0xff]
        %v3256 = vld [vmem:[%s3245 + $0x50] sm:$0xff]
        %v3257 = vld [vmem:[%s3245 + $0x58] sm:$0xff]
        %v3258 = vld [vmem:[%s3245 + $0x60] sm:$0xff]
        %v3259 = vrot.slane %v2833, 1
        %v3260 = vrot.slane %v2834, 1
        %v3261 = vsel %vm1224, %v3259, %v3260
        %v3262 = vrot.slane %v2835, 1
        %v3263 = vsel %vm1224, %v3260, %v3262
        %v3264 = vrot.slane %v2836, 1
        %v3265 = vsel %vm1224, %v3262, %v3264
        %v3266 = vrot.slane %v2837, 1
        %v3267 = vsel %vm1224, %v3264, %v3266
        %v3268 = vrot.slane %v2838, 1
        %v3269 = vsel %vm1224, %v3266, %v3268
        %v3270 = vrot.slane %v2839, 1
        %v3271 = vsel %vm1224, %v3268, %v3270
        %v3285 = vunpack.c.l.b16 %v3246
        %v3286 = vunpack.c.h.b16 %v3246
        %v3287 = vunpack.c.l.b16 %v3247
        %v3288 = vunpack.c.h.b16 %v3247
        %v3289 = vunpack.c.l.b16 %v3248
        %v3290 = vunpack.c.h.b16 %v3248
        %v3291 = vunpack.c.l.b16 %v3249
        %v3292 = vunpack.c.h.b16 %v3249
        %v3293 = vunpack.c.l.b16 %v3250
        %v3294 = vunpack.c.h.b16 %v3250
        %v3295 = vunpack.c.l.b16 %v3251
        %v3296 = vunpack.c.h.b16 %v3251
        %v3297 = vunpack.c.l.b16 %v3252
        %v3298 = vunpack.c.h.b16 %v3252
        %v3299 = vunpack.c.l.b16 %v3253
        %v3300 = vunpack.c.h.b16 %v3253
        %v3301 = vunpack.c.l.b16 %v3254
        %v3302 = vunpack.c.h.b16 %v3254
        %v3303 = vunpack.c.l.b16 %v3255
        %v3304 = vunpack.c.h.b16 %v3255
        %v3305 = vunpack.c.l.b16 %v3256
        %v3306 = vunpack.c.h.b16 %v3256
        %v3307 = vunpack.c.l.b16 %v3257
        %v3308 = vunpack.c.h.b16 %v3257
        %v3309 = vunpack.c.l.b16 %v3258
        %v3310 = vunpack.c.h.b16 %v3258
        %v3311 = vpack.c.b16 %v3287, %v3285
        %v3312 = vpack.c.b16 %v3288, %v3286
        %v3313 = vpack.c.b16 %v3291, %v3289
        %v3314 = vpack.c.b16 %v3292, %v3290
        %v3315 = vpack.c.b16 %v3295, %v3293
        %v3316 = vpack.c.b16 %v3296, %v3294
        %v3317 = vpack.c.b16 %v3299, %v3297
        %v3318 = vpack.c.b16 %v3300, %v3298
        %v3319 = vpack.c.b16 %v3303, %v3301
        %v3320 = vpack.c.b16 %v3304, %v3302
        %v3321 = vpack.c.b16 %v3307, %v3305
        %v3322 = vpack.c.b16 %v3308, %v3306
        %v3323 = vpack.c.b16 %v3309, %v3309
        %v3324 = vpack.c.b16 %v3310, %v3310
        %v3338 = vsel %vm2960, %v3261, 0
        %v3341 = vsel %vm2960, %v3263, 0
        %v3344 = vsel %vm2960, %v3265, 0
        %v3347 = vsel %vm2960, %v3267, 0
        %v3350 = vsel %vm2960, %v3269, 0
        %v3353 = vsel %vm2960, %v3271, 0
        %v3356 = vsel %vm2960, %v3270, 0
        %v3359 = vsel %vm2677, %v3323, 0
        %v3362 = vsel %vm2677, %v3324, 0
        %3364 = vmatpush.bf16.msra.mxu0 0
        %3365 = vmatpush.bf16.msra.mxu0 %v3359
        %3366 = vmatpush.bf16.msra.mxu0 %v3321
        %3367 = vmatpush.bf16.msra.mxu0 %v3319
        %3368 = vmatpush.bf16.msra.mxu0 %v3317
        %3369 = vmatpush.bf16.msra.mxu0 %v3315
        %3370 = vmatpush.bf16.msra.mxu0 %v3313
        %3371 = vmatpush.bf16.msra.mxu0 %v3311
        %3372 = vmatmul.bf16.gmra.mxu0 %v3338
        %v3373 = vpop.f32.mrf.mxu0
        %v3374 = vadd.f32 0.0, %v3373
        %v3375 = vpop.f32.mrf.mxu0
        %v3376 = vadd.f32 0.0, %v3375
        %3377 = vmatmul.bf16.gmra.mxu0 %v3341
        %v3378 = vpop.f32.mrf.mxu0
        %v3379 = vadd.f32 0.0, %v3378
        %v3380 = vpop.f32.mrf.mxu0
        %v3381 = vadd.f32 0.0, %v3380
        %3382 = vmatmul.bf16.gmra.mxu0 %v3344
        %v3383 = vpop.f32.mrf.mxu0
        %v3384 = vadd.f32 0.0, %v3383
        %v3385 = vpop.f32.mrf.mxu0
        %v3386 = vadd.f32 0.0, %v3385
        %3387 = vmatmul.bf16.gmra.mxu0 %v3347
        %v3388 = vpop.f32.mrf.mxu0
        %v3389 = vadd.f32 0.0, %v3388
        %v3390 = vpop.f32.mrf.mxu0
        %v3391 = vadd.f32 0.0, %v3390
        %3392 = vmatmul.bf16.gmra.mxu0 %v3350
        %v3393 = vpop.f32.mrf.mxu0
        %v3394 = vadd.f32 0.0, %v3393
        %v3395 = vpop.f32.mrf.mxu0
        %v3396 = vadd.f32 0.0, %v3395
        %3397 = vmatmul.bf16.gmra.mxu0 %v3353
        %v3398 = vpop.f32.mrf.mxu0
        %v3399 = vadd.f32 0.0, %v3398
        %v3400 = vpop.f32.mrf.mxu0
        %v3401 = vadd.f32 0.0, %v3400
        %3402 = vmatmul.bf16.gmra.mxu0 %v3356
        %v3403 = vpop.f32.mrf.mxu0
        %v3404 = vadd.f32 0.0, %v3403
        %v3405 = vpop.f32.mrf.mxu0
        %3406 = vdwg.mxu0
        %3407 = vmatpush.bf16.msra.mxu0 0
        %3408 = vmatpush.bf16.msra.mxu0 %v3362
        %3409 = vmatpush.bf16.msra.mxu0 %v3322
        %3410 = vmatpush.bf16.msra.mxu0 %v3320
        %3411 = vmatpush.bf16.msra.mxu0 %v3318
        %3412 = vmatpush.bf16.msra.mxu0 %v3316
        %3413 = vmatpush.bf16.msra.mxu0 %v3314
        %3414 = vmatpush.bf16.msra.mxu0 %v3312
        %3415 = vmatmul.bf16.gmra.mxu0 %v3338
        %v3416 = vpop.f32.mrf.mxu0
        %v3417 = vadd.f32 0.0, %v3416
        %v3418 = vpop.f32.mrf.mxu0
        %v3419 = vadd.f32 0.0, %v3418
        %3420 = vmatmul.bf16.gmra.mxu0 %v3341
        %v3421 = vpop.f32.mrf.mxu0
        %v3422 = vadd.f32 0.0, %v3421
        %v3423 = vpop.f32.mrf.mxu0
        %v3424 = vadd.f32 0.0, %v3423
        %3425 = vmatmul.bf16.gmra.mxu0 %v3344
        %v3426 = vpop.f32.mrf.mxu0
        %v3427 = vadd.f32 0.0, %v3426
        %v3428 = vpop.f32.mrf.mxu0
        %v3429 = vadd.f32 0.0, %v3428
        %3430 = vmatmul.bf16.gmra.mxu0 %v3347
        %v3431 = vpop.f32.mrf.mxu0
        %v3432 = vadd.f32 0.0, %v3431
        %v3433 = vpop.f32.mrf.mxu0
        %v3434 = vadd.f32 0.0, %v3433
        %3435 = vmatmul.bf16.gmra.mxu0 %v3350
        %v3436 = vpop.f32.mrf.mxu0
        %v3437 = vadd.f32 0.0, %v3436
        %v3438 = vpop.f32.mrf.mxu0
        %v3439 = vadd.f32 0.0, %v3438
        %3440 = vmatmul.bf16.gmra.mxu0 %v3353
        %v3441 = vpop.f32.mrf.mxu0
        %v3442 = vadd.f32 0.0, %v3441
        %v3443 = vpop.f32.mrf.mxu0
        %v3444 = vadd.f32 0.0, %v3443
        %3445 = vmatmul.bf16.gmra.mxu0 %v3356
        %v3446 = vpop.f32.mrf.mxu0
        %v3447 = vadd.f32 0.0, %v3446
        %v3448 = vpop.f32.mrf.mxu0
        %3449 = vdwg.mxu0
        %v3450 = vadd.f32 %v3169, %v3374
        %v3451 = vadd.f32 %v3212, %v3417
        %v3452 = vadd.f32 %v3171, %v3376
        %v3453 = vadd.f32 %v3214, %v3419
        %v3454 = vadd.f32 %v3174, %v3379
        %v3455 = vadd.f32 %v3217, %v3422
        %v3456 = vadd.f32 %v3176, %v3381
        %v3457 = vadd.f32 %v3219, %v3424
        %v3458 = vadd.f32 %v3179, %v3384
        %v3459 = vadd.f32 %v3222, %v3427
        %v3460 = vadd.f32 %v3181, %v3386
        %v3461 = vadd.f32 %v3224, %v3429
        %v3462 = vadd.f32 %v3184, %v3389
        %v3463 = vadd.f32 %v3227, %v3432
        %v3464 = vadd.f32 %v3186, %v3391
        %v3465 = vadd.f32 %v3229, %v3434
        %v3466 = vadd.f32 %v3189, %v3394
        %v3467 = vadd.f32 %v3232, %v3437
        %v3468 = vadd.f32 %v3191, %v3396
        %v3469 = vadd.f32 %v3234, %v3439
        %v3470 = vadd.f32 %v3194, %v3399
        %v3471 = vadd.f32 %v3237, %v3442
        %v3472 = vadd.f32 %v3196, %v3401
        %v3473 = vadd.f32 %v3239, %v3444
        %v3474 = vadd.f32 %v3199, %v3404
        %v3475 = vadd.f32 %v3242, %v3447
        %v3476 = vld [vmem:[%s6] sm:$0x3]
        %v3478 = vperm.slane %v3476, 0
        %v3479 = vperm.slane %v3476, 1
        %v3482 = vadd.f32 %v3450, %v3478
        %v3483 = vadd.f32 %v3451, %v3479
        %v3484 = vadd.f32 %v3452, %v3478
        %v3485 = vadd.f32 %v3453, %v3479
        %v3486 = vadd.f32 %v3454, %v3478
        %v3487 = vadd.f32 %v3455, %v3479
        %v3488 = vadd.f32 %v3456, %v3478
        %v3489 = vadd.f32 %v3457, %v3479
        %v3490 = vadd.f32 %v3458, %v3478
        %v3491 = vadd.f32 %v3459, %v3479
        %v3492 = vadd.f32 %v3460, %v3478
        %v3493 = vadd.f32 %v3461, %v3479
        %v3494 = vadd.f32 %v3462, %v3478
        %v3495 = vadd.f32 %v3463, %v3479
        %v3496 = vadd.f32 %v3464, %v3478
        %v3497 = vadd.f32 %v3465, %v3479
        %v3498 = vadd.f32 %v3466, %v3478
        %v3499 = vadd.f32 %v3467, %v3479
        %v3500 = vadd.f32 %v3468, %v3478
        %v3501 = vadd.f32 %v3469, %v3479
        %v3502 = vadd.f32 %v3470, %v3478
        %v3503 = vadd.f32 %v3471, %v3479
        %v3504 = vadd.f32 %v3472, %v3478
        %v3505 = vadd.f32 %v3473, %v3479
        %v3506 = vadd.f32 %v3474, %v3478
        %v3507 = vadd.f32 %v3475, %v3479
        %v3508 = vmax.f32 %v3482, 0.0
        %v3509 = vmax.f32 %v3483, 0.0
        %v3510 = vmax.f32 %v3484, 0.0
        %v3511 = vmax.f32 %v3485, 0.0
        %v3512 = vmax.f32 %v3486, 0.0
        %v3513 = vmax.f32 %v3487, 0.0
        %v3514 = vmax.f32 %v3488, 0.0
        %v3515 = vmax.f32 %v3489, 0.0
        %v3516 = vmax.f32 %v3490, 0.0
        %v3517 = vmax.f32 %v3491, 0.0
        %v3518 = vmax.f32 %v3492, 0.0
        %v3519 = vmax.f32 %v3493, 0.0
        %v3520 = vmax.f32 %v3494, 0.0
        %v3521 = vmax.f32 %v3495, 0.0
        %v3522 = vmax.f32 %v3496, 0.0
        %v3523 = vmax.f32 %v3497, 0.0
        %v3524 = vmax.f32 %v3498, 0.0
        %v3525 = vmax.f32 %v3499, 0.0
        %v3526 = vmax.f32 %v3500, 0.0
        %v3527 = vmax.f32 %v3501, 0.0
        %v3528 = vmax.f32 %v3502, 0.0
        %v3529 = vmax.f32 %v3503, 0.0
        %v3530 = vmax.f32 %v3504, 0.0
        %v3531 = vmax.f32 %v3505, 0.0
        %v3532 = vmax.f32 %v3506, 0.0
        %v3533 = vmax.f32 %v3507, 0.0
        %v3560 = vrot.slane %v3508, 1
        %v3561 = vrot.slane %v3510, 1
        %v3562 = vsel %vm1706, %v3560, %v3561
        %v3563 = vrot.slane %v3509, 1
        %v3564 = vrot.slane %v3511, 1
        %v3565 = vsel %vm1706, %v3563, %v3564
        %v3566 = vrot.slane %v3512, 1
        %v3567 = vsel %vm1706, %v3561, %v3566
        %v3568 = vrot.slane %v3513, 1
        %v3569 = vsel %vm1706, %v3564, %v3568
        %v3570 = vrot.slane %v3514, 1
        %v3571 = vsel %vm1706, %v3566, %v3570
        %v3572 = vrot.slane %v3515, 1
        %v3573 = vsel %vm1706, %v3568, %v3572
        %v3574 = vrot.slane %v3516, 1
        %v3575 = vsel %vm1706, %v3570, %v3574
        %v3576 = vrot.slane %v3517, 1
        %v3577 = vsel %vm1706, %v3572, %v3576
        %v3578 = vrot.slane %v3518, 1
        %v3579 = vsel %vm1706, %v3574, %v3578
        %v3580 = vrot.slane %v3519, 1
        %v3581 = vsel %vm1706, %v3576, %v3580
        %v3582 = vrot.slane %v3520, 1
        %v3583 = vsel %vm1706, %v3578, %v3582
        %v3584 = vrot.slane %v3521, 1
        %v3585 = vsel %vm1706, %v3580, %v3584
        %v3586 = vrot.slane %v3522, 1
        %v3587 = vsel %vm1706, %v3582, %v3586
        %v3588 = vrot.slane %v3523, 1
        %v3589 = vsel %vm1706, %v3584, %v3588
        %v3590 = vrot.slane %v3524, 1
        %v3591 = vsel %vm1706, %v3586, %v3590
        %v3592 = vrot.slane %v3525, 1
        %v3593 = vsel %vm1706, %v3588, %v3592
        %v3594 = vrot.slane %v3526, 1
        %v3595 = vsel %vm1706, %v3590, %v3594
        %v3596 = vrot.slane %v3527, 1
        %v3597 = vsel %vm1706, %v3592, %v3596
        %v3598 = vrot.slane %v3528, 1
        %v3599 = vsel %vm1706, %v3594, %v3598
        %v3600 = vrot.slane %v3529, 1
        %v3601 = vsel %vm1706, %v3596, %v3600
        %v3602 = vrot.slane %v3530, 1
        %v3603 = vsel %vm1706, %v3598, %v3602
        %v3604 = vrot.slane %v3531, 1
        %v3605 = vsel %vm1706, %v3600, %v3604
        %v3606 = vrot.slane %v3532, 1
        %v3607 = vsel %vm1706, %v3602, %v3606
        %v3608 = vrot.slane %v3533, 1
        %v3609 = vsel %vm1706, %v3604, %v3608
        %v3636 = vmax.f32 %v3508, %v3562
        %v3637 = vmax.f32 %v3509, %v3565
        %v3638 = vmax.f32 %v3510, %v3567
        %v3639 = vmax.f32 %v3511, %v3569
        %v3640 = vmax.f32 %v3512, %v3571
        %v3641 = vmax.f32 %v3513, %v3573
        %v3642 = vmax.f32 %v3514, %v3575
        %v3643 = vmax.f32 %v3515, %v3577
        %v3644 = vmax.f32 %v3516, %v3579
        %v3645 = vmax.f32 %v3517, %v3581
        %v3646 = vmax.f32 %v3518, %v3583
        %v3647 = vmax.f32 %v3519, %v3585
        %v3648 = vmax.f32 %v3520, %v3587
        %v3649 = vmax.f32 %v3521, %v3589
        %v3650 = vmax.f32 %v3522, %v3591
        %v3651 = vmax.f32 %v3523, %v3593
        %v3652 = vmax.f32 %v3524, %v3595
        %v3653 = vmax.f32 %v3525, %v3597
        %v3654 = vmax.f32 %v3526, %v3599
        %v3655 = vmax.f32 %v3527, %v3601
        %v3656 = vmax.f32 %v3528, %v3603
        %v3657 = vmax.f32 %v3529, %v3605
        %v3658 = vmax.f32 %v3530, %v3607
        %v3659 = vmax.f32 %v3531, %v3609
        %v3660 = vmax.f32 %v3532, %v3606
        %v3661 = vmax.f32 %v3533, %v3608
        %3688 = vrot.lane.b32.xlu0 %v3636, 112
        %v3689 = vpop.permute.xlu0 %3688
        %3690 = vrot.lane.b32.xlu0 %v3637, 112
        %v3691 = vpop.permute.xlu0 %3690
        %3692 = vrot.lane.b32.xlu0 %v3638, 112
        %v3693 = vpop.permute.xlu0 %3692
        %3694 = vrot.lane.b32.xlu0 %v3639, 112
        %v3695 = vpop.permute.xlu0 %3694
        %3696 = vrot.lane.b32.xlu0 %v3640, 112
        %v3697 = vpop.permute.xlu0 %3696
        %3698 = vrot.lane.b32.xlu0 %v3641, 112
        %v3699 = vpop.permute.xlu0 %3698
        %3700 = vrot.lane.b32.xlu0 %v3642, 112
        %v3701 = vpop.permute.xlu0 %3700
        %3702 = vrot.lane.b32.xlu0 %v3643, 112
        %v3703 = vpop.permute.xlu0 %3702
        %3704 = vrot.lane.b32.xlu0 %v3644, 112
        %v3705 = vpop.permute.xlu0 %3704
        %3706 = vrot.lane.b32.xlu0 %v3645, 112
        %v3707 = vpop.permute.xlu0 %3706
        %3708 = vrot.lane.b32.xlu0 %v3646, 112
        %v3709 = vpop.permute.xlu0 %3708
        %3710 = vrot.lane.b32.xlu0 %v3647, 112
        %v3711 = vpop.permute.xlu0 %3710
        %3712 = vrot.lane.b32.xlu0 %v3648, 112
        %v3713 = vpop.permute.xlu0 %3712
        %3714 = vrot.lane.b32.xlu0 %v3649, 112
        %v3715 = vpop.permute.xlu0 %3714
        %3716 = vrot.lane.b32.xlu0 %v3650, 112
        %v3717 = vpop.permute.xlu0 %3716
        %3718 = vrot.lane.b32.xlu0 %v3651, 112
        %v3719 = vpop.permute.xlu0 %3718
        %3720 = vrot.lane.b32.xlu0 %v3652, 112
        %v3721 = vpop.permute.xlu0 %3720
        %3722 = vrot.lane.b32.xlu0 %v3653, 112
        %v3723 = vpop.permute.xlu0 %3722
        %3724 = vrot.lane.b32.xlu0 %v3654, 112
        %v3725 = vpop.permute.xlu0 %3724
        %3726 = vrot.lane.b32.xlu0 %v3655, 112
        %v3727 = vpop.permute.xlu0 %3726
        %3728 = vrot.lane.b32.xlu0 %v3656, 112
        %v3729 = vpop.permute.xlu0 %3728
        %3730 = vrot.lane.b32.xlu0 %v3657, 112
        %v3731 = vpop.permute.xlu0 %3730
        %3732 = vrot.lane.b32.xlu0 %v3658, 112
        %v3733 = vpop.permute.xlu0 %3732
        %3734 = vrot.lane.b32.xlu0 %v3659, 112
        %v3735 = vpop.permute.xlu0 %3734
        %3736 = vrot.lane.b32.xlu0 %v3660, 112
        %v3737 = vpop.permute.xlu0 %3736
        %3738 = vrot.lane.b32.xlu0 %v3661, 112
        %v3739 = vpop.permute.xlu0 %3738
        %vm3740 = vcmask 916480
        %v3741 = vsel %vm3740, %v3689, %v3691
        %v3742 = vsel %vm3740, %v3693, %v3695
        %v3743 = vsel %vm3740, %v3697, %v3699
        %v3744 = vsel %vm3740, %v3701, %v3703
        %v3745 = vsel %vm3740, %v3705, %v3707
        %v3746 = vsel %vm3740, %v3709, %v3711
        %v3747 = vsel %vm3740, %v3713, %v3715
        %v3748 = vsel %vm3740, %v3717, %v3719
        %v3749 = vsel %vm3740, %v3721, %v3723
        %v3750 = vsel %vm3740, %v3725, %v3727
        %v3751 = vsel %vm3740, %v3729, %v3731
        %v3752 = vsel %vm3740, %v3733, %v3735
        %v3753 = vsel %vm3740, %v3737, %v3739
        %v3780 = vmax.f32 %v3636, %v3741
        %v3781 = vmax.f32 %v3637, %v3691
        %v3782 = vmax.f32 %v3638, %v3742
        %v3783 = vmax.f32 %v3639, %v3695
        %v3784 = vmax.f32 %v3640, %v3743
        %v3785 = vmax.f32 %v3641, %v3699
        %v3786 = vmax.f32 %v3642, %v3744
        %v3787 = vmax.f32 %v3643, %v3703
        %v3788 = vmax.f32 %v3644, %v3745
        %v3789 = vmax.f32 %v3645, %v3707
        %v3790 = vmax.f32 %v3646, %v3746
        %v3791 = vmax.f32 %v3647, %v3711
        %v3792 = vmax.f32 %v3648, %v3747
        %v3793 = vmax.f32 %v3649, %v3715
        %v3794 = vmax.f32 %v3650, %v3748
        %v3795 = vmax.f32 %v3651, %v3719
        %v3796 = vmax.f32 %v3652, %v3749
        %v3797 = vmax.f32 %v3653, %v3723
        %v3798 = vmax.f32 %v3654, %v3750
        %v3799 = vmax.f32 %v3655, %v3727
        %v3800 = vmax.f32 %v3656, %v3751
        %v3801 = vmax.f32 %v3657, %v3731
        %v3802 = vmax.f32 %v3658, %v3752
        %v3803 = vmax.f32 %v3659, %v3735
        %v3804 = vmax.f32 %v3660, %v3753
        %v3805 = vmax.f32 %v3661, %v3739
        %v3806 = vld [vmem:[%s7] sm:$0xf]
        %v3807 = vld [vmem:[%s7 + $0x4] sm:$0xf]
        %v3808 = vld [vmem:[%s7 + $0x8] sm:$0xf]
        %v3809 = vld [vmem:[%s7 + $0xc] sm:$0xf]
        %v3810 = vld [vmem:[%s7 + $0x10] sm:$0xf]
        %v3811 = vpack.c.bf16 %v3782, %v3780
        %v3812 = vpack.c.bf16 %v3783, %v3781
        %v3813 = vpack.c.bf16 %v3786, %v3784
        %v3814 = vpack.c.bf16 %v3787, %v3785
        %v3815 = vpack.c.bf16 %v3790, %v3788
        %v3816 = vpack.c.bf16 %v3791, %v3789
        %v3817 = vpack.c.bf16 %v3794, %v3792
        %v3818 = vpack.c.bf16 %v3795, %v3793
        %v3819 = vpack.c.bf16 %v3798, %v3796
        %v3820 = vpack.c.bf16 %v3799, %v3797
        %v3821 = vpack.c.bf16 %v3802, %v3800
        %v3822 = vpack.c.bf16 %v3803, %v3801
        %v3823 = vpack.c.bf16 %v3804, %v3804
        %v3824 = vpack.c.bf16 %v3805, %v3805
        %v3830 = vunpack.c.l.b16 %v3806
        %v3831 = vunpack.c.l.b16 %v3807
        %v3832 = vunpack.c.l.b16 %v3808
        %v3833 = vunpack.c.l.b16 %v3809
        %v3834 = vunpack.c.l.b16 %v3810
        %v3835 = vpack.c.b16 %v3831, %v3830
        %v3836 = vpack.c.b16 %v3833, %v3832
        %v3837 = vpack.c.b16 %v3834, %v3834
        %vm3838 = vcmask 826368
        %v3840 = vsel %vm3838, %v3835, 0
        %v3843 = vsel %vm3838, %v3836, 0
        %v3846 = vsel %vm3838, %v3837, 0
        %vm3848 = vcmask 1041408
        %vm3849 = vcmask 1042432
        %v3850 = vsel %vm3848, 4294967295, 65535
        %v3851 = vsel %vm3849, %v3850, 0
        %v3853 = vand.u32 %v3823, %v3851
        %v3856 = vand.u32 %v3824, %v3851
        %3858 = vmatpush.bf16.msra.mxu0 0
        %3859 = vmatpush.bf16.msra.mxu0 %v3853
        %3860 = vmatpush.bf16.msra.mxu0 %v3821
        %3861 = vmatpush.bf16.msra.mxu0 %v3819
        %3862 = vmatpush.bf16.msra.mxu0 %v3817
        %3863 = vmatpush.bf16.msra.mxu0 %v3815
        %3864 = vmatpush.bf16.msra.mxu0 %v3813
        %3865 = vmatpush.bf16.msra.mxu0 %v3811
        %3866 = vmatmul.bf16.gmra.mxu0 %v3840
        %v3867 = vpop.f32.mrf.mxu0
        %v3868 = vadd.f32 0.0, %v3867
        %v3869 = vpop.f32.mrf.mxu0
        %v3870 = vadd.f32 0.0, %v3869
        %3871 = vmatmul.bf16.gmra.mxu0 %v3843
        %v3872 = vpop.f32.mrf.mxu0
        %v3873 = vadd.f32 0.0, %v3872
        %v3874 = vpop.f32.mrf.mxu0
        %v3875 = vadd.f32 0.0, %v3874
        %3876 = vmatmul.bf16.gmra.mxu0 %v3846
        %v3877 = vpop.f32.mrf.mxu0
        %v3878 = vadd.f32 0.0, %v3877
        %v3879 = vpop.f32.mrf.mxu0
        %3880 = vdwg.mxu0
        %3881 = vmatpush.bf16.msra.mxu0 0
        %3882 = vmatpush.bf16.msra.mxu0 %v3856
        %3883 = vmatpush.bf16.msra.mxu0 %v3822
        %3884 = vmatpush.bf16.msra.mxu0 %v3820
        %3885 = vmatpush.bf16.msra.mxu0 %v3818
        %3886 = vmatpush.bf16.msra.mxu0 %v3816
        %3887 = vmatpush.bf16.msra.mxu0 %v3814
        %3888 = vmatpush.bf16.msra.mxu0 %v3812
        %3889 = vmatmul.bf16.gmra.mxu0 %v3840
        %v3890 = vpop.f32.mrf.mxu0
        %v3891 = vadd.f32 0.0, %v3890
        %v3892 = vpop.f32.mrf.mxu0
        %v3893 = vadd.f32 0.0, %v3892
        %3894 = vmatmul.bf16.gmra.mxu0 %v3843
        %v3895 = vpop.f32.mrf.mxu0
        %v3896 = vadd.f32 0.0, %v3895
        %v3897 = vpop.f32.mrf.mxu0
        %v3898 = vadd.f32 0.0, %v3897
        %3899 = vmatmul.bf16.gmra.mxu0 %v3846
        %v3900 = vpop.f32.mrf.mxu0
        %v3901 = vadd.f32 0.0, %v3900
        %v3902 = vpop.f32.mrf.mxu0
        %3903 = vdwg.mxu0
        %v3904 = vpack.c.bf16 %v3870, %v3868
        %v3905 = vpack.c.bf16 %v3893, %v3891
        %v3906 = vpack.c.bf16 %v3875, %v3873
        %v3907 = vpack.c.bf16 %v3898, %v3896
        %v3908 = vpack.c.bf16 %v3878, %v3878
        %v3909 = vpack.c.bf16 %v3901, %v3901
        %v3910 = vld [vmem:[#allocation8] sm:$0xf]
        %v3911 = vld [vmem:[#allocation8 + $0x4] sm:$0xf]
        %v3912 = vld [vmem:[#allocation8 + $0x8] sm:$0xf]
        %v3913 = vld [vmem:[#allocation8 + $0xc] sm:$0xf]
        %v3914 = vld [vmem:[#allocation8 + $0x10] sm:$0xf]
        %v3915 = vld [vmem:[#allocation8 + $0x14] sm:$0xf]
        %v3916 = vld [vmem:[#allocation8 + $0x18] sm:$0xf]
        %v3917 = vld [vmem:[#allocation8 + $0x1c] sm:$0xf]
        %v3918 = vld [vmem:[#allocation8 + $0x20] sm:$0xf]
        %v3919 = vld [vmem:[#allocation8 + $0x24] sm:$0xf]
        %v3920 = vld [vmem:[#allocation8 + $0x28] sm:$0xf]
        %v3921 = vld [vmem:[#allocation8 + $0x2c] sm:$0xf]
        %v3922 = vld [vmem:[#allocation8 + $0x30] sm:$0xf]
        %v3923 = vld [vmem:[#allocation8 + $0x34] sm:$0xf]
        %v3924 = vld [vmem:[#allocation8 + $0x38] sm:$0xf]
        %v3925 = vld [vmem:[#allocation8 + $0x3c] sm:$0xf]
        %v3926 = vld [vmem:[#allocation8 + $0x40] sm:$0xf]
        %v3927 = vld [vmem:[#allocation8 + $0x44] sm:$0xf]
        %v3928 = vld [vmem:[#allocation8 + $0x48] sm:$0xf]
        %v3929 = vld [vmem:[#allocation8 + $0x4c] sm:$0xf]
        %v3950 = vunpack.c.l.b16 %v3910
        %v3951 = vunpack.c.l.b16 %v3911
        %v3952 = vunpack.c.l.b16 %v3912
        %v3953 = vunpack.c.l.b16 %v3913
        %v3954 = vunpack.c.l.b16 %v3914
        %v3955 = vunpack.c.l.b16 %v3915
        %v3956 = vunpack.c.l.b16 %v3916
        %v3957 = vunpack.c.l.b16 %v3917
        %v3958 = vunpack.c.l.b16 %v3918
        %v3959 = vunpack.c.l.b16 %v3919
        %v3960 = vunpack.c.l.b16 %v3920
        %v3961 = vunpack.c.l.b16 %v3921
        %v3962 = vunpack.c.l.b16 %v3922
        %v3963 = vunpack.c.l.b16 %v3923
        %v3964 = vunpack.c.l.b16 %v3924
        %v3965 = vunpack.c.l.b16 %v3925
        %v3966 = vunpack.c.l.b16 %v3926
        %v3967 = vunpack.c.l.b16 %v3927
        %v3968 = vunpack.c.l.b16 %v3928
        %v3969 = vunpack.c.l.b16 %v3929
        %v3970 = vpack.c.b16 %v3951, %v3950
        %v3971 = vpack.c.b16 %v3953, %v3952
        %v3972 = vpack.c.b16 %v3955, %v3954
        %v3973 = vpack.c.b16 %v3957, %v3956
        %v3974 = vpack.c.b16 %v3959, %v3958
        %v3975 = vpack.c.b16 %v3961, %v3960
        %v3976 = vpack.c.b16 %v3963, %v3962
        %v3977 = vpack.c.b16 %v3965, %v3964
        %v3978 = vpack.c.b16 %v3967, %v3966
        %v3979 = vpack.c.b16 %v3969, %v3968
        %vm3990 = vcmask 261120
        %v3992 = vsel %vm3990, %v3905, 0
        %v3995 = vsel %vm3990, %v3907, 0
        %v3998 = vsel %vm3990, %v3909, 0
        %4000 = vmatpush.bf16.msra.mxu0 %v3977
        %4001 = vmatpush.bf16.msra.mxu0 %v3976
        %4002 = vmatpush.bf16.msra.mxu0 %v3975
        %4003 = vmatpush.bf16.msra.mxu0 %v3974
        %4004 = vmatpush.bf16.msra.mxu0 %v3973
        %4005 = vmatpush.bf16.msra.mxu0 %v3972
        %4006 = vmatpush.bf16.msra.mxu0 %v3971
        %4007 = vmatpush.bf16.msra.mxu0 %v3970
        %4008 = vmatmul.bf16.gmra.mxu0 %v3904
        %v4009 = vpop.f32.mrf.mxu0
        %v4010 = vadd.f32 0.0, %v4009
        %v4011 = vpop.f32.mrf.mxu0
        %v4012 = vadd.f32 0.0, %v4011
        %4013 = vmatmul.bf16.gmra.mxu0 %v3906
        %v4014 = vpop.f32.mrf.mxu0
        %v4015 = vadd.f32 0.0, %v4014
        %v4016 = vpop.f32.mrf.mxu0
        %v4017 = vadd.f32 0.0, %v4016
        %4018 = vmatmul.bf16.gmra.mxu0 %v3908
        %v4019 = vpop.f32.mrf.mxu0
        %v4020 = vadd.f32 0.0, %v4019
        %v4021 = vpop.f32.mrf.mxu0
        %4022 = vdwg.mxu0
        %4023 = vmatpush.bf16.msra.mxu0 0
        %4024 = vmatpush.bf16.msra.mxu0 0
        %4025 = vmatpush.bf16.msra.mxu0 0
        %4026 = vmatpush.bf16.msra.mxu0 0
        %4027 = vmatpush.bf16.msra.mxu0 0
        %4028 = vmatpush.bf16.msra.mxu0 0
        %4029 = vmatpush.bf16.msra.mxu0 %v3979
        %4030 = vmatpush.bf16.msra.mxu0 %v3978
        %4031 = vmatmul.bf16.gmra.mxu0 %v3992
        %v4032 = vpop.f32.mrf.mxu0
        %v4033 = vadd.f32 %v4010, %v4032
        %v4034 = vpop.f32.mrf.mxu0
        %v4035 = vadd.f32 %v4012, %v4034
        %4036 = vmatmul.bf16.gmra.mxu0 %v3995
        %v4037 = vpop.f32.mrf.mxu0
        %v4038 = vadd.f32 %v4015, %v4037
        %v4039 = vpop.f32.mrf.mxu0
        %v4040 = vadd.f32 %v4017, %v4039
        %4041 = vmatmul.bf16.gmra.mxu0 %v3998
        %v4042 = vpop.f32.mrf.mxu0
        %v4043 = vadd.f32 %v4020, %v4042
        %v4044 = vpop.f32.mrf.mxu0
        %4045 = vdwg.mxu0
        %v4046 = vpack.c.bf16 %v4033, %v4033
        %v4047 = vpack.c.bf16 %v4035, %v4035
        %v4048 = vpack.c.bf16 %v4038, %v4038
        %v4049 = vpack.c.bf16 %v4040, %v4040
        %v4050 = vpack.c.bf16 %v4043, %v4043
        %v4051 = vld [vmem:[%s9] sm:$0xf]
        %v4052 = vld [vmem:[%s9 + $0x4] sm:$0xf]
        %v4053 = vld [vmem:[%s9 + $0x8] sm:$0xf]
        %v4054 = vld [vmem:[%s9 + $0xc] sm:$0xf]
        %v4055 = vld [vmem:[%s9 + $0x10] sm:$0xf]
        %v4056 = vld [vmem:[%s9 + $0x14] sm:$0xf]
        %v4057 = vld [vmem:[%s9 + $0x18] sm:$0xf]
        %v4058 = vld [vmem:[%s9 + $0x1c] sm:$0xf]
        %v4059 = vld [vmem:[%s9 + $0x20] sm:$0xf]
        %v4060 = vld [vmem:[%s9 + $0x24] sm:$0xf]
        %s4061 = scalar_lea.vmem %s9, 40
        %v4062 = vld [vmem:[%s4061] sm:$0xf]
        %v4063 = vld [vmem:[%s4061 + $0x4] sm:$0xf]
        %v4064 = vld [vmem:[%s4061 + $0x8] sm:$0xf]
        %v4065 = vld [vmem:[%s4061 + $0xc] sm:$0xf]
        %v4066 = vld [vmem:[%s4061 + $0x10] sm:$0xf]
        %v4067 = vld [vmem:[%s4061 + $0x14] sm:$0xf]
        %v4068 = vld [vmem:[%s4061 + $0x18] sm:$0xf]
        %v4069 = vld [vmem:[%s4061 + $0x1c] sm:$0xf]
        %v4070 = vld [vmem:[%s4061 + $0x20] sm:$0xf]
        %v4071 = vld [vmem:[%s4061 + $0x24] sm:$0xf]
        %v4077 = vunpack.c.l.b16 %v4046
        %v4078 = vunpack.c.l.b16 %v4047
        %v4079 = vunpack.c.l.b16 %v4048
        %v4080 = vunpack.c.l.b16 %v4049
        %v4081 = vunpack.c.l.b16 %v4050
        %v4082 = vpack.c.b16 %v4078, %v4077
        %v4083 = vpack.c.b16 %v4080, %v4079
        %v4084 = vpack.c.b16 %v4081, %v4081
        %v4086 = vshrl.u32 %v4082, 16
        %v4088 = vshll.u32 %v4082, 16
        %v4090 = vrot.slane %v4088, 1
        %v4091 = vor.u32 %v4086, %v4090
        %v4093 = vshll.u32 %v4083, 16
        %v4095 = vrot.slane %v4093, 1
        %v4096 = vsel %vm671, %v4091, %v4095
        %v4097 = vshrl.u32 %v4083, 16
        %v4099 = vor.u32 %v4097, %v4095
        %v4101 = vshll.u32 %v4084, 16
        %v4103 = vrot.slane %v4101, 1
        %v4104 = vsel %vm671, %v4099, %v4103
        %v4105 = vshrl.u32 %v4084, 16
        %v4107 = vor.u32 %v4105, %v4103
        %v4118 = vunpack.c.l.b16 %v4062
        %v4119 = vunpack.c.l.b16 %v4063
        %v4120 = vunpack.c.l.b16 %v4064
        %v4121 = vunpack.c.l.b16 %v4065
        %v4122 = vunpack.c.l.b16 %v4066
        %v4123 = vunpack.c.l.b16 %v4067
        %v4124 = vunpack.c.l.b16 %v4068
        %v4125 = vunpack.c.l.b16 %v4069
        %v4126 = vunpack.c.l.b16 %v4070
        %v4127 = vunpack.c.l.b16 %v4071
        %v4128 = vpack.c.b16 %v4119, %v4118
        %v4129 = vpack.c.b16 %v4121, %v4120
        %v4130 = vpack.c.b16 %v4123, %v4122
        %v4131 = vpack.c.b16 %v4125, %v4124
        %v4132 = vpack.c.b16 %v4127, %v4126
        %vm4138 = vcmask 654336
        %v4140 = vsel %vm4138, %v4096, 0
        %v4143 = vsel %vm4138, %v4104, 0
        %v4146 = vsel %vm4138, %v4107, 0
        %4148 = vmatpush.bf16.msra.mxu0 0
        %4149 = vmatpush.bf16.msra.mxu0 0
        %4150 = vmatpush.bf16.msra.mxu0 0
        %4151 = vmatpush.bf16.msra.mxu0 %v4132
        %4152 = vmatpush.bf16.msra.mxu0 %v4131
        %4153 = vmatpush.bf16.msra.mxu0 %v4130
        %4154 = vmatpush.bf16.msra.mxu0 %v4129
        %4155 = vmatpush.bf16.msra.mxu0 %v4128
        %4156 = vmatmul.bf16.gmra.mxu0 %v4140
        %v4157 = vpop.f32.mrf.mxu0
        %v4158 = vadd.f32 0.0, %v4157
        %v4159 = vpop.f32.mrf.mxu0
        %v4160 = vadd.f32 0.0, %v4159
        %4161 = vmatmul.bf16.gmra.mxu0 %v4143
        %v4162 = vpop.f32.mrf.mxu0
        %v4163 = vadd.f32 0.0, %v4162
        %v4164 = vpop.f32.mrf.mxu0
        %v4165 = vadd.f32 0.0, %v4164
        %4166 = vmatmul.bf16.gmra.mxu0 %v4146
        %v4167 = vpop.f32.mrf.mxu0
        %v4168 = vadd.f32 0.0, %v4167
        %v4169 = vpop.f32.mrf.mxu0
        %4170 = vdwg.mxu0
        %v4181 = vunpack.c.l.b16 %v4051
        %v4182 = vunpack.c.l.b16 %v4052
        %v4183 = vunpack.c.l.b16 %v4053
        %v4184 = vunpack.c.l.b16 %v4054
        %v4185 = vunpack.c.l.b16 %v4055
        %v4186 = vunpack.c.l.b16 %v4056
        %v4187 = vunpack.c.l.b16 %v4057
        %v4188 = vunpack.c.l.b16 %v4058
        %v4189 = vunpack.c.l.b16 %v4059
        %v4190 = vunpack.c.l.b16 %v4060
        %v4191 = vpack.c.b16 %v4182, %v4181
        %v4192 = vpack.c.b16 %v4184, %v4183
        %v4193 = vpack.c.b16 %v4186, %v4185
        %v4194 = vpack.c.b16 %v4188, %v4187
        %v4195 = vpack.c.b16 %v4190, %v4189
        %v4201 = vsel %vm4138, %v4082, 0
        %v4203 = vsel %vm4138, %v4083, 0
        %v4205 = vsel %vm4138, %v4084, 0
        %4207 = vmatpush.bf16.msra.mxu0 0
        %4208 = vmatpush.bf16.msra.mxu0 0
        %4209 = vmatpush.bf16.msra.mxu0 0
        %4210 = vmatpush.bf16.msra.mxu0 %v4195
        %4211 = vmatpush.bf16.msra.mxu0 %v4194
        %4212 = vmatpush.bf16.msra.mxu0 %v4193
        %4213 = vmatpush.bf16.msra.mxu0 %v4192
        %4214 = vmatpush.bf16.msra.mxu0 %v4191
        %4215 = vmatmul.bf16.gmra.mxu0 %v4201
        %v4216 = vpop.f32.mrf.mxu0
        %v4217 = vadd.f32 %v4158, %v4216
        %v4218 = vpop.f32.mrf.mxu0
        %v4219 = vadd.f32 %v4160, %v4218
        %4220 = vmatmul.bf16.gmra.mxu0 %v4203
        %v4221 = vpop.f32.mrf.mxu0
        %v4222 = vadd.f32 %v4163, %v4221
        %v4223 = vpop.f32.mrf.mxu0
        %v4224 = vadd.f32 %v4165, %v4223
        %4225 = vmatmul.bf16.gmra.mxu0 %v4205
        %v4226 = vpop.f32.mrf.mxu0
        %v4227 = vadd.f32 %v4168, %v4226
        %v4228 = vpop.f32.mrf.mxu0
        %4229 = vdwg.mxu0
        %s4230 = scalar_lea.vmem %s9, 80
        %v4231 = vld [vmem:[%s4230] sm:$0xf]
        %v4232 = vld [vmem:[%s4230 + $0x4] sm:$0xf]
        %v4233 = vld [vmem:[%s4230 + $0x8] sm:$0xf]
        %v4234 = vld [vmem:[%s4230 + $0xc] sm:$0xf]
        %v4235 = vld [vmem:[%s4230 + $0x10] sm:$0xf]
        %v4236 = vld [vmem:[%s4230 + $0x14] sm:$0xf]
        %v4237 = vld [vmem:[%s4230 + $0x18] sm:$0xf]
        %v4238 = vld [vmem:[%s4230 + $0x1c] sm:$0xf]
        %v4239 = vld [vmem:[%s4230 + $0x20] sm:$0xf]
        %v4240 = vld [vmem:[%s4230 + $0x24] sm:$0xf]
        %v4241 = vrot.slane %v4082, 1
        %v4242 = vrot.slane %v4083, 1
        %v4243 = vsel %vm1224, %v4241, %v4242
        %v4244 = vrot.slane %v4084, 1
        %v4245 = vsel %vm1224, %v4242, %v4244
        %v4256 = vunpack.c.l.b16 %v4231
        %v4257 = vunpack.c.l.b16 %v4232
        %v4258 = vunpack.c.l.b16 %v4233
        %v4259 = vunpack.c.l.b16 %v4234
        %v4260 = vunpack.c.l.b16 %v4235
        %v4261 = vunpack.c.l.b16 %v4236
        %v4262 = vunpack.c.l.b16 %v4237
        %v4263 = vunpack.c.l.b16 %v4238
        %v4264 = vunpack.c.l.b16 %v4239
        %v4265 = vunpack.c.l.b16 %v4240
        %v4266 = vpack.c.b16 %v4257, %v4256
        %v4267 = vpack.c.b16 %v4259, %v4258
        %v4268 = vpack.c.b16 %v4261, %v4260
        %v4269 = vpack.c.b16 %v4263, %v4262
        %v4270 = vpack.c.b16 %v4265, %v4264
        %v4277 = vsel %vm4138, %v4243, 0
        %v4280 = vsel %vm4138, %v4245, 0
        %v4283 = vsel %vm4138, %v4244, 0
        %4285 = vmatpush.bf16.msra.mxu0 0
        %4286 = vmatpush.bf16.msra.mxu0 0
        %4287 = vmatpush.bf16.msra.mxu0 0
        %4288 = vmatpush.bf16.msra.mxu0 %v4270
        %4289 = vmatpush.bf16.msra.mxu0 %v4269
        %4290 = vmatpush.bf16.msra.mxu0 %v4268
        %4291 = vmatpush.bf16.msra.mxu0 %v4267
        %4292 = vmatpush.bf16.msra.mxu0 %v4266
        %4293 = vmatmul.bf16.gmra.mxu0 %v4277
        %v4294 = vpop.f32.mrf.mxu0
        %v4295 = vadd.f32 0.0, %v4294
        %v4296 = vpop.f32.mrf.mxu0
        %v4297 = vadd.f32 0.0, %v4296
        %4298 = vmatmul.bf16.gmra.mxu0 %v4280
        %v4299 = vpop.f32.mrf.mxu0
        %v4300 = vadd.f32 0.0, %v4299
        %v4301 = vpop.f32.mrf.mxu0
        %v4302 = vadd.f32 0.0, %v4301
        %4303 = vmatmul.bf16.gmra.mxu0 %v4283
        %v4304 = vpop.f32.mrf.mxu0
        %v4305 = vadd.f32 0.0, %v4304
        %v4306 = vpop.f32.mrf.mxu0
        %4307 = vdwg.mxu0
        %v4308 = vadd.f32 %v4217, %v4295
        %v4309 = vadd.f32 %v4219, %v4297
        %v4310 = vadd.f32 %v4222, %v4300
        %v4311 = vadd.f32 %v4224, %v4302
        %v4312 = vadd.f32 %v4227, %v4305
        %v4313 = vld [vmem:[%s10] sm:$0x1]
        %v4315 = vperm.slane %v4313, 0
        %v4317 = vadd.f32 %v4308, %v4315
        %v4318 = vadd.f32 %v4309, %v4315
        %v4319 = vadd.f32 %v4310, %v4315
        %v4320 = vadd.f32 %v4311, %v4315
        %v4321 = vadd.f32 %v4312, %v4315
        %v4322 = vmax.f32 %v4317, 0.0
        %v4323 = vmax.f32 %v4318, 0.0
        %v4324 = vmax.f32 %v4319, 0.0
        %v4325 = vmax.f32 %v4320, 0.0
        %v4326 = vmax.f32 %v4321, 0.0
        %v4332 = vrot.slane %v4322, 1
        %v4333 = vrot.slane %v4323, 1
        %v4334 = vsel %vm1706, %v4332, %v4333
        %v4335 = vrot.slane %v4324, 1
        %v4336 = vsel %vm1706, %v4333, %v4335
        %v4337 = vrot.slane %v4325, 1
        %v4338 = vsel %vm1706, %v4335, %v4337
        %v4339 = vrot.slane %v4326, 1
        %v4340 = vsel %vm1706, %v4337, %v4339
        %v4346 = vmax.f32 %v4322, %v4334
        %v4347 = vmax.f32 %v4323, %v4336
        %v4348 = vmax.f32 %v4324, %v4338
        %v4349 = vmax.f32 %v4325, %v4340
        %v4350 = vmax.f32 %v4326, %v4339
        %4356 = vrot.lane.b32.xlu0 %v4346, 96
        %v4357 = vpop.permute.xlu0 %4356
        %4358 = vrot.lane.b32.xlu0 %v4347, 96
        %v4359 = vpop.permute.xlu0 %4358
        %4360 = vrot.lane.b32.xlu0 %v4348, 96
        %v4361 = vpop.permute.xlu0 %4360
        %4362 = vrot.lane.b32.xlu0 %v4349, 96
        %v4363 = vpop.permute.xlu0 %4362
        %4364 = vrot.lane.b32.xlu0 %v4350, 96
        %v4365 = vpop.permute.xlu0 %4364
        %v4371 = vmax.f32 %v4346, %v4357
        %v4372 = vmax.f32 %v4347, %v4359
        %v4373 = vmax.f32 %v4348, %v4361
        %v4374 = vmax.f32 %v4349, %v4363
        %v4375 = vmax.f32 %v4350, %v4365
        %v4376 = vld [vmem:[%s11] sm:$0xf]
        %v4377 = vpack.c.bf16 %v4372, %v4371
        %v4378 = vpack.c.bf16 %v4374, %v4373
        %v4379 = vpack.c.bf16 %v4375, %v4375
        %vm4380 = vcmask 302080
        %v4382 = vsel %vm4380, %v4376, 0
        %v4385 = vand.u32 %v4379, %v3851
        %4387 = vmatpush.bf16.msra.mxu0 0
        %4388 = vmatpush.bf16.msra.mxu0 0
        %4389 = vmatpush.bf16.msra.mxu0 0
        %4390 = vmatpush.bf16.msra.mxu0 0
        %4391 = vmatpush.bf16.msra.mxu0 0
        %4392 = vmatpush.bf16.msra.mxu0 %v4385
        %4393 = vmatpush.bf16.msra.mxu0 %v4378
        %4394 = vmatpush.bf16.msra.mxu0 %v4377
        %4395 = vmatmul.bf16.gmra.mxu0 %v4382
        %v4396 = vpop.f32.mrf.mxu0
        %v4397 = vadd.f32 0.0, %v4396
        %v4398 = vpop.f32.mrf.mxu0
        %4399 = vdwg.mxu0
        %v4400 = vpack.c.bf16 %v4397, %v4397
        %v4401 = vld [vmem:[%s12] sm:$0xf]
        %v4402 = vld [vmem:[%s12 + $0x4] sm:$0xf]
        %v4403 = vld [vmem:[%s12 + $0x8] sm:$0xf]
        %v4404 = vld [vmem:[%s12 + $0xc] sm:$0xf]
        %v4405 = vld [vmem:[%s13] sm:$0x1]
        %v4407 = vperm.slane %v4405, 0
        %v4413 = vunpack.c.l.b16 %v4401
        %v4414 = vunpack.c.l.b16 %v4402
        %v4415 = vunpack.c.l.b16 %v4403
        %v4416 = vunpack.c.l.b16 %v4404
        %v4417 = vpack.c.b16 %v4414, %v4413
        %v4418 = vpack.c.b16 %v4416, %v4415
        %v4422 = vsel %vm3990, %v4400, 0
        %4424 = vmatpush.bf16.msra.mxu0 0
        %4425 = vmatpush.bf16.msra.mxu0 0
        %4426 = vmatpush.bf16.msra.mxu0 0
        %4427 = vmatpush.bf16.msra.mxu0 0
        %4428 = vmatpush.bf16.msra.mxu0 0
        %4429 = vmatpush.bf16.msra.mxu0 0
        %4430 = vmatpush.bf16.msra.mxu0 %v4418
        %4431 = vmatpush.bf16.msra.mxu0 %v4417
        %4432 = vmatmul.bf16.gmra.mxu0 %v4422
        %v4433 = vpop.f32.mrf.mxu0
        %v4434 = vadd.f32 %v4407, %v4433
        %v4435 = vpop.f32.mrf.mxu0
        %4436 = vdwg.mxu0
        %vm4437 = vcmask 80896
        %4438 = vst.msk [vmem:[%s528] sm:$0xff] %vm4437, %v4434
        %s4439 = sand.u32 %s338, 1
        %s4440 = scalar_lea.sflag [#allocation4], %s4439
        %s4441 = sand.u32 %s338, 1
        %s4442 = smul.addr %s4441, 8
        %s4443 = scalar_lea.vmem [#allocation10], %s4442
        // Predicated region
        $region93: #{my_awesome_model_forward.1} parent=75 // pred_check
          %p4444 = pneg %p348
        $region94: #{my_awesome_model_forward.1} parent=75 // pred_check_branch
          %4446 = sbr.rel (%p4444) target = $region96
        $region95: #{my_awesome_model_forward.1} parent=75 // pred_region
          %4448 = vsyncadd %s4440, 0
          %s4449 = smul.addr %s31, 8
          %s4450 = scalar_lea.hbm %s14, %s4449
          %s4452 = sshll.u32 %s4443, 4
          %s4453 = int_to_ptr.vmem [resolvable:$true] %s4452
          %s4454 = sshll.u32 %s4450, 4
          %s4455 = int_to_ptr.hbm [resolvable:$true] %s4454
          %4457 = dma.vmem_to_hbm [thread:$0]  %s4453, 128, %s4455, %s4440
        $region96: #{my_awesome_model_forward.1} parent=75 // pred_fallthru
          _
      $region76: #{my_awesome_model_forward.1} parent=5 // pred_fallthru
        _
      %p4458 = scmp.le.s32.totalorder 2, %s26
      // Predicated region
      $region97: #{my_awesome_model_forward.1} parent=5 // pred_check
        %p4459 = pneg %p4458
      $region98: #{my_awesome_model_forward.1} parent=5 // pred_check_branch
        %4461 = sbr.rel (%p4459) target = $region100
      $region99: #{my_awesome_model_forward.1} parent=5 // pred_region
        %s4462 = ssub.s32 %s26, 2
        // Predicated region
        $region101: #{my_awesome_model_forward.1} parent=99 // pred_check
          %p4463 = pneg %p354
        $region102: #{my_awesome_model_forward.1} parent=99 // pred_check_branch
          %4465 = sbr.rel (%p4463) target = $region104
        $region103: #{my_awesome_model_forward.1} parent=99 // pred_region
          %s4466 = sand.u32 %s339, 1
          %s4467 = scalar_lea.sflag [#allocation4], %s4466
          %s4468 = sand.u32 %s339, 1
          %s4469 = smul.addr %s4468, 8
          %s4470 = scalar_lea.vmem [#allocation10], %s4469
          %4472 = dma.done %s4467, 128
        $region104: #{my_awesome_model_forward.1} parent=99 // pred_fallthru
          _
      $region100: #{my_awesome_model_forward.1} parent=5 // pred_fallthru
        _
    $region6: #{my_awesome_model_forward.1} parent=1 // loop_footer
      %s30 = sadd.s32 1, %s26
    $region7: #{my_awesome_model_forward.1} parent=1 // loop_footer_branch
      %25 = sbr.rel target = $region3
    $region8: #{my_awesome_model_forward.1} parent=1 // loop_exit
      _
    %4473 = vsyncpa [#allocation3], 1
    %s4474 = scalar_lea.sflag [#allocation3], 1
    %4475 = vsyncpa %s4474, 1
    %4476 = vsyncpa [#allocation6], 1
    %4477 = vsyncpa [#allocation9], 1
    %4478 = vsyncpa [#allocation4], 1
    %s4479 = scalar_lea.sflag [#allocation4], 1
    %4480 = vsyncpa %s4479, 1

</llo_original>
